<compile_context>
chip_gen: v7x
topology: tpu7x:2x2x1
jax: 0.10.0
libtpu: 0.0.40
codegen_flags: <defaults>
</compile_context>

<pallas_src>
import functools

import jax
import jax.numpy as jnp
from jax.experimental import pallas as pl
from jax.experimental.pallas import tpu as pltpu


def _pad_to_128(c):
    return ((c + 127) // 128) * 128


# ------------------------------ Pallas kernel ------------------------------- #

def fused_conv_kernel(*refs, H, W, Ho, Wo, stride, mode):
    """Fused (BN+ReLU) -> 3x3 conv (stride s, pad 1) -> [+ residual], one image per step.

    refs layout by mode:
      "none": x, scale, shift, w,                  out, h_scr
      "add" : x, scale, shift, w, res,             out, h_scr
      "proj": x, scale, shift, w, res, rs, rb, rw, out, h_scr

    x     : (H, W, Cp_in)      f32  (channel-padded, NOT spatially padded)
    scale : (1, Cp_in) f32     shift: (1, Cp_in) f32   (folded BN)
    w     : (9, Cp_in, Cp_out) bf16/f32, tap ordering kh*3+kw
    res   : "add"  -> (Ho*Wo, Cp_out) f32 (identity residual)
            "proj" -> (Ho*Wo, Cp_r)   f32 pre-BN x at strided positions; rs/rb are the
                      BN1 scale/shift and rw the padded (Cp_r, Cp_out) 1x1 weights
    out   : (Ho*Wo, Cp_out) f32
    h_scr : (H+2, W+2, Cp_in) f32 VMEM scratch holding the zero-halo relu(bn(x)).
    """
    if mode == "none":
        x_ref, s_ref, b_ref, w_ref, o_ref, h_scr = refs
    elif mode == "add":
        x_ref, s_ref, b_ref, w_ref, r_ref, o_ref, h_scr = refs
    elif mode == "proj":
        x_ref, s_ref, b_ref, w_ref, r_ref, rs_ref, rb_ref, rw_ref, o_ref, h_scr = refs
    else:
        raise ValueError(mode)

    # BN + ReLU on the input tile. The spatial zero-halo is applied AFTER the
    # activation (Conv2d(padding=1) pads relu(bn(x)) with zeros, not x).
    h_scr[...] = jnp.zeros_like(h_scr)
    h = jnp.maximum(x_ref[...] * s_ref[...] + b_ref[...], 0.0)
    h_scr[pl.ds(1, H), pl.ds(1, W), :] = h

    cp_out = o_ref.shape[-1]
    acc = jnp.zeros((Ho * Wo, cp_out), jnp.float32)

    # 3x3 conv as 9 shifted (strided) matmuls accumulated in f32 on the MXU.
    for kh in range(3):
        for kw in range(3):
            if stride == 1:
                tap = h_scr[pl.ds(kh, Ho), pl.ds(kw, Wo), :]
            else:
                tap = h_scr[pl.ds(kh, Ho, stride), pl.ds(kw, Wo, stride), :]
            tap = tap.reshape(Ho * Wo, tap.shape[-1]).astype(w_ref.dtype)
            acc = acc + jnp.dot(tap, w_ref[kh * 3 + kw],
                                preferred_element_type=jnp.float32)

    if mode == "add":
        acc = acc + r_ref[...]
    elif mode == "proj":
        r = jnp.maximum(r_ref[...] * rs_ref[...] + rb_ref[...], 0.0)
        acc = acc + jnp.dot(r.astype(rw_ref.dtype), rw_ref[...],
                            preferred_element_type=jnp.float32)

    o_ref[...] = acc.astype(o_ref.dtype)


# ------------------------------ pallas_call glue ----------------------------- #

def _fused_conv(x_img, scale, shift, w_taps, *, stride, mode,
                residual=None, res_scale=None, res_shift=None, res_w=None):
    N, H, W, cp_in = x_img.shape
    cp_out = w_taps.shape[-1]
    Ho = (H - 1) // stride + 1          # 3x3, pad 1
    Wo = (W - 1) // stride + 1

    kernel = functools.partial(fused_conv_kernel, H=H, W=W, Ho=Ho, Wo=Wo,
                               stride=stride, mode=mode)

    in_specs = [
        pl.BlockSpec((None, H, W, cp_in), lambda n: (n, 0, 0, 0)),
        pl.BlockSpec((1, cp_in), lambda n: (0, 0)),
        pl.BlockSpec((1, cp_in), lambda n: (0, 0)),
        pl.BlockSpec((9, cp_in, cp_out), lambda n: (0, 0, 0)),   # resident weights
    ]
    args = [x_img, scale, shift, w_taps]
    if mode == "add":
        in_specs.append(pl.BlockSpec((None, Ho * Wo, cp_out), lambda n: (n, 0, 0)))
        args.append(residual)
    elif mode == "proj":
        cp_r = residual.shape[-1]
        in_specs += [
            pl.BlockSpec((None, Ho * Wo, cp_r), lambda n: (n, 0, 0)),
            pl.BlockSpec((1, cp_r), lambda n: (0, 0)),
            pl.BlockSpec((1, cp_r), lambda n: (0, 0)),
            pl.BlockSpec((cp_r, cp_out), lambda n: (0, 0)),
        ]
        args += [residual, res_scale, res_shift, res_w]

    out = pl.pallas_call(
        kernel,
        grid=(N,),
        in_specs=in_specs,
        out_specs=pl.BlockSpec((None, Ho * Wo, cp_out), lambda n: (n, 0, 0)),
        out_shape=jax.ShapeDtypeStruct((N, Ho * Wo, cp_out), jnp.float32),
        scratch_shapes=[pltpu.VMEM((H + 2, W + 2, cp_in), jnp.float32)],
        compiler_params=pltpu.CompilerParams(
            dimension_semantics=("parallel",),       # shards images across v7x's 2 TCs
            vmem_limit_bytes=48 * 1024 * 1024,       # fits v5e/v6e/v7x budgets
        ),
    )(*args)
    return out, Ho, Wo


# ------------------------------- JAX wrapper -------------------------------- #

def _bn_scale_shift(x, gamma_p, beta_p, axes, eps=1e-5):
    # Training-mode BatchNorm (biased variance) folded to per-channel scale/shift.
    mean = x.mean(axis=axes)
    var = jnp.var(x, axis=axes)
    scale = gamma_p / jnp.sqrt(var + eps)
    shift = beta_p - mean * scale
    return scale.reshape(1, -1), shift.reshape(1, -1)


def _conv3x3_to_taps(w_oihw, cp_in, cp_out, dtype):
    co, ci, kh, kw = w_oihw.shape
    w = jnp.transpose(w_oihw, (2, 3, 1, 0)).reshape(kh * kw, ci, co)
    return jnp.pad(w, ((0, 0), (0, cp_in - ci), (0, cp_out - co))).astype(dtype)


@functools.partial(jax.jit, static_argnames=("stride", "use_bf16"))
def basic_block_forward(x_nchw, params, stride, use_bf16=True):
    mm_dtype = jnp.bfloat16 if use_bf16 else jnp.float32

    x = jnp.transpose(x_nchw, (0, 2, 3, 1)).astype(jnp.float32)   # NCHW -> NHWC
    N, H, W, c_in = x.shape
    c_out = params["w1"].shape[0]
    cp_in, cp_out = _pad_to_128(c_in), _pad_to_128(c_out)
    is_in_equal_out = c_in == c_out

    # Lane-dense channel padding (multiple of 128); sliced off at the end.
    xp = jnp.pad(x, ((0, 0), (0, 0), (0, 0), (0, cp_in - c_in)))

    # bn1 folded (padded gamma/beta are zero -> padded lanes stay exactly zero).
    g1 = jnp.pad(params["gamma1"], (0, cp_in - c_in))
    b1 = jnp.pad(params["beta1"], (0, cp_in - c_in))
    scale1, shift1 = _bn_scale_shift(xp, g1, b1, (0, 1, 2))

    # conv1: fused bn1 + relu + 3x3 stride-s conv.
    w1m = _conv3x3_to_taps(params["w1"], cp_in, cp_out, mm_dtype)
    y1, Ho, Wo = _fused_conv(xp, scale1, shift1, w1m, stride=stride, mode="none")

    # bn2 statistics (one XLA reduce over y1).
    # TODO(synk): emit per-image partial sum / sum-of-squares from the conv1 kernel
    # epilogue (and store y1 as bf16) to avoid this extra HBM pass over y1.
    g2 = jnp.pad(params["gamma2"], (0, cp_out - c_out))
    b2 = jnp.pad(params["beta2"], (0, cp_out - c_out))
    scale2, shift2 = _bn_scale_shift(y1, g2, b2, (0, 1))

    # drop_rate == 0.0 in this module instantiation, so F.dropout is a no-op.
    # TODO(synk): drop_rate > 0 would need pltpu.prng_seed / pltpu.stateful_bernoulli.

    # conv2: fused bn2 + relu + 3x3 stride-1 conv + residual.
    w2m = _conv3x3_to_taps(params["w2"], cp_out, cp_out, mm_dtype)
    y1_img = y1.reshape(N, Ho, Wo, cp_out)

    if is_in_equal_out:
        residual = xp.reshape(N, H * W, cp_in)             # torch.add(x, out); stride == 1
        out, _, _ = _fused_conv(y1_img, scale2, shift2, w2m, stride=1, mode="add",
                                residual=residual)
    else:
        # shortcut = 1x1 stride-s conv of relu(bn1(x)); folded into the conv2 kernel.
        xs = xp[:, ::stride, ::stride, :].reshape(N, Ho * Wo, cp_in)
        wsm = jnp.pad(params["ws"][:, :, 0, 0].T,
                      ((0, cp_in - c_in), (0, cp_out - c_out))).astype(mm_dtype)
        out, _, _ = _fused_conv(y1_img, scale2, shift2, w2m, stride=1, mode="proj",
                                residual=xs, res_scale=scale1, res_shift=shift1,
                                res_w=wsm)

    out = out.reshape(N, Ho, Wo, cp_out)[..., :c_out]
    return jnp.transpose(out, (0, 3, 1, 2))                # NHWC -> NCHW


# --------------------------- pure-JAX reference ----------------------------- #

def ref_forward(x, params, stride):
    eps = 1e-5

    def bn(t, g, b):
        m = t.mean(axis=(0, 2, 3), keepdims=True)
        v = jnp.var(t, axis=(0, 2, 3), keepdims=True)
        return (t - m) * (g.reshape(1, -1, 1, 1) / jnp.sqrt(v + eps)) + b.reshape(1, -1, 1, 1)

    def conv(t, w, s, p):
        return jax.lax.conv_general_dilated(
            t, w, (s, s), [(p, p), (p, p)],
            dimension_numbers=("NCHW", "OIHW", "NCHW"))

    c_in = x.shape[1]
    c_out = params["w1"].shape[0]
    equal = c_in == c_out
    h = jax.nn.relu(bn(x, params["gamma1"], params["beta1"]))
    y1 = conv(h, params["w1"], stride, 1)
    h2 = jax.nn.relu(bn(y1, params["gamma2"], params["beta2"]))
    y2 = conv(h2, params["w2"], 1, 1)
    if equal:
        return x + y2
    return conv(h, params["ws"], stride, 0) + y2


# ---------------------------------- main ------------------------------------ #

def make_params(key, in_planes, out_planes):
    ks = jax.random.split(key, 7)
    return {
        "gamma1": 1.0 + 0.1 * jax.random.normal(ks[0], (in_planes,), jnp.float32),
        "beta1": 0.1 * jax.random.normal(ks[1], (in_planes,), jnp.float32),
        "gamma2": 1.0 + 0.1 * jax.random.normal(ks[2], (out_planes,), jnp.float32),
        "beta2": 0.1 * jax.random.normal(ks[3], (out_planes,), jnp.float32),
        "w1": 0.1 * jax.random.normal(ks[4], (out_planes, in_planes, 3, 3), jnp.float32),
        "w2": 0.1 * jax.random.normal(ks[5], (out_planes, out_planes, 3, 3), jnp.float32),
        "ws": 0.1 * jax.random.normal(ks[6], (out_planes, in_planes, 1, 1), jnp.float32),
    }


if __name__ == "__main__":
    key = jax.random.PRNGKey(0)
    k_x1, k_p1, k_x2, k_p2 = jax.random.split(key, 4)

    # Case 1: in_planes != out_planes (conv shortcut), stride 2
    x1 = jax.random.normal(k_x1, (2, 4, 16, 16), jnp.float32)
    p1 = make_params(k_p1, 4, 8)
    # Case 2: in_planes == out_planes (identity shortcut), stride 1
    x2 = jax.random.normal(k_x2, (2, 8, 16, 16), jnp.float32)
    p2 = make_params(k_p2, 8, 8)

    ref1 = ref_forward(x1, p1, 2)
    ref2 = ref_forward(x2, p2, 1)

    # Exact-semantics check: f32 MXU inputs, tight tolerance.
    o1 = jax.block_until_ready(basic_block_forward(x1, p1, stride=2, use_bf16=False))
    o2 = jax.block_until_ready(basic_block_forward(x2, p2, stride=1, use_bf16=False))
    assert o1.shape == (2, 8, 8, 8), o1.shape
    assert o2.shape == (2, 8, 16, 16), o2.shape
    assert jnp.allclose(o1, ref1, rtol=1e-4, atol=1e-4), float(jnp.max(jnp.abs(o1 - ref1)))
    assert jnp.allclose(o2, ref2, rtol=1e-4, atol=1e-4), float(jnp.max(jnp.abs(o2 - ref2)))

    # Performance path: bf16 MXU inputs with f32 accumulation (looser tolerance).
    o1b = jax.block_until_ready(basic_block_forward(x1, p1, stride=2, use_bf16=True))
    o2b = jax.block_until_ready(basic_block_forward(x2, p2, stride=1, use_bf16=True))
    assert jnp.allclose(o1b, ref1, rtol=5e-2, atol=5e-2), float(jnp.max(jnp.abs(o1b - ref1)))
    assert jnp.allclose(o2b, ref2, rtol=5e-2, atol=5e-2), float(jnp.max(jnp.abs(o2b - ref2)))

    print("KERNEL_OK")
</pallas_src>

<mosaic_0001>
module attributes {stable_mosaic.version = 11 : i64} {
  func.func @fused_conv_kernel(%arg0: i32, %arg1: memref<1x16x16x128xf32, #tpu.memory_space<vmem>>, %arg2: memref<1x128xf32, #tpu.memory_space<vmem>>, %arg3: memref<1x128xf32, #tpu.memory_space<vmem>>, %arg4: memref<9x128x128xf32, #tpu.memory_space<vmem>>, %arg5: memref<1x64x128xf32, #tpu.memory_space<vmem>>, %arg6: memref<18x18x128xf32, #tpu.memory_space<vmem>>) attributes {dimension_semantics = [#tpu.dimension_semantics<parallel>], iteration_bounds = array<i64: 2>, scalar_prefetch = 0 : i64, scratch_operands = 1 : i64, tpu.core_type = #tpu.core_type<tc>, window_params = [{transform_indices = @transform_0, window_bounds = array<i64: 1, 16, 16, 128>}, {pipeline_mode = #tpu.pipeline_mode<synchronous>, transform_indices = @transform_1, window_bounds = array<i64: 1, 128>}, {pipeline_mode = #tpu.pipeline_mode<synchronous>, transform_indices = @transform_2, window_bounds = array<i64: 1, 128>}, {pipeline_mode = #tpu.pipeline_mode<synchronous>, transform_indices = @transform_3, window_bounds = array<i64: 9, 128, 128>}, {transform_indices = @transform_4, window_bounds = array<i64: 1, 64, 128>}]} {
    %cst = arith.constant 0.000000e+00 : f32
    %0 = vector.broadcast %cst : f32 to vector<18x18x128xf32>
    %c0 = arith.constant 0 : index
    %c0_0 = arith.constant 0 : index
    %c0_1 = arith.constant 0 : index
    %1 = vector.load %arg6[%c0, %c0_0, %c0_1] : memref<18x18x128xf32, #tpu.memory_space<vmem>>, vector<18x18x128xf32>
    tpu.vector_store %arg6[%c0, %c0_0, %c0_1], %0 {strides = array<i32>} : memref<18x18x128xf32, #tpu.memory_space<vmem>>, vector<18x18x128xf32>,
    %c0_2 = arith.constant 0 : index
    %c0_3 = arith.constant 0 : index
    %c0_4 = arith.constant 0 : index
    %c0_5 = arith.constant 0 : index
    %2 = vector.load %arg1[%c0_2, %c0_3, %c0_4, %c0_5] : memref<1x16x16x128xf32, #tpu.memory_space<vmem>>, vector<1x16x16x128xf32>
    %3 = vector.shape_cast %2 : vector<1x16x16x128xf32> to vector<16x16x128xf32>
    %c0_6 = arith.constant 0 : index
    %c0_7 = arith.constant 0 : index
    %4 = vector.load %arg2[%c0_6, %c0_7] : memref<1x128xf32, #tpu.memory_space<vmem>>, vector<1x128xf32>
    %5 = vector.shape_cast %4 : vector<1x128xf32> to vector<1x1x128xf32>
    %6 = vector.broadcast %5 : vector<1x1x128xf32> to vector<16x16x128xf32>
    %7 = arith.mulf %3, %6 : vector<16x16x128xf32>
    %c0_8 = arith.constant 0 : index
    %c0_9 = arith.constant 0 : index
    %8 = vector.load %arg3[%c0_8, %c0_9] : memref<1x128xf32, #tpu.memory_space<vmem>>, vector<1x128xf32>
    %9 = vector.shape_cast %8 : vector<1x128xf32> to vector<1x1x128xf32>
    %10 = vector.broadcast %9 : vector<1x1x128xf32> to vector<16x16x128xf32>
    %11 = arith.addf %7, %10 : vector<16x16x128xf32>
    %cst_10 = arith.constant 0.000000e+00 : f32
    %12 = vector.broadcast %cst_10 : f32 to vector<16x16x128xf32>
    %13 = arith.maximumf %11, %12 : vector<16x16x128xf32>
    %c1 = arith.constant 1 : index
    %c1_11 = arith.constant 1 : index
    %c0_12 = arith.constant 0 : index
    %14 = vector.load %arg6[%c1, %c1_11, %c0_12] : memref<18x18x128xf32, #tpu.memory_space<vmem>>, vector<16x16x128xf32>
    tpu.vector_store %arg6[%c1, %c1_11, %c0_12], %13 {strides = array<i32>} : memref<18x18x128xf32, #tpu.memory_space<vmem>>, vector<16x16x128xf32>,
    %cst_13 = arith.constant 0.000000e+00 : f32
    %15 = vector.broadcast %cst_13 : f32 to vector<64x128xf32>
    %c0_14 = arith.constant 0 : index
    %c0_15 = arith.constant 0 : index
    %c0_16 = arith.constant 0 : index
    %16 = tpu.strided_load %arg6[%c0_14, %c0_15, %c0_16] {strides = array<i32: 2, 2, 1>} : memref<18x18x128xf32, #tpu.memory_space<vmem>>, vector<8x8x128xf32>
    %17 = vector.shape_cast %16 : vector<8x8x128xf32> to vector<64x128xf32>
    %c0_17 = arith.constant 0 : index
    %c0_18 = arith.constant 0 : index
    %c0_19 = arith.constant 0 : index
    %18 = vector.load %arg4[%c0_17, %c0_18, %c0_19] : memref<9x128x128xf32, #tpu.memory_space<vmem>>, vector<1x128x128xf32>
    %19 = vector.shape_cast %18 : vector<1x128x128xf32> to vector<128x128xf32>
    %cst_20 = arith.constant dense<0.000000e+00> : vector<64x128xf32>
    %20 = tpu.matmul %17, %19, %cst_20 {dimension_numbers = #tpu.dot_dimension_numbers<[1], [0], [0], [1], [0, 0, 1, 1], [], []>} : vector<64x128xf32>, vector<128x128xf32>, vector<64x128xf32> -> vector<64x128xf32>
    %21 = arith.addf %15, %20 : vector<64x128xf32>
    %c0_21 = arith.constant 0 : index
    %c1_22 = arith.constant 1 : index
    %c0_23 = arith.constant 0 : index
    %22 = tpu.strided_load %arg6[%c0_21, %c1_22, %c0_23] {strides = array<i32: 2, 2, 1>} : memref<18x18x128xf32, #tpu.memory_space<vmem>>, vector<8x8x128xf32>
    %23 = vector.shape_cast %22 : vector<8x8x128xf32> to vector<64x128xf32>
    %c1_24 = arith.constant 1 : index
    %c0_25 = arith.constant 0 : index
    %c0_26 = arith.constant 0 : index
    %24 = vector.load %arg4[%c1_24, %c0_25, %c0_26] : memref<9x128x128xf32, #tpu.memory_space<vmem>>, vector<1x128x128xf32>
    %25 = vector.shape_cast %24 : vector<1x128x128xf32> to vector<128x128xf32>
    %cst_27 = arith.constant dense<0.000000e+00> : vector<64x128xf32>
    %26 = tpu.matmul %23, %25, %cst_27 {dimension_numbers = #tpu.dot_dimension_numbers<[1], [0], [0], [1], [0, 0, 1, 1], [], []>} : vector<64x128xf32>, vector<128x128xf32>, vector<64x128xf32> -> vector<64x128xf32>
    %27 = arith.addf %21, %26 : vector<64x128xf32>
    %c0_28 = arith.constant 0 : index
    %c2 = arith.constant 2 : index
    %c0_29 = arith.constant 0 : index
    %28 = tpu.strided_load %arg6[%c0_28, %c2, %c0_29] {strides = array<i32: 2, 2, 1>} : memref<18x18x128xf32, #tpu.memory_space<vmem>>, vector<8x8x128xf32>
    %29 = vector.shape_cast %28 : vector<8x8x128xf32> to vector<64x128xf32>
    %c2_30 = arith.constant 2 : index
    %c0_31 = arith.constant 0 : index
    %c0_32 = arith.constant 0 : index
    %30 = vector.load %arg4[%c2_30, %c0_31, %c0_32] : memref<9x128x128xf32, #tpu.memory_space<vmem>>, vector<1x128x128xf32>
    %31 = vector.shape_cast %30 : vector<1x128x128xf32> to vector<128x128xf32>
    %cst_33 = arith.constant dense<0.000000e+00> : vector<64x128xf32>
    %32 = tpu.matmul %29, %31, %cst_33 {dimension_numbers = #tpu.dot_dimension_numbers<[1], [0], [0], [1], [0, 0, 1, 1], [], []>} : vector<64x128xf32>, vector<128x128xf32>, vector<64x128xf32> -> vector<64x128xf32>
    %33 = arith.addf %27, %32 : vector<64x128xf32>
    %c1_34 = arith.constant 1 : index
    %c0_35 = arith.constant 0 : index
    %c0_36 = arith.constant 0 : index
    %34 = tpu.strided_load %arg6[%c1_34, %c0_35, %c0_36] {strides = array<i32: 2, 2, 1>} : memref<18x18x128xf32, #tpu.memory_space<vmem>>, vector<8x8x128xf32>
    %35 = vector.shape_cast %34 : vector<8x8x128xf32> to vector<64x128xf32>
    %c3 = arith.constant 3 : index
    %c0_37 = arith.constant 0 : index
    %c0_38 = arith.constant 0 : index
    %36 = vector.load %arg4[%c3, %c0_37, %c0_38] : memref<9x128x128xf32, #tpu.memory_space<vmem>>, vector<1x128x128xf32>
    %37 = vector.shape_cast %36 : vector<1x128x128xf32> to vector<128x128xf32>
    %cst_39 = arith.constant dense<0.000000e+00> : vector<64x128xf32>
    %38 = tpu.matmul %35, %37, %cst_39 {dimension_numbers = #tpu.dot_dimension_numbers<[1], [0], [0], [1], [0, 0, 1, 1], [], []>} : vector<64x128xf32>, vector<128x128xf32>, vector<64x128xf32> -> vector<64x128xf32>
    %39 = arith.addf %33, %38 : vector<64x128xf32>
    %c1_40 = arith.constant 1 : index
    %c1_41 = arith.constant 1 : index
    %c0_42 = arith.constant 0 : index
    %40 = tpu.strided_load %arg6[%c1_40, %c1_41, %c0_42] {strides = array<i32: 2, 2, 1>} : memref<18x18x128xf32, #tpu.memory_space<vmem>>, vector<8x8x128xf32>
    %41 = vector.shape_cast %40 : vector<8x8x128xf32> to vector<64x128xf32>
    %c4 = arith.constant 4 : index
    %c0_43 = arith.constant 0 : index
    %c0_44 = arith.constant 0 : index
    %42 = vector.load %arg4[%c4, %c0_43, %c0_44] : memref<9x128x128xf32, #tpu.memory_space<vmem>>, vector<1x128x128xf32>
    %43 = vector.shape_cast %42 : vector<1x128x128xf32> to vector<128x128xf32>
    %cst_45 = arith.constant dense<0.000000e+00> : vector<64x128xf32>
    %44 = tpu.matmul %41, %43, %cst_45 {dimension_numbers = #tpu.dot_dimension_numbers<[1], [0], [0], [1], [0, 0, 1, 1], [], []>} : vector<64x128xf32>, vector<128x128xf32>, vector<64x128xf32> -> vector<64x128xf32>
    %45 = arith.addf %39, %44 : vector<64x128xf32>
    %c1_46 = arith.constant 1 : index
    %c2_47 = arith.constant 2 : index
    %c0_48 = arith.constant 0 : index
    %46 = tpu.strided_load %arg6[%c1_46, %c2_47, %c0_48] {strides = array<i32: 2, 2, 1>} : memref<18x18x128xf32, #tpu.memory_space<vmem>>, vector<8x8x128xf32>
    %47 = vector.shape_cast %46 : vector<8x8x128xf32> to vector<64x128xf32>
    %c5 = arith.constant 5 : index
    %c0_49 = arith.constant 0 : index
    %c0_50 = arith.constant 0 : index
    %48 = vector.load %arg4[%c5, %c0_49, %c0_50] : memref<9x128x128xf32, #tpu.memory_space<vmem>>, vector<1x128x128xf32>
    %49 = vector.shape_cast %48 : vector<1x128x128xf32> to vector<128x128xf32>
    %cst_51 = arith.constant dense<0.000000e+00> : vector<64x128xf32>
    %50 = tpu.matmul %47, %49, %cst_51 {dimension_numbers = #tpu.dot_dimension_numbers<[1], [0], [0], [1], [0, 0, 1, 1], [], []>} : vector<64x128xf32>, vector<128x128xf32>, vector<64x128xf32> -> vector<64x128xf32>
    %51 = arith.addf %45, %50 : vector<64x128xf32>
    %c2_52 = arith.constant 2 : index
    %c0_53 = arith.constant 0 : index
    %c0_54 = arith.constant 0 : index
    %52 = tpu.strided_load %arg6[%c2_52, %c0_53, %c0_54] {strides = array<i32: 2, 2, 1>} : memref<18x18x128xf32, #tpu.memory_space<vmem>>, vector<8x8x128xf32>
    %53 = vector.shape_cast %52 : vector<8x8x128xf32> to vector<64x128xf32>
    %c6 = arith.constant 6 : index
    %c0_55 = arith.constant 0 : index
    %c0_56 = arith.constant 0 : index
    %54 = vector.load %arg4[%c6, %c0_55, %c0_56] : memref<9x128x128xf32, #tpu.memory_space<vmem>>, vector<1x128x128xf32>
    %55 = vector.shape_cast %54 : vector<1x128x128xf32> to vector<128x128xf32>
    %cst_57 = arith.constant dense<0.000000e+00> : vector<64x128xf32>
    %56 = tpu.matmul %53, %55, %cst_57 {dimension_numbers = #tpu.dot_dimension_numbers<[1], [0], [0], [1], [0, 0, 1, 1], [], []>} : vector<64x128xf32>, vector<128x128xf32>, vector<64x128xf32> -> vector<64x128xf32>
    %57 = arith.addf %51, %56 : vector<64x128xf32>
    %c2_58 = arith.constant 2 : index
    %c1_59 = arith.constant 1 : index
    %c0_60 = arith.constant 0 : index
    %58 = tpu.strided_load %arg6[%c2_58, %c1_59, %c0_60] {strides = array<i32: 2, 2, 1>} : memref<18x18x128xf32, #tpu.memory_space<vmem>>, vector<8x8x128xf32>
    %59 = vector.shape_cast %58 : vector<8x8x128xf32> to vector<64x128xf32>
    %c7 = arith.constant 7 : index
    %c0_61 = arith.constant 0 : index
    %c0_62 = arith.constant 0 : index
    %60 = vector.load %arg4[%c7, %c0_61, %c0_62] : memref<9x128x128xf32, #tpu.memory_space<vmem>>, vector<1x128x128xf32>
    %61 = vector.shape_cast %60 : vector<1x128x128xf32> to vector<128x128xf32>
    %cst_63 = arith.constant dense<0.000000e+00> : vector<64x128xf32>
    %62 = tpu.matmul %59, %61, %cst_63 {dimension_numbers = #tpu.dot_dimension_numbers<[1], [0], [0], [1], [0, 0, 1, 1], [], []>} : vector<64x128xf32>, vector<128x128xf32>, vector<64x128xf32> -> vector<64x128xf32>
    %63 = arith.addf %57, %62 : vector<64x128xf32>
    %c2_64 = arith.constant 2 : index
    %c2_65 = arith.constant 2 : index
    %c0_66 = arith.constant 0 : index
    %64 = tpu.strided_load %arg6[%c2_64, %c2_65, %c0_66] {strides = array<i32: 2, 2, 1>} : memref<18x18x128xf32, #tpu.memory_space<vmem>>, vector<8x8x128xf32>
    %65 = vector.shape_cast %64 : vector<8x8x128xf32> to vector<64x128xf32>
    %c8 = arith.constant 8 : index
    %c0_67 = arith.constant 0 : index
    %c0_68 = arith.constant 0 : index
    %66 = vector.load %arg4[%c8, %c0_67, %c0_68] : memref<9x128x128xf32, #tpu.memory_space<vmem>>, vector<1x128x128xf32>
    %67 = vector.shape_cast %66 : vector<1x128x128xf32> to vector<128x128xf32>
    %cst_69 = arith.constant dense<0.000000e+00> : vector<64x128xf32>
    %68 = tpu.matmul %65, %67, %cst_69 {dimension_numbers = #tpu.dot_dimension_numbers<[1], [0], [0], [1], [0, 0, 1, 1], [], []>} : vector<64x128xf32>, vector<128x128xf32>, vector<64x128xf32> -> vector<64x128xf32>
    %69 = arith.addf %63, %68 : vector<64x128xf32>
    %c0_70 = arith.constant 0 : index
    %c0_71 = arith.constant 0 : index
    %c0_72 = arith.constant 0 : index
    %70 = vector.load %arg5[%c0_70, %c0_71, %c0_72] : memref<1x64x128xf32, #tpu.memory_space<vmem>>, vector<1x64x128xf32>
    %71 = vector.shape_cast %70 : vector<1x64x128xf32> to vector<64x128xf32>
    %72 = vector.shape_cast %69 : vector<64x128xf32> to vector<1x64x128xf32>
    tpu.vector_store %arg5[%c0_70, %c0_71, %c0_72], %72 {strides = array<i32>} : memref<1x64x128xf32, #tpu.memory_space<vmem>>, vector<1x64x128xf32>,
    return
  }
  func.func @transform_0(%arg0: i32) -> (i32, i32, i32, i32) {
    %c0_i32 = arith.constant 0 : i32
    %c0_i32_0 = arith.constant 0 : i32
    %c0_i32_1 = arith.constant 0 : i32
    %c0_i32_2 = arith.constant 0 : i32
    return %arg0, %c0_i32, %c0_i32_0, %c0_i32_1 : i32, i32, i32, i32
  }
  func.func @transform_1(%arg0: i32) -> (i32, i32) {
    %c0_i32 = arith.constant 0 : i32
    %c0_i32_0 = arith.constant 0 : i32
    %c0_i32_1 = arith.constant 0 : i32
    return %c0_i32, %c0_i32_0 : i32, i32
  }
  func.func @transform_2(%arg0: i32) -> (i32, i32) {
    %c0_i32 = arith.constant 0 : i32
    %c0_i32_0 = arith.constant 0 : i32
    %c0_i32_1 = arith.constant 0 : i32
    return %c0_i32, %c0_i32_0 : i32, i32
  }
  func.func @transform_3(%arg0: i32) -> (i32, i32, i32) {
    %c0_i32 = arith.constant 0 : i32
    %c0_i32_0 = arith.constant 0 : i32
    %c0_i32_1 = arith.constant 0 : i32
    %c0_i32_2 = arith.constant 0 : i32
    return %c0_i32, %c0_i32_0, %c0_i32_1 : i32, i32, i32
  }
  func.func @transform_4(%arg0: i32) -> (i32, i32, i32) {
    %c0_i32 = arith.constant 0 : i32
    %c0_i32_0 = arith.constant 0 : i32
    %c0_i32_1 = arith.constant 0 : i32
    return %arg0, %c0_i32, %c0_i32_0 : i32, i32, i32
  }
}

module attributes {stable_mosaic.version = 11 : i64} {
  func.func @fused_conv_kernel(%arg0: i32, %arg1: memref<1x8x8x128xf32, #tpu.memory_space<vmem>>, %arg2: memref<1x128xf32, #tpu.memory_space<vmem>>, %arg3: memref<1x128xf32, #tpu.memory_space<vmem>>, %arg4: memref<9x128x128xf32, #tpu.memory_space<vmem>>, %arg5: memref<1x64x128xf32, #tpu.memory_space<vmem>>, %arg6: memref<1x128xf32, #tpu.memory_space<vmem>>, %arg7: memref<1x128xf32, #tpu.memory_space<vmem>>, %arg8: memref<128x128xf32, #tpu.memory_space<vmem>>, %arg9: memref<1x64x128xf32, #tpu.memory_space<vmem>>, %arg10: memref<10x10x128xf32, #tpu.memory_space<vmem>>) attributes {dimension_semantics = [#tpu.dimension_semantics<parallel>], iteration_bounds = array<i64: 2>, scalar_prefetch = 0 : i64, scratch_operands = 1 : i64, tpu.core_type = #tpu.core_type<tc>, window_params = [{transform_indices = @transform_0, window_bounds = array<i64: 1, 8, 8, 128>}, {pipeline_mode = #tpu.pipeline_mode<synchronous>, transform_indices = @transform_1, window_bounds = array<i64: 1, 128>}, {pipeline_mode = #tpu.pipeline_mode<synchronous>, transform_indices = @transform_2, window_bounds = array<i64: 1, 128>}, {pipeline_mode = #tpu.pipeline_mode<synchronous>, transform_indices = @transform_3, window_bounds = array<i64: 9, 128, 128>}, {transform_indices = @transform_4, window_bounds = array<i64: 1, 64, 128>}, {pipeline_mode = #tpu.pipeline_mode<synchronous>, transform_indices = @transform_5, window_bounds = array<i64: 1, 128>}, {pipeline_mode = #tpu.pipeline_mode<synchronous>, transform_indices = @transform_6, window_bounds = array<i64: 1, 128>}, {pipeline_mode = #tpu.pipeline_mode<synchronous>, transform_indices = @transform_7, window_bounds = array<i64: 128, 128>}, {transform_indices = @transform_8, window_bounds = array<i64: 1, 64, 128>}]} {
    %cst = arith.constant 0.000000e+00 : f32
    %0 = vector.broadcast %cst : f32 to vector<10x10x128xf32>
    %c0 = arith.constant 0 : index
    %c0_0 = arith.constant 0 : index
    %c0_1 = arith.constant 0 : index
    %1 = vector.load %arg10[%c0, %c0_0, %c0_1] : memref<10x10x128xf32, #tpu.memory_space<vmem>>, vector<10x10x128xf32>
    tpu.vector_store %arg10[%c0, %c0_0, %c0_1], %0 {strides = array<i32>} : memref<10x10x128xf32, #tpu.memory_space<vmem>>, vector<10x10x128xf32>,
    %c0_2 = arith.constant 0 : index
    %c0_3 = arith.constant 0 : index
    %c0_4 = arith.constant 0 : index
    %c0_5 = arith.constant 0 : index
    %2 = vector.load %arg1[%c0_2, %c0_3, %c0_4, %c0_5] : memref<1x8x8x128xf32, #tpu.memory_space<vmem>>, vector<1x8x8x128xf32>
    %3 = vector.shape_cast %2 : vector<1x8x8x128xf32> to vector<8x8x128xf32>
    %c0_6 = arith.constant 0 : index
    %c0_7 = arith.constant 0 : index
    %4 = vector.load %arg2[%c0_6, %c0_7] : memref<1x128xf32, #tpu.memory_space<vmem>>, vector<1x128xf32>
    %5 = vector.shape_cast %4 : vector<1x128xf32> to vector<1x1x128xf32>
    %6 = vector.broadcast %5 : vector<1x1x128xf32> to vector<8x8x128xf32>
    %7 = arith.mulf %3, %6 : vector<8x8x128xf32>
    %c0_8 = arith.constant 0 : index
    %c0_9 = arith.constant 0 : index
    %8 = vector.load %arg3[%c0_8, %c0_9] : memref<1x128xf32, #tpu.memory_space<vmem>>, vector<1x128xf32>
    %9 = vector.shape_cast %8 : vector<1x128xf32> to vector<1x1x128xf32>
    %10 = vector.broadcast %9 : vector<1x1x128xf32> to vector<8x8x128xf32>
    %11 = arith.addf %7, %10 : vector<8x8x128xf32>
    %cst_10 = arith.constant 0.000000e+00 : f32
    %12 = vector.broadcast %cst_10 : f32 to vector<8x8x128xf32>
    %13 = arith.maximumf %11, %12 : vector<8x8x128xf32>
    %c1 = arith.constant 1 : index
    %c1_11 = arith.constant 1 : index
    %c0_12 = arith.constant 0 : index
    %14 = vector.load %arg10[%c1, %c1_11, %c0_12] : memref<10x10x128xf32, #tpu.memory_space<vmem>>, vector<8x8x128xf32>
    tpu.vector_store %arg10[%c1, %c1_11, %c0_12], %13 {strides = array<i32>} : memref<10x10x128xf32, #tpu.memory_space<vmem>>, vector<8x8x128xf32>,
    %cst_13 = arith.constant 0.000000e+00 : f32
    %15 = vector.broadcast %cst_13 : f32 to vector<64x128xf32>
    %c0_14 = arith.constant 0 : index
    %c0_15 = arith.constant 0 : index
    %c0_16 = arith.constant 0 : index
    %16 = vector.load %arg10[%c0_14, %c0_15, %c0_16] : memref<10x10x128xf32, #tpu.memory_space<vmem>>, vector<8x8x128xf32>
    %17 = vector.shape_cast %16 : vector<8x8x128xf32> to vector<64x128xf32>
    %c0_17 = arith.constant 0 : index
    %c0_18 = arith.constant 0 : index
    %c0_19 = arith.constant 0 : index
    %18 = vector.load %arg4[%c0_17, %c0_18, %c0_19] : memref<9x128x128xf32, #tpu.memory_space<vmem>>, vector<1x128x128xf32>
    %19 = vector.shape_cast %18 : vector<1x128x128xf32> to vector<128x128xf32>
    %cst_20 = arith.constant dense<0.000000e+00> : vector<64x128xf32>
    %20 = tpu.matmul %17, %19, %cst_20 {dimension_numbers = #tpu.dot_dimension_numbers<[1], [0], [0], [1], [0, 0, 1, 1], [], []>} : vector<64x128xf32>, vector<128x128xf32>, vector<64x128xf32> -> vector<64x128xf32>
    %21 = arith.addf %15, %20 : vector<64x128xf32>
    %c0_21 = arith.constant 0 : index
    %c1_22 = arith.constant 1 : index
    %c0_23 = arith.constant 0 : index
    %22 = vector.load %arg10[%c0_21, %c1_22, %c0_23] : memref<10x10x128xf32, #tpu.memory_space<vmem>>, vector<8x8x128xf32>
    %23 = vector.shape_cast %22 : vector<8x8x128xf32> to vector<64x128xf32>
    %c1_24 = arith.constant 1 : index
    %c0_25 = arith.constant 0 : index
    %c0_26 = arith.constant 0 : index
    %24 = vector.load %arg4[%c1_24, %c0_25, %c0_26] : memref<9x128x128xf32, #tpu.memory_space<vmem>>, vector<1x128x128xf32>
    %25 = vector.shape_cast %24 : vector<1x128x128xf32> to vector<128x128xf32>
    %cst_27 = arith.constant dense<0.000000e+00> : vector<64x128xf32>
    %26 = tpu.matmul %23, %25, %cst_27 {dimension_numbers = #tpu.dot_dimension_numbers<[1], [0], [0], [1], [0, 0, 1, 1], [], []>} : vector<64x128xf32>, vector<128x128xf32>, vector<64x128xf32> -> vector<64x128xf32>
    %27 = arith.addf %21, %26 : vector<64x128xf32>
    %c0_28 = arith.constant 0 : index
    %c2 = arith.constant 2 : index
    %c0_29 = arith.constant 0 : index
    %28 = vector.load %arg10[%c0_28, %c2, %c0_29] : memref<10x10x128xf32, #tpu.memory_space<vmem>>, vector<8x8x128xf32>
    %29 = vector.shape_cast %28 : vector<8x8x128xf32> to vector<64x128xf32>
    %c2_30 = arith.constant 2 : index
    %c0_31 = arith.constant 0 : index
    %c0_32 = arith.constant 0 : index
    %30 = vector.load %arg4[%c2_30, %c0_31, %c0_32] : memref<9x128x128xf32, #tpu.memory_space<vmem>>, vector<1x128x128xf32>
    %31 = vector.shape_cast %30 : vector<1x128x128xf32> to vector<128x128xf32>
    %cst_33 = arith.constant dense<0.000000e+00> : vector<64x128xf32>
    %32 = tpu.matmul %29, %31, %cst_33 {dimension_numbers = #tpu.dot_dimension_numbers<[1], [0], [0], [1], [0, 0, 1, 1], [], []>} : vector<64x128xf32>, vector<128x128xf32>, vector<64x128xf32> -> vector<64x128xf32>
    %33 = arith.addf %27, %32 : vector<64x128xf32>
    %c1_34 = arith.constant 1 : index
    %c0_35 = arith.constant 0 : index
    %c0_36 = arith.constant 0 : index
    %34 = vector.load %arg10[%c1_34, %c0_35, %c0_36] : memref<10x10x128xf32, #tpu.memory_space<vmem>>, vector<8x8x128xf32>
    %35 = vector.shape_cast %34 : vector<8x8x128xf32> to vector<64x128xf32>
    %c3 = arith.constant 3 : index
    %c0_37 = arith.constant 0 : index
    %c0_38 = arith.constant 0 : index
    %36 = vector.load %arg4[%c3, %c0_37, %c0_38] : memref<9x128x128xf32, #tpu.memory_space<vmem>>, vector<1x128x128xf32>
    %37 = vector.shape_cast %36 : vector<1x128x128xf32> to vector<128x128xf32>
    %cst_39 = arith.constant dense<0.000000e+00> : vector<64x128xf32>
    %38 = tpu.matmul %35, %37, %cst_39 {dimension_numbers = #tpu.dot_dimension_numbers<[1], [0], [0], [1], [0, 0, 1, 1], [], []>} : vector<64x128xf32>, vector<128x128xf32>, vector<64x128xf32> -> vector<64x128xf32>
    %39 = arith.addf %33, %38 : vector<64x128xf32>
    %c1_40 = arith.constant 1 : index
    %c1_41 = arith.constant 1 : index
    %c0_42 = arith.constant 0 : index
    %40 = vector.load %arg10[%c1_40, %c1_41, %c0_42] : memref<10x10x128xf32, #tpu.memory_space<vmem>>, vector<8x8x128xf32>
    %41 = vector.shape_cast %40 : vector<8x8x128xf32> to vector<64x128xf32>
    %c4 = arith.constant 4 : index
    %c0_43 = arith.constant 0 : index
    %c0_44 = arith.constant 0 : index
    %42 = vector.load %arg4[%c4, %c0_43, %c0_44] : memref<9x128x128xf32, #tpu.memory_space<vmem>>, vector<1x128x128xf32>
    %43 = vector.shape_cast %42 : vector<1x128x128xf32> to vector<128x128xf32>
    %cst_45 = arith.constant dense<0.000000e+00> : vector<64x128xf32>
    %44 = tpu.matmul %41, %43, %cst_45 {dimension_numbers = #tpu.dot_dimension_numbers<[1], [0], [0], [1], [0, 0, 1, 1], [], []>} : vector<64x128xf32>, vector<128x128xf32>, vector<64x128xf32> -> vector<64x128xf32>
    %45 = arith.addf %39, %44 : vector<64x128xf32>
    %c1_46 = arith.constant 1 : index
    %c2_47 = arith.constant 2 : index
    %c0_48 = arith.constant 0 : index
    %46 = vector.load %arg10[%c1_46, %c2_47, %c0_48] : memref<10x10x128xf32, #tpu.memory_space<vmem>>, vector<8x8x128xf32>
    %47 = vector.shape_cast %46 : vector<8x8x128xf32> to vector<64x128xf32>
    %c5 = arith.constant 5 : index
    %c0_49 = arith.constant 0 : index
    %c0_50 = arith.constant 0 : index
    %48 = vector.load %arg4[%c5, %c0_49, %c0_50] : memref<9x128x128xf32, #tpu.memory_space<vmem>>, vector<1x128x128xf32>
    %49 = vector.shape_cast %48 : vector<1x128x128xf32> to vector<128x128xf32>
    %cst_51 = arith.constant dense<0.000000e+00> : vector<64x128xf32>
    %50 = tpu.matmul %47, %49, %cst_51 {dimension_numbers = #tpu.dot_dimension_numbers<[1], [0], [0], [1], [0, 0, 1, 1], [], []>} : vector<64x128xf32>, vector<128x128xf32>, vector<64x128xf32> -> vector<64x128xf32>
    %51 = arith.addf %45, %50 : vector<64x128xf32>
    %c2_52 = arith.constant 2 : index
    %c0_53 = arith.constant 0 : index
    %c0_54 = arith.constant 0 : index
    %52 = vector.load %arg10[%c2_52, %c0_53, %c0_54] : memref<10x10x128xf32, #tpu.memory_space<vmem>>, vector<8x8x128xf32>
    %53 = vector.shape_cast %52 : vector<8x8x128xf32> to vector<64x128xf32>
    %c6 = arith.constant 6 : index
    %c0_55 = arith.constant 0 : index
    %c0_56 = arith.constant 0 : index
    %54 = vector.load %arg4[%c6, %c0_55, %c0_56] : memref<9x128x128xf32, #tpu.memory_space<vmem>>, vector<1x128x128xf32>
    %55 = vector.shape_cast %54 : vector<1x128x128xf32> to vector<128x128xf32>
    %cst_57 = arith.constant dense<0.000000e+00> : vector<64x128xf32>
    %56 = tpu.matmul %53, %55, %cst_57 {dimension_numbers = #tpu.dot_dimension_numbers<[1], [0], [0], [1], [0, 0, 1, 1], [], []>} : vector<64x128xf32>, vector<128x128xf32>, vector<64x128xf32> -> vector<64x128xf32>
    %57 = arith.addf %51, %56 : vector<64x128xf32>
    %c2_58 = arith.constant 2 : index
    %c1_59 = arith.constant 1 : index
    %c0_60 = arith.constant 0 : index
    %58 = vector.load %arg10[%c2_58, %c1_59, %c0_60] : memref<10x10x128xf32, #tpu.memory_space<vmem>>, vector<8x8x128xf32>
    %59 = vector.shape_cast %58 : vector<8x8x128xf32> to vector<64x128xf32>
    %c7 = arith.constant 7 : index
    %c0_61 = arith.constant 0 : index
    %c0_62 = arith.constant 0 : index
    %60 = vector.load %arg4[%c7, %c0_61, %c0_62] : memref<9x128x128xf32, #tpu.memory_space<vmem>>, vector<1x128x128xf32>
    %61 = vector.shape_cast %60 : vector<1x128x128xf32> to vector<128x128xf32>
    %cst_63 = arith.constant dense<0.000000e+00> : vector<64x128xf32>
    %62 = tpu.matmul %59, %61, %cst_63 {dimension_numbers = #tpu.dot_dimension_numbers<[1], [0], [0], [1], [0, 0, 1, 1], [], []>} : vector<64x128xf32>, vector<128x128xf32>, vector<64x128xf32> -> vector<64x128xf32>
    %63 = arith.addf %57, %62 : vector<64x128xf32>
    %c2_64 = arith.constant 2 : index
    %c2_65 = arith.constant 2 : index
    %c0_66 = arith.constant 0 : index
    %64 = vector.load %arg10[%c2_64, %c2_65, %c0_66] : memref<10x10x128xf32, #tpu.memory_space<vmem>>, vector<8x8x128xf32>
    %65 = vector.shape_cast %64 : vector<8x8x128xf32> to vector<64x128xf32>
    %c8 = arith.constant 8 : index
    %c0_67 = arith.constant 0 : index
    %c0_68 = arith.constant 0 : index
    %66 = vector.load %arg4[%c8, %c0_67, %c0_68] : memref<9x128x128xf32, #tpu.memory_space<vmem>>, vector<1x128x128xf32>
    %67 = vector.shape_cast %66 : vector<1x128x128xf32> to vector<128x128xf32>
    %cst_69 = arith.constant dense<0.000000e+00> : vector<64x128xf32>
    %68 = tpu.matmul %65, %67, %cst_69 {dimension_numbers = #tpu.dot_dimension_numbers<[1], [0], [0], [1], [0, 0, 1, 1], [], []>} : vector<64x128xf32>, vector<128x128xf32>, vector<64x128xf32> -> vector<64x128xf32>
    %69 = arith.addf %63, %68 : vector<64x128xf32>
    %c0_70 = arith.constant 0 : index
    %c0_71 = arith.constant 0 : index
    %c0_72 = arith.constant 0 : index
    %70 = vector.load %arg5[%c0_70, %c0_71, %c0_72] : memref<1x64x128xf32, #tpu.memory_space<vmem>>, vector<1x64x128xf32>
    %71 = vector.shape_cast %70 : vector<1x64x128xf32> to vector<64x128xf32>
    %c0_73 = arith.constant 0 : index
    %c0_74 = arith.constant 0 : index
    %72 = vector.load %arg6[%c0_73, %c0_74] : memref<1x128xf32, #tpu.memory_space<vmem>>, vector<1x128xf32>
    %73 = vector.broadcast %72 : vector<1x128xf32> to vector<64x128xf32>
    %74 = arith.mulf %71, %73 : vector<64x128xf32>
    %c0_75 = arith.constant 0 : index
    %c0_76 = arith.constant 0 : index
    %75 = vector.load %arg7[%c0_75, %c0_76] : memref<1x128xf32, #tpu.memory_space<vmem>>, vector<1x128xf32>
    %76 = vector.broadcast %75 : vector<1x128xf32> to vector<64x128xf32>
    %77 = arith.addf %74, %76 : vector<64x128xf32>
    %cst_77 = arith.constant 0.000000e+00 : f32
    %78 = vector.broadcast %cst_77 : f32 to vector<64x128xf32>
    %79 = arith.maximumf %77, %78 : vector<64x128xf32>
    %c0_78 = arith.constant 0 : index
    %c0_79 = arith.constant 0 : index
    %80 = vector.load %arg8[%c0_78, %c0_79] : memref<128x128xf32, #tpu.memory_space<vmem>>, vector<128x128xf32>
    %cst_80 = arith.constant dense<0.000000e+00> : vector<64x128xf32>
    %81 = tpu.matmul %79, %80, %cst_80 {dimension_numbers = #tpu.dot_dimension_numbers<[1], [0], [0], [1], [0, 0, 1, 1], [], []>} : vector<64x128xf32>, vector<128x128xf32>, vector<64x128xf32> -> vector<64x128xf32>
    %82 = arith.addf %69, %81 : vector<64x128xf32>
    %c0_81 = arith.constant 0 : index
    %c0_82 = arith.constant 0 : index
    %c0_83 = arith.constant 0 : index
    %83 = vector.load %arg9[%c0_81, %c0_82, %c0_83] : memref<1x64x128xf32, #tpu.memory_space<vmem>>, vector<1x64x128xf32>
    %84 = vector.shape_cast %83 : vector<1x64x128xf32> to vector<64x128xf32>
    %85 = vector.shape_cast %82 : vector<64x128xf32> to vector<1x64x128xf32>
    tpu.vector_store %arg9[%c0_81, %c0_82, %c0_83], %85 {strides = array<i32>} : memref<1x64x128xf32, #tpu.memory_space<vmem>>, vector<1x64x128xf32>,
    return
  }
  func.func @transform_0(%arg0: i32) -> (i32, i32, i32, i32) {
    %c0_i32 = arith.constant 0 : i32
    %c0_i32_0 = arith.constant 0 : i32
    %c0_i32_1 = arith.constant 0 : i32
    %c0_i32_2 = arith.constant 0 : i32
    return %arg0, %c0_i32, %c0_i32_0, %c0_i32_1 : i32, i32, i32, i32
  }
  func.func @transform_1(%arg0: i32) -> (i32, i32) {
    %c0_i32 = arith.constant 0 : i32
    %c0_i32_0 = arith.constant 0 : i32
    %c0_i32_1 = arith.constant 0 : i32
    return %c0_i32, %c0_i32_0 : i32, i32
  }
  func.func @transform_2(%arg0: i32) -> (i32, i32) {
    %c0_i32 = arith.constant 0 : i32
    %c0_i32_0 = arith.constant 0 : i32
    %c0_i32_1 = arith.constant 0 : i32
    return %c0_i32, %c0_i32_0 : i32, i32
  }
  func.func @transform_3(%arg0: i32) -> (i32, i32, i32) {
    %c0_i32 = arith.constant 0 : i32
    %c0_i32_0 = arith.constant 0 : i32
    %c0_i32_1 = arith.constant 0 : i32
    %c0_i32_2 = arith.constant 0 : i32
    return %c0_i32, %c0_i32_0, %c0_i32_1 : i32, i32, i32
  }
  func.func @transform_4(%arg0: i32) -> (i32, i32, i32) {
    %c0_i32 = arith.constant 0 : i32
    %c0_i32_0 = arith.constant 0 : i32
    %c0_i32_1 = arith.constant 0 : i32
    return %arg0, %c0_i32, %c0_i32_0 : i32, i32, i32
  }
  func.func @transform_5(%arg0: i32) -> (i32, i32) {
    %c0_i32 = arith.constant 0 : i32
    %c0_i32_0 = arith.constant 0 : i32
    %c0_i32_1 = arith.constant 0 : i32
    return %c0_i32, %c0_i32_0 : i32, i32
  }
  func.func @transform_6(%arg0: i32) -> (i32, i32) {
    %c0_i32 = arith.constant 0 : i32
    %c0_i32_0 = arith.constant 0 : i32
    %c0_i32_1 = arith.constant 0 : i32
    return %c0_i32, %c0_i32_0 : i32, i32
  }
  func.func @transform_7(%arg0: i32) -> (i32, i32) {
    %c0_i32 = arith.constant 0 : i32
    %c0_i32_0 = arith.constant 0 : i32
    %c0_i32_1 = arith.constant 0 : i32
    return %c0_i32, %c0_i32_0 : i32, i32
  }
  func.func @transform_8(%arg0: i32) -> (i32, i32, i32) {
    %c0_i32 = arith.constant 0 : i32
    %c0_i32_0 = arith.constant 0 : i32
    %c0_i32_1 = arith.constant 0 : i32
    return %arg0, %c0_i32, %c0_i32_0 : i32, i32, i32
  }
}

</mosaic_0001>

<llo_original>
// kernel: basic_block_forward.2
$region0: #{basic_block_forward.2}
  #allocation0 [shape = 'u32[]', space=smem, size = 0x4, offset = 0x4, fixed_abs, tag = 'smem constant byte address 0x4 - core index']
  #allocation1 [shape = 'u32[144,128]{1,0:T(1,128)}', space=vmem, size = 0x12000, scoped, tag = 'internal scratch']
  #allocation2 [shape = 'f32[18,18,128]{2,1,0:T(8,128)}', space=vmem, size = 0x36000, scoped, tag = 'scratch operand']
  %s0 = inlined_call_operand.vmem [shape: f32[2,16,16,128], index: 0, kind: input, shape index: {}]
  %s1 = inlined_call_operand.vmem [shape: f32[1,128], index: 1, kind: input, shape index: {}]
  %s2 = inlined_call_operand.vmem [shape: f32[1,128], index: 2, kind: input, shape index: {}]
  %s3 = inlined_call_operand.vmem [shape: f32[9,128,128], index: 3, kind: input, shape index: {}]
  %s4 = inlined_call_operand.vmem [shape: f32[2,64,128], index: 4, kind: output, shape index: {}]
  %s5 = sld [smem:[#allocation0]]
  $region49: #{basic_block_forward.2} parent=0
    _
  %s7 = ssub.s32 1, %s5
  %s8 = scalar_select 0, %s7, %s5
  loop: start=0, step=1, limit=4
  $region2: #{basic_block_forward.2} parent=0 // loop_pre_header
    _
  $region3: #{basic_block_forward.2} parent=0 // loop_header
    %s10 = sphi 0, %s14
    %p11 = scmp.ge.s32.totalorder %s10, 4
    %s20 = sphi 0, %s22
    %s23 = sphi 0, %s20
    %s24 = sphi 0, %s23
    %s40 = sphi 0, %s24
    %s44 = sphi 0, %s44
    %s46 = sphi 0, %s44
    %s47 = sphi 0, %s46
    %s61 = sphi 0, %s47
    %s65 = sphi 0, %s65
    %s67 = sphi 0, %s65
    %s68 = sphi 0, %s67
    %s82 = sphi 0, %s68
    %s86 = sphi 0, %s86
    %s88 = sphi 0, %s86
    %s89 = sphi 0, %s88
    %s103 = sphi 0, %s89
    %s109 = sphi 0, %s111
    %s112 = sphi 0, %s109
    %s113 = sphi 0, %s112
    %s129 = sphi 0, %s113
  $region4: #{basic_block_forward.2} parent=0 // loop_header_branch
    %13 = sbr.rel (%p11) target = $region8
  $region5: #{basic_block_forward.2} parent=0 // loop_body
    %s15 = ssub.s32 %s10, 1
    %s16 = ssub.s32 %s10, 2
    %s17 = sadd.s32 %s10, 1
    %s18 = ssub.s32 %s10, %s17
    %p19 = scmp.eq.s32.totalorder %s18, 0
    %s21 = sadd.s32 %s20, 1
    %s22 = scalar_select %p19, %s20, %s21
    %p25 = pneg %p19
    %p26 = scmp.eq.s32.totalorder %s10, 1
    %p27 = por %p25, %p26
    %p28 = scmp.ne.s32.totalorder %s20, %s23
    %p29 = scmp.eq.s32.totalorder %s10, 0
    %p30 = por %p28, %p29
    %p31 = scmp.ne.s32.totalorder %s20, %s23
    %p32 = scmp.eq.s32.totalorder %s15, 1
    %p33 = por %p31, %p32
    %p34 = scmp.ne.s32.totalorder %s23, %s24
    %p35 = scmp.eq.s32.totalorder %s15, 0
    %p36 = por %p34, %p35
    %p37 = scmp.ne.s32.totalorder %s23, %s24
    %p38 = scmp.eq.s32.totalorder %s16, 1
    %p39 = por %p37, %p38
    %p41 = scmp.ne.s32.totalorder %s24, %s40
    %p42 = scmp.eq.s32.totalorder %s16, 0
    %p43 = por %p41, %p42
    %s45 = sadd.s32 %s44, 1
    %p48 = scmp.eq.s32.totalorder %s10, 1
    %p49 = scmp.ne.s32.totalorder %s44, %s46
    %p50 = scmp.eq.s32.totalorder %s10, 0
    %p51 = por %p49, %p50
    %p52 = scmp.ne.s32.totalorder %s44, %s46
    %p53 = scmp.eq.s32.totalorder %s15, 1
    %p54 = por %p52, %p53
    %p55 = scmp.ne.s32.totalorder %s46, %s47
    %p56 = scmp.eq.s32.totalorder %s15, 0
    %p57 = por %p55, %p56
    %p58 = scmp.ne.s32.totalorder %s46, %s47
    %p59 = scmp.eq.s32.totalorder %s16, 1
    %p60 = por %p58, %p59
    %p62 = scmp.ne.s32.totalorder %s47, %s61
    %p63 = scmp.eq.s32.totalorder %s16, 0
    %p64 = por %p62, %p63
    %s66 = sadd.s32 %s65, 1
    %p69 = scmp.eq.s32.totalorder %s10, 1
    %p70 = scmp.ne.s32.totalorder %s65, %s67
    %p71 = scmp.eq.s32.totalorder %s10, 0
    %p72 = por %p70, %p71
    %p73 = scmp.ne.s32.totalorder %s65, %s67
    %p74 = scmp.eq.s32.totalorder %s15, 1
    %p75 = por %p73, %p74
    %p76 = scmp.ne.s32.totalorder %s67, %s68
    %p77 = scmp.eq.s32.totalorder %s15, 0
    %p78 = por %p76, %p77
    %p79 = scmp.ne.s32.totalorder %s67, %s68
    %p80 = scmp.eq.s32.totalorder %s16, 1
    %p81 = por %p79, %p80
    %p83 = scmp.ne.s32.totalorder %s68, %s82
    %p84 = scmp.eq.s32.totalorder %s16, 0
    %p85 = por %p83, %p84
    %s87 = sadd.s32 %s86, 1
    %p90 = scmp.eq.s32.totalorder %s10, 1
    %p91 = scmp.ne.s32.totalorder %s86, %s88
    %p92 = scmp.eq.s32.totalorder %s10, 0
    %p93 = por %p91, %p92
    %p94 = scmp.ne.s32.totalorder %s86, %s88
    %p95 = scmp.eq.s32.totalorder %s15, 1
    %p96 = por %p94, %p95
    %p97 = scmp.ne.s32.totalorder %s88, %s89
    %p98 = scmp.eq.s32.totalorder %s15, 0
    %p99 = por %p97, %p98
    %p100 = scmp.ne.s32.totalorder %s88, %s89
    %p101 = scmp.eq.s32.totalorder %s16, 1
    %p102 = por %p100, %p101
    %p104 = scmp.ne.s32.totalorder %s89, %s103
    %p105 = scmp.eq.s32.totalorder %s16, 0
    %p106 = por %p104, %p105
    %s107 = ssub.s32 %s10, %s17
    %p108 = scmp.eq.s32.totalorder %s107, 0
    %s110 = sadd.s32 %s109, 1
    %s111 = scalar_select %p108, %s109, %s110
    %p114 = pneg %p108
    %p115 = scmp.eq.s32.totalorder %s10, 1
    %p116 = por %p114, %p115
    %p117 = scmp.ne.s32.totalorder %s109, %s112
    %p118 = scmp.eq.s32.totalorder %s10, 0
    %p119 = por %p117, %p118
    %p120 = scmp.ne.s32.totalorder %s109, %s112
    %p121 = scmp.eq.s32.totalorder %s15, 1
    %p122 = por %p120, %p121
    %p123 = scmp.ne.s32.totalorder %s112, %s113
    %p124 = scmp.eq.s32.totalorder %s15, 0
    %p125 = por %p123, %p124
    %p126 = scmp.ne.s32.totalorder %s112, %s113
    %p127 = scmp.eq.s32.totalorder %s16, 1
    %p128 = por %p126, %p127
    %p130 = scmp.ne.s32.totalorder %s113, %s129
    %p131 = scmp.eq.s32.totalorder %s16, 0
    %p132 = por %p130, %p131
    %p133 = scmp.le.s32.totalorder 1, %s10
    %p134 = scmp.lt.s32.totalorder %s10, 3
    %p135 = pnand %p133, %p134
    %p136 = pneg %p135
    // Predicated region
    $region9: #{basic_block_forward.2} parent=5 // pred_check
      _
    $region10: #{basic_block_forward.2} parent=5 // pred_check_branch
      %138 = sbr.rel (%p135) target = $region12
    $region11: #{basic_block_forward.2} parent=5 // pred_region
      %s139 = ssub.s32 %s10, 1
      // Predicated region
      $region13: #{basic_block_forward.2} parent=11 // pred_check
        %p140 = pneg %p57
      $region14: #{basic_block_forward.2} parent=11 // pred_check_branch
        %142 = sbr.rel (%p140) target = $region16
      $region15: #{basic_block_forward.2} parent=11 // pred_region
        _
      $region16: #{basic_block_forward.2} parent=11 // pred_fallthru
        _
      // Predicated region
      $region17: #{basic_block_forward.2} parent=11 // pred_check
        %p143 = pneg %p78
      $region18: #{basic_block_forward.2} parent=11 // pred_check_branch
        %145 = sbr.rel (%p143) target = $region20
      $region19: #{basic_block_forward.2} parent=11 // pred_region
        _
      $region20: #{basic_block_forward.2} parent=11 // pred_fallthru
        _
      // Predicated region
      $region21: #{basic_block_forward.2} parent=11 // pred_check
        %p146 = pneg %p99
      $region22: #{basic_block_forward.2} parent=11 // pred_check_branch
        %148 = sbr.rel (%p146) target = $region24
      $region23: #{basic_block_forward.2} parent=11 // pred_region
        _
      $region24: #{basic_block_forward.2} parent=11 // pred_fallthru
        _
    $region12: #{basic_block_forward.2} parent=5 // pred_fallthru
      _
    %p149 = scmp.lt.s32.totalorder %s10, 2
    // Predicated region
    $region25: #{basic_block_forward.2} parent=5 // pred_check
      %p150 = pneg %p149
    $region26: #{basic_block_forward.2} parent=5 // pred_check_branch
      %152 = sbr.rel (%p150) target = $region28
    $region27: #{basic_block_forward.2} parent=5 // pred_region
      // Predicated region
      $region29: #{basic_block_forward.2} parent=27 // pred_check
        %p153 = pneg %p30
      $region30: #{basic_block_forward.2} parent=27 // pred_check_branch
        %155 = sbr.rel (%p153) target = $region32
      $region31: #{basic_block_forward.2} parent=27 // pred_region
        %p156 = scmp.lt.s32.totalorder %s10, 1
        %s157 = scalar_select %p156, %s10, 1
        %s158 = smul.addr %s157, 32
        %s159 = smul.addr %s158, 8
        %s160 = scalar_lea.vmem %s0, %s159
      $region32: #{basic_block_forward.2} parent=27 // pred_fallthru
        _
    $region28: #{basic_block_forward.2} parent=5 // pred_fallthru
      _
    %p161 = scmp.le.s32.totalorder 1, %s10
    %p162 = scmp.lt.s32.totalorder %s10, 3
    %p163 = pnand %p161, %p162
    %p164 = pneg %p163
    // Predicated region
    $region33: #{basic_block_forward.2} parent=5 // pred_check
      _
    $region34: #{basic_block_forward.2} parent=5 // pred_check_branch
      %166 = sbr.rel (%p163) target = $region36
    $region35: #{basic_block_forward.2} parent=5 // pred_region
      %s167 = ssub.s32 %s10, 1
      %p168 = scmp.lt.s32.totalorder %s15, 1
      %s169 = scalar_select %p168, %s15, 1
      %s170 = smul.addr %s169, 32
      %s171 = smul.addr %s170, 8
      %s172 = scalar_lea.vmem %s0, %s171
      %p173 = pneg %p36
      %p174 = pneg %p33
      %p175 = pneg %p57
      %p176 = pneg %p54
      %p177 = pneg %p78
      %p178 = pneg %p75
      %p179 = pneg %p99
      %p180 = pneg %p96
      %p181 = pneg %p125
      %p182 = pneg %p122
      %p183 = scmp.lt.s32.totalorder %s15, 1
      %s184 = scalar_select %p183, %s15, 1
      %s185 = smul.addr %s184, 8
      %s186 = smul.addr %s185, 8
      %s187 = scalar_lea.vmem %s4, %s186
      %p188 = scmp.lt.s32.totalorder %s15, 1
      %s189 = scalar_select %p188, %s15, 1
      %s190 = smul.addr %s189, 32
      %s191 = smul.addr %s190, 8
      %s192 = scalar_lea.vmem %s0, %s191
      %p193 = scmp.lt.s32.totalorder %s15, 1
      %s194 = scalar_select %p193, %s15, 1
      %s195 = smul.addr %s194, 8
      %s196 = smul.addr %s195, 8
      %s197 = scalar_lea.vmem %s4, %s196
      %198 = vst [vmem:[#allocation2] sm:$0xff] 0.0
      %199 = vst [vmem:[#allocation2 + $0x8] sm:$0xff] 0.0
      %200 = vst [vmem:[#allocation2 + $0x10] sm:$0x3] 0.0
      %201 = vst [vmem:[#allocation2 + $0x18] sm:$0xff] 0.0
      %202 = vst [vmem:[#allocation2 + $0x20] sm:$0xff] 0.0
      %203 = vst [vmem:[#allocation2 + $0x28] sm:$0x3] 0.0
      %204 = vst [vmem:[#allocation2 + $0x30] sm:$0xff] 0.0
      %205 = vst [vmem:[#allocation2 + $0x38] sm:$0xff] 0.0
      %206 = vst [vmem:[#allocation2 + $0x40] sm:$0x3] 0.0
      %207 = vst [vmem:[#allocation2 + $0x48] sm:$0xff] 0.0
      %208 = vst [vmem:[#allocation2 + $0x50] sm:$0xff] 0.0
      %209 = vst [vmem:[#allocation2 + $0x58] sm:$0x3] 0.0
      %210 = vst [vmem:[#allocation2 + $0x60] sm:$0xff] 0.0
      %211 = vst [vmem:[#allocation2 + $0x68] sm:$0xff] 0.0
      %212 = vst [vmem:[#allocation2 + $0x70] sm:$0x3] 0.0
      %213 = vst [vmem:[#allocation2 + $0x78] sm:$0xff] 0.0
      %214 = vst [vmem:[#allocation2 + $0x80] sm:$0xff] 0.0
      %215 = vst [vmem:[#allocation2 + $0x88] sm:$0x3] 0.0
      %216 = vst [vmem:[#allocation2 + $0x90] sm:$0xff] 0.0
      %217 = vst [vmem:[#allocation2 + $0x98] sm:$0xff] 0.0
      %218 = vst [vmem:[#allocation2 + $0xa0] sm:$0x3] 0.0
      %219 = vst [vmem:[#allocation2 + $0xa8] sm:$0xff] 0.0
      %220 = vst [vmem:[#allocation2 + $0xb0] sm:$0xff] 0.0
      %221 = vst [vmem:[#allocation2 + $0xb8] sm:$0x3] 0.0
      %222 = vst [vmem:[#allocation2 + $0xc0] sm:$0xff] 0.0
      %223 = vst [vmem:[#allocation2 + $0xc8] sm:$0xff] 0.0
      %224 = vst [vmem:[#allocation2 + $0xd0] sm:$0x3] 0.0
      %225 = vst [vmem:[#allocation2 + $0xd8] sm:$0xff] 0.0
      %226 = vst [vmem:[#allocation2 + $0xe0] sm:$0xff] 0.0
      %227 = vst [vmem:[#allocation2 + $0xe8] sm:$0x3] 0.0
      %228 = vst [vmem:[#allocation2 + $0xf0] sm:$0xff] 0.0
      %229 = vst [vmem:[#allocation2 + $0xf8] sm:$0xff] 0.0
      %230 = vst [vmem:[#allocation2 + $0x100] sm:$0x3] 0.0
      %231 = vst [vmem:[#allocation2 + $0x108] sm:$0xff] 0.0
      %232 = vst [vmem:[#allocation2 + $0x110] sm:$0xff] 0.0
      %233 = vst [vmem:[#allocation2 + $0x118] sm:$0x3] 0.0
      %234 = vst [vmem:[#allocation2 + $0x120] sm:$0xff] 0.0
      %235 = vst [vmem:[#allocation2 + $0x128] sm:$0xff] 0.0
      %236 = vst [vmem:[#allocation2 + $0x130] sm:$0x3] 0.0
      %237 = vst [vmem:[#allocation2 + $0x138] sm:$0xff] 0.0
      %238 = vst [vmem:[#allocation2 + $0x140] sm:$0xff] 0.0
      %239 = vst [vmem:[#allocation2 + $0x148] sm:$0x3] 0.0
      %240 = vst [vmem:[#allocation2 + $0x150] sm:$0xff] 0.0
      %241 = vst [vmem:[#allocation2 + $0x158] sm:$0xff] 0.0
      %242 = vst [vmem:[#allocation2 + $0x160] sm:$0x3] 0.0
      %243 = vst [vmem:[#allocation2 + $0x168] sm:$0xff] 0.0
      %244 = vst [vmem:[#allocation2 + $0x170] sm:$0xff] 0.0
      %245 = vst [vmem:[#allocation2 + $0x178] sm:$0x3] 0.0
      %246 = vst [vmem:[#allocation2 + $0x180] sm:$0xff] 0.0
      %247 = vst [vmem:[#allocation2 + $0x188] sm:$0xff] 0.0
      %248 = vst [vmem:[#allocation2 + $0x190] sm:$0x3] 0.0
      %249 = vst [vmem:[#allocation2 + $0x198] sm:$0xff] 0.0
      %250 = vst [vmem:[#allocation2 + $0x1a0] sm:$0xff] 0.0
      %251 = vst [vmem:[#allocation2 + $0x1a8] sm:$0x3] 0.0
      %v252 = vld [vmem:[%s192] sm:$0xff]
      %v253 = vld [vmem:[%s192 + $0x8] sm:$0xff]
      %v254 = vld [vmem:[%s192 + $0x10] sm:$0xff]
      %v255 = vld [vmem:[%s192 + $0x18] sm:$0xff]
      %v256 = vld [vmem:[%s192 + $0x20] sm:$0xff]
      %v257 = vld [vmem:[%s192 + $0x28] sm:$0xff]
      %v258 = vld [vmem:[%s192 + $0x30] sm:$0xff]
      %v259 = vld [vmem:[%s192 + $0x38] sm:$0xff]
      %v260 = vld [vmem:[%s192 + $0x40] sm:$0xff]
      %v261 = vld [vmem:[%s192 + $0x48] sm:$0xff]
      %v262 = vld [vmem:[%s192 + $0x50] sm:$0xff]
      %v263 = vld [vmem:[%s192 + $0x58] sm:$0xff]
      %v264 = vld [vmem:[%s192 + $0x60] sm:$0xff]
      %v265 = vld [vmem:[%s192 + $0x68] sm:$0xff]
      %v266 = vld [vmem:[%s192 + $0x70] sm:$0xff]
      %v267 = vld [vmem:[%s192 + $0x78] sm:$0xff]
      %v268 = vld [vmem:[%s192 + $0x80] sm:$0xff]
      %v269 = vld [vmem:[%s192 + $0x88] sm:$0xff]
      %v270 = vld [vmem:[%s192 + $0x90] sm:$0xff]
      %v271 = vld [vmem:[%s192 + $0x98] sm:$0xff]
      %v272 = vld [vmem:[%s192 + $0xa0] sm:$0xff]
      %v273 = vld [vmem:[%s192 + $0xa8] sm:$0xff]
      %v274 = vld [vmem:[%s192 + $0xb0] sm:$0xff]
      %v275 = vld [vmem:[%s192 + $0xb8] sm:$0xff]
      %v276 = vld [vmem:[%s192 + $0xc0] sm:$0xff]
      %v277 = vld [vmem:[%s192 + $0xc8] sm:$0xff]
      %v278 = vld [vmem:[%s192 + $0xd0] sm:$0xff]
      %v279 = vld [vmem:[%s192 + $0xd8] sm:$0xff]
      %v280 = vld [vmem:[%s192 + $0xe0] sm:$0xff]
      %v281 = vld [vmem:[%s192 + $0xe8] sm:$0xff]
      %v282 = vld [vmem:[%s192 + $0xf0] sm:$0xff]
      %v283 = vld [vmem:[%s192 + $0xf8] sm:$0xff]
      %v284 = vld [vmem:[%s1] sm:$0x1]
      %v286 = vlaneseq
      %v287 = vshrl.u32 %v286, 7
      %v288 = vsub.s32 0, %v287
      %v289 = vrot.slane %v284, %v288
      %v291 = vmul.f32 %v252, %v289
      %v292 = vmul.f32 %v253, %v289
      %v293 = vmul.f32 %v254, %v289
      %v294 = vmul.f32 %v255, %v289
      %v295 = vmul.f32 %v256, %v289
      %v296 = vmul.f32 %v257, %v289
      %v297 = vmul.f32 %v258, %v289
      %v298 = vmul.f32 %v259, %v289
      %v299 = vmul.f32 %v260, %v289
      %v300 = vmul.f32 %v261, %v289
      %v301 = vmul.f32 %v262, %v289
      %v302 = vmul.f32 %v263, %v289
      %v303 = vmul.f32 %v264, %v289
      %v304 = vmul.f32 %v265, %v289
      %v305 = vmul.f32 %v266, %v289
      %v306 = vmul.f32 %v267, %v289
      %v307 = vmul.f32 %v268, %v289
      %v308 = vmul.f32 %v269, %v289
      %v309 = vmul.f32 %v270, %v289
      %v310 = vmul.f32 %v271, %v289
      %v311 = vmul.f32 %v272, %v289
      %v312 = vmul.f32 %v273, %v289
      %v313 = vmul.f32 %v274, %v289
      %v314 = vmul.f32 %v275, %v289
      %v315 = vmul.f32 %v276, %v289
      %v316 = vmul.f32 %v277, %v289
      %v317 = vmul.f32 %v278, %v289
      %v318 = vmul.f32 %v279, %v289
      %v319 = vmul.f32 %v280, %v289
      %v320 = vmul.f32 %v281, %v289
      %v321 = vmul.f32 %v282, %v289
      %v322 = vmul.f32 %v283, %v289
      %v323 = vld [vmem:[%s2] sm:$0x1]
      %v325 = vlaneseq
      %v326 = vshrl.u32 %v325, 7
      %v327 = vsub.s32 0, %v326
      %v328 = vrot.slane %v323, %v327
      %v330 = vadd.f32 %v291, %v328
      %v331 = vadd.f32 %v292, %v328
      %v332 = vadd.f32 %v293, %v328
      %v333 = vadd.f32 %v294, %v328
      %v334 = vadd.f32 %v295, %v328
      %v335 = vadd.f32 %v296, %v328
      %v336 = vadd.f32 %v297, %v328
      %v337 = vadd.f32 %v298, %v328
      %v338 = vadd.f32 %v299, %v328
      %v339 = vadd.f32 %v300, %v328
      %v340 = vadd.f32 %v301, %v328
      %v341 = vadd.f32 %v302, %v328
      %v342 = vadd.f32 %v303, %v328
      %v343 = vadd.f32 %v304, %v328
      %v344 = vadd.f32 %v305, %v328
      %v345 = vadd.f32 %v306, %v328
      %v346 = vadd.f32 %v307, %v328
      %v347 = vadd.f32 %v308, %v328
      %v348 = vadd.f32 %v309, %v328
      %v349 = vadd.f32 %v310, %v328
      %v350 = vadd.f32 %v311, %v328
      %v351 = vadd.f32 %v312, %v328
      %v352 = vadd.f32 %v313, %v328
      %v353 = vadd.f32 %v314, %v328
      %v354 = vadd.f32 %v315, %v328
      %v355 = vadd.f32 %v316, %v328
      %v356 = vadd.f32 %v317, %v328
      %v357 = vadd.f32 %v318, %v328
      %v358 = vadd.f32 %v319, %v328
      %v359 = vadd.f32 %v320, %v328
      %v360 = vadd.f32 %v321, %v328
      %v361 = vadd.f32 %v322, %v328
      %v362 = vmax.f32 %v330, 0.0
      %v363 = vmax.f32 %v331, 0.0
      %v364 = vmax.f32 %v332, 0.0
      %v365 = vmax.f32 %v333, 0.0
      %v366 = vmax.f32 %v334, 0.0
      %v367 = vmax.f32 %v335, 0.0
      %v368 = vmax.f32 %v336, 0.0
      %v369 = vmax.f32 %v337, 0.0
      %v370 = vmax.f32 %v338, 0.0
      %v371 = vmax.f32 %v339, 0.0
      %v372 = vmax.f32 %v340, 0.0
      %v373 = vmax.f32 %v341, 0.0
      %v374 = vmax.f32 %v342, 0.0
      %v375 = vmax.f32 %v343, 0.0
      %v376 = vmax.f32 %v344, 0.0
      %v377 = vmax.f32 %v345, 0.0
      %v378 = vmax.f32 %v346, 0.0
      %v379 = vmax.f32 %v347, 0.0
      %v380 = vmax.f32 %v348, 0.0
      %v381 = vmax.f32 %v349, 0.0
      %v382 = vmax.f32 %v350, 0.0
      %v383 = vmax.f32 %v351, 0.0
      %v384 = vmax.f32 %v352, 0.0
      %v385 = vmax.f32 %v353, 0.0
      %v386 = vmax.f32 %v354, 0.0
      %v387 = vmax.f32 %v355, 0.0
      %v388 = vmax.f32 %v356, 0.0
      %v389 = vmax.f32 %v357, 0.0
      %v390 = vmax.f32 %v358, 0.0
      %v391 = vmax.f32 %v359, 0.0
      %v392 = vmax.f32 %v360, 0.0
      %v393 = vmax.f32 %v361, 0.0
      %s394 = scalar_lea.vmem [#allocation2], 24
      %395 = vst [vmem:[%s394 + $0x1] sm:$0xff] %v362
      %396 = vst [vmem:[%s394 + $0x9] sm:$0xff] %v363
      %397 = vst [vmem:[%s394 + $0x19] sm:$0xff] %v364
      %398 = vst [vmem:[%s394 + $0x21] sm:$0xff] %v365
      %399 = vst [vmem:[%s394 + $0x31] sm:$0xff] %v366
      %400 = vst [vmem:[%s394 + $0x39] sm:$0xff] %v367
      %401 = vst [vmem:[%s394 + $0x49] sm:$0xff] %v368
      %402 = vst [vmem:[%s394 + $0x51] sm:$0xff] %v369
      %403 = vst [vmem:[%s394 + $0x61] sm:$0xff] %v370
      %404 = vst [vmem:[%s394 + $0x69] sm:$0xff] %v371
      %405 = vst [vmem:[%s394 + $0x79] sm:$0xff] %v372
      %406 = vst [vmem:[%s394 + $0x81] sm:$0xff] %v373
      %407 = vst [vmem:[%s394 + $0x91] sm:$0xff] %v374
      %408 = vst [vmem:[%s394 + $0x99] sm:$0xff] %v375
      %409 = vst [vmem:[%s394 + $0xa9] sm:$0xff] %v376
      %410 = vst [vmem:[%s394 + $0xb1] sm:$0xff] %v377
      %411 = vst [vmem:[%s394 + $0xc1] sm:$0xff] %v378
      %412 = vst [vmem:[%s394 + $0xc9] sm:$0xff] %v379
      %413 = vst [vmem:[%s394 + $0xd9] sm:$0xff] %v380
      %414 = vst [vmem:[%s394 + $0xe1] sm:$0xff] %v381
      %415 = vst [vmem:[%s394 + $0xf1] sm:$0xff] %v382
      %416 = vst [vmem:[%s394 + $0xf9] sm:$0xff] %v383
      %417 = vst [vmem:[%s394 + $0x109] sm:$0xff] %v384
      %418 = vst [vmem:[%s394 + $0x111] sm:$0xff] %v385
      %419 = vst [vmem:[%s394 + $0x121] sm:$0xff] %v386
      %420 = vst [vmem:[%s394 + $0x129] sm:$0xff] %v387
      %421 = vst [vmem:[%s394 + $0x139] sm:$0xff] %v388
      %422 = vst [vmem:[%s394 + $0x141] sm:$0xff] %v389
      %423 = vst [vmem:[%s394 + $0x151] sm:$0xff] %v390
      %424 = vst [vmem:[%s394 + $0x159] sm:$0xff] %v391
      %425 = vst [vmem:[%s394 + $0x169] sm:$0xff] %v392
      %426 = vst [vmem:[%s394 + $0x171] sm:$0xff] %v393
      %v427 = vld [vmem:[#allocation2] ss:$2 sm:$0xff]
      %s428 = scalar_lea.vmem [#allocation2], 48
      %v429 = vld [vmem:[%s428] ss:$2 sm:$0xff]
      %s430 = scalar_lea.vmem [#allocation2], 96
      %v431 = vld [vmem:[%s430] ss:$2 sm:$0xff]
      %s432 = scalar_lea.vmem [#allocation2], 144
      %v433 = vld [vmem:[%s432] ss:$2 sm:$0xff]
      %s434 = scalar_lea.vmem [#allocation2], 192
      %v435 = vld [vmem:[%s434] ss:$2 sm:$0xff]
      %s436 = scalar_lea.vmem [#allocation2], 240
      %v437 = vld [vmem:[%s436] ss:$2 sm:$0xff]
      %s438 = scalar_lea.vmem [#allocation2], 288
      %v439 = vld [vmem:[%s438] ss:$2 sm:$0xff]
      %s440 = scalar_lea.vmem [#allocation2], 336
      %v441 = vld [vmem:[%s440] ss:$2 sm:$0xff]
      %v442 = vld [vmem:[%s3] sm:$0xff]
      %v443 = vld [vmem:[%s3 + $0x8] sm:$0xff]
      %v444 = vld [vmem:[%s3 + $0x10] sm:$0xff]
      %v445 = vld [vmem:[%s3 + $0x18] sm:$0xff]
      %v446 = vld [vmem:[%s3 + $0x20] sm:$0xff]
      %v447 = vld [vmem:[%s3 + $0x28] sm:$0xff]
      %v448 = vld [vmem:[%s3 + $0x30] sm:$0xff]
      %v449 = vld [vmem:[%s3 + $0x38] sm:$0xff]
      %v450 = vld [vmem:[%s3 + $0x40] sm:$0xff]
      %v451 = vld [vmem:[%s3 + $0x48] sm:$0xff]
      %v452 = vld [vmem:[%s3 + $0x50] sm:$0xff]
      %v453 = vld [vmem:[%s3 + $0x58] sm:$0xff]
      %v454 = vld [vmem:[%s3 + $0x60] sm:$0xff]
      %v455 = vld [vmem:[%s3 + $0x68] sm:$0xff]
      %v456 = vld [vmem:[%s3 + $0x70] sm:$0xff]
      %v457 = vld [vmem:[%s3 + $0x78] sm:$0xff]
      %s458 = scalar_lea.vmem [#allocation2], 1
      %v459 = vld [vmem:[%s458] ss:$2 sm:$0xff]
      %s460 = scalar_lea.vmem [#allocation2], 49
      %v461 = vld [vmem:[%s460] ss:$2 sm:$0xff]
      %s462 = scalar_lea.vmem [#allocation2], 97
      %v463 = vld [vmem:[%s462] ss:$2 sm:$0xff]
      %s464 = scalar_lea.vmem [#allocation2], 145
      %v465 = vld [vmem:[%s464] ss:$2 sm:$0xff]
      %s466 = scalar_lea.vmem [#allocation2], 193
      %v467 = vld [vmem:[%s466] ss:$2 sm:$0xff]
      %s468 = scalar_lea.vmem [#allocation2], 241
      %v469 = vld [vmem:[%s468] ss:$2 sm:$0xff]
      %s470 = scalar_lea.vmem [#allocation2], 289
      %v471 = vld [vmem:[%s470] ss:$2 sm:$0xff]
      %s472 = scalar_lea.vmem [#allocation2], 337
      %v473 = vld [vmem:[%s472] ss:$2 sm:$0xff]
      %s474 = scalar_lea.vmem %s3, 128
      %v475 = vld [vmem:[%s474] sm:$0xff]
      %v476 = vld [vmem:[%s474 + $0x8] sm:$0xff]
      %v477 = vld [vmem:[%s474 + $0x10] sm:$0xff]
      %v478 = vld [vmem:[%s474 + $0x18] sm:$0xff]
      %v479 = vld [vmem:[%s474 + $0x20] sm:$0xff]
      %v480 = vld [vmem:[%s474 + $0x28] sm:$0xff]
      %v481 = vld [vmem:[%s474 + $0x30] sm:$0xff]
      %v482 = vld [vmem:[%s474 + $0x38] sm:$0xff]
      %v483 = vld [vmem:[%s474 + $0x40] sm:$0xff]
      %v484 = vld [vmem:[%s474 + $0x48] sm:$0xff]
      %v485 = vld [vmem:[%s474 + $0x50] sm:$0xff]
      %v486 = vld [vmem:[%s474 + $0x58] sm:$0xff]
      %v487 = vld [vmem:[%s474 + $0x60] sm:$0xff]
      %v488 = vld [vmem:[%s474 + $0x68] sm:$0xff]
      %v489 = vld [vmem:[%s474 + $0x70] sm:$0xff]
      %v490 = vld [vmem:[%s474 + $0x78] sm:$0xff]
      %491 = vmatprep.subr.mxu0 0.0
      %492 = vmatpush1.msra.mxu0 %v475
      %493 = vmatprep.subr.mxu0 0.0
      %494 = vmatpush1.msra.mxu0 %v476
      %495 = vmatprep.subr.mxu0 0.0
      %496 = vmatpush1.msra.mxu0 %v477
      %497 = vmatprep.subr.mxu0 0.0
      %498 = vmatpush1.msra.mxu0 %v478
      %499 = vmatprep.subr.mxu0 0.0
      %500 = vmatpush1.msra.mxu0 %v479
      %501 = vmatprep.subr.mxu0 0.0
      %502 = vmatpush1.msra.mxu0 %v480
      %503 = vmatprep.subr.mxu0 0.0
      %504 = vmatpush1.msra.mxu0 %v481
      %505 = vmatprep.subr.mxu0 0.0
      %506 = vmatpush1.msra.mxu0 %v482
      %507 = vmatprep.subr.mxu0 0.0
      %508 = vmatpush1.msra.mxu0 %v483
      %509 = vmatprep.subr.mxu0 0.0
      %510 = vmatpush1.msra.mxu0 %v484
      %511 = vmatprep.subr.mxu0 0.0
      %512 = vmatpush1.msra.mxu0 %v485
      %513 = vmatprep.subr.mxu0 0.0
      %514 = vmatpush1.msra.mxu0 %v486
      %515 = vmatprep.subr.mxu0 0.0
      %516 = vmatpush1.msra.mxu0 %v487
      %517 = vmatprep.subr.mxu0 0.0
      %518 = vmatpush1.msra.mxu0 %v488
      %519 = vmatprep.subr.mxu0 0.0
      %520 = vmatpush1.msra.mxu0 %v489
      %521 = vmatprep.subr.mxu0 0.0
      %522 = vmatpush1.msra.mxu0 %v490
      %523 = vmatprep.subr.mxu0 0.0
      %524 = vmatpush1.msra.mxu0 0.0
      %525 = vmatprep.subr.mxu0 0.0
      %526 = vmatpush1.msra.mxu0 0.0
      %527 = vmatprep.subr.mxu0 0.0
      %528 = vmatpush1.msra.mxu0 0.0
      %529 = vmatprep.subr.mxu0 0.0
      %530 = vmatpush1.msra.mxu0 0.0
      %531 = vmatprep.subr.mxu0 0.0
      %532 = vmatpush1.msra.mxu0 0.0
      %533 = vmatprep.subr.mxu0 0.0
      %534 = vmatpush1.msra.mxu0 0.0
      %535 = vmatprep.subr.mxu0 0.0
      %536 = vmatpush1.msra.mxu0 0.0
      %537 = vmatprep.subr.mxu0 0.0
      %538 = vmatpush1.msra.mxu0 0.0
      %539 = vmatprep.subr.mxu0 0.0
      %540 = vmatpush1.msra.mxu0 0.0
      %541 = vmatprep.subr.mxu0 0.0
      %542 = vmatpush1.msra.mxu0 0.0
      %543 = vmatprep.subr.mxu0 0.0
      %544 = vmatpush1.msra.mxu0 0.0
      %545 = vmatprep.subr.mxu0 0.0
      %546 = vmatpush1.msra.mxu0 0.0
      %547 = vmatprep.subr.mxu0 0.0
      %548 = vmatpush1.msra.mxu0 0.0
      %549 = vmatprep.subr.mxu0 0.0
      %550 = vmatpush1.msra.mxu0 0.0
      %551 = vmatprep.subr.mxu0 0.0
      %552 = vmatpush1.msra.mxu0 0.0
      %553 = vmatprep.subr.mxu0 0.0
      %554 = vmatpush1.msra.mxu0 0.0
      %555 = vmatprep.mubr.f32.mxu0 0.0
      %556 = vmatmul.mubr.f32.gmra.mrb[0].mxu0 %v459
      %v557 = vpop.f32.mrb[0].mxu0
      %v558 = vadd.f32 0.0, %v557
      %v559 = vpop.f32.mrb[0].mxu0
      %560 = vmatprep.mubr.f32.mxu0 0.0
      %561 = vmatmul.mubr.f32.gmra.mrb[0].mxu0 %v461
      %v562 = vpop.f32.mrb[0].mxu0
      %v563 = vadd.f32 0.0, %v562
      %v564 = vpop.f32.mrb[0].mxu0
      %565 = vmatprep.mubr.f32.mxu0 0.0
      %566 = vmatmul.mubr.f32.gmra.mrb[0].mxu0 %v463
      %v567 = vpop.f32.mrb[0].mxu0
      %v568 = vadd.f32 0.0, %v567
      %v569 = vpop.f32.mrb[0].mxu0
      %570 = vmatprep.mubr.f32.mxu0 0.0
      %571 = vmatmul.mubr.f32.gmra.mrb[0].mxu0 %v465
      %v572 = vpop.f32.mrb[0].mxu0
      %v573 = vadd.f32 0.0, %v572
      %v574 = vpop.f32.mrb[0].mxu0
      %575 = vmatprep.mubr.f32.mxu0 0.0
      %576 = vmatmul.mubr.f32.gmra.mrb[0].mxu0 %v467
      %v577 = vpop.f32.mrb[0].mxu0
      %v578 = vadd.f32 0.0, %v577
      %v579 = vpop.f32.mrb[0].mxu0
      %580 = vmatprep.mubr.f32.mxu0 0.0
      %581 = vmatmul.mubr.f32.gmra.mrb[0].mxu0 %v469
      %v582 = vpop.f32.mrb[0].mxu0
      %v583 = vadd.f32 0.0, %v582
      %v584 = vpop.f32.mrb[0].mxu0
      %585 = vmatprep.mubr.f32.mxu0 0.0
      %586 = vmatmul.mubr.f32.gmra.mrb[0].mxu0 %v471
      %v587 = vpop.f32.mrb[0].mxu0
      %v588 = vadd.f32 0.0, %v587
      %v589 = vpop.f32.mrb[0].mxu0
      %590 = vmatprep.mubr.f32.mxu0 0.0
      %591 = vmatmul.mubr.f32.gmra.mrb[0].mxu0 %v473
      %v592 = vpop.f32.mrb[0].mxu0
      %v593 = vadd.f32 0.0, %v592
      %v594 = vpop.f32.mrb[0].mxu0
      %595 = vdwg.mxu0
      %596 = vmatprep.subr.mxu0 0.0
      %597 = vmatpush1.msra.mxu0 %v442
      %598 = vmatprep.subr.mxu0 0.0
      %599 = vmatpush1.msra.mxu0 %v443
      %600 = vmatprep.subr.mxu0 0.0
      %601 = vmatpush1.msra.mxu0 %v444
      %602 = vmatprep.subr.mxu0 0.0
      %603 = vmatpush1.msra.mxu0 %v445
      %604 = vmatprep.subr.mxu0 0.0
      %605 = vmatpush1.msra.mxu0 %v446
      %606 = vmatprep.subr.mxu0 0.0
      %607 = vmatpush1.msra.mxu0 %v447
      %608 = vmatprep.subr.mxu0 0.0
      %609 = vmatpush1.msra.mxu0 %v448
      %610 = vmatprep.subr.mxu0 0.0
      %611 = vmatpush1.msra.mxu0 %v449
      %612 = vmatprep.subr.mxu0 0.0
      %613 = vmatpush1.msra.mxu0 %v450
      %614 = vmatprep.subr.mxu0 0.0
      %615 = vmatpush1.msra.mxu0 %v451
      %616 = vmatprep.subr.mxu0 0.0
      %617 = vmatpush1.msra.mxu0 %v452
      %618 = vmatprep.subr.mxu0 0.0
      %619 = vmatpush1.msra.mxu0 %v453
      %620 = vmatprep.subr.mxu0 0.0
      %621 = vmatpush1.msra.mxu0 %v454
      %622 = vmatprep.subr.mxu0 0.0
      %623 = vmatpush1.msra.mxu0 %v455
      %624 = vmatprep.subr.mxu0 0.0
      %625 = vmatpush1.msra.mxu0 %v456
      %626 = vmatprep.subr.mxu0 0.0
      %627 = vmatpush1.msra.mxu0 %v457
      %628 = vmatprep.subr.mxu0 0.0
      %629 = vmatpush1.msra.mxu0 0.0
      %630 = vmatprep.subr.mxu0 0.0
      %631 = vmatpush1.msra.mxu0 0.0
      %632 = vmatprep.subr.mxu0 0.0
      %633 = vmatpush1.msra.mxu0 0.0
      %634 = vmatprep.subr.mxu0 0.0
      %635 = vmatpush1.msra.mxu0 0.0
      %636 = vmatprep.subr.mxu0 0.0
      %637 = vmatpush1.msra.mxu0 0.0
      %638 = vmatprep.subr.mxu0 0.0
      %639 = vmatpush1.msra.mxu0 0.0
      %640 = vmatprep.subr.mxu0 0.0
      %641 = vmatpush1.msra.mxu0 0.0
      %642 = vmatprep.subr.mxu0 0.0
      %643 = vmatpush1.msra.mxu0 0.0
      %644 = vmatprep.subr.mxu0 0.0
      %645 = vmatpush1.msra.mxu0 0.0
      %646 = vmatprep.subr.mxu0 0.0
      %647 = vmatpush1.msra.mxu0 0.0
      %648 = vmatprep.subr.mxu0 0.0
      %649 = vmatpush1.msra.mxu0 0.0
      %650 = vmatprep.subr.mxu0 0.0
      %651 = vmatpush1.msra.mxu0 0.0
      %652 = vmatprep.subr.mxu0 0.0
      %653 = vmatpush1.msra.mxu0 0.0
      %654 = vmatprep.subr.mxu0 0.0
      %655 = vmatpush1.msra.mxu0 0.0
      %656 = vmatprep.subr.mxu0 0.0
      %657 = vmatpush1.msra.mxu0 0.0
      %658 = vmatprep.subr.mxu0 0.0
      %659 = vmatpush1.msra.mxu0 0.0
      %660 = vmatprep.mubr.f32.mxu0 0.0
      %661 = vmatmul.mubr.f32.gmra.mrb[0].mxu0 %v427
      %v662 = vpop.f32.mrb[0].mxu0
      %v663 = vadd.f32 %v558, %v662
      %v664 = vpop.f32.mrb[0].mxu0
      %665 = vmatprep.mubr.f32.mxu0 0.0
      %666 = vmatmul.mubr.f32.gmra.mrb[0].mxu0 %v429
      %v667 = vpop.f32.mrb[0].mxu0
      %v668 = vadd.f32 %v563, %v667
      %v669 = vpop.f32.mrb[0].mxu0
      %670 = vmatprep.mubr.f32.mxu0 0.0
      %671 = vmatmul.mubr.f32.gmra.mrb[0].mxu0 %v431
      %v672 = vpop.f32.mrb[0].mxu0
      %v673 = vadd.f32 %v568, %v672
      %v674 = vpop.f32.mrb[0].mxu0
      %675 = vmatprep.mubr.f32.mxu0 0.0
      %676 = vmatmul.mubr.f32.gmra.mrb[0].mxu0 %v433
      %v677 = vpop.f32.mrb[0].mxu0
      %v678 = vadd.f32 %v573, %v677
      %v679 = vpop.f32.mrb[0].mxu0
      %680 = vmatprep.mubr.f32.mxu0 0.0
      %681 = vmatmul.mubr.f32.gmra.mrb[0].mxu0 %v435
      %v682 = vpop.f32.mrb[0].mxu0
      %v683 = vadd.f32 %v578, %v682
      %v684 = vpop.f32.mrb[0].mxu0
      %685 = vmatprep.mubr.f32.mxu0 0.0
      %686 = vmatmul.mubr.f32.gmra.mrb[0].mxu0 %v437
      %v687 = vpop.f32.mrb[0].mxu0
      %v688 = vadd.f32 %v583, %v687
      %v689 = vpop.f32.mrb[0].mxu0
      %690 = vmatprep.mubr.f32.mxu0 0.0
      %691 = vmatmul.mubr.f32.gmra.mrb[0].mxu0 %v439
      %v692 = vpop.f32.mrb[0].mxu0
      %v693 = vadd.f32 %v588, %v692
      %v694 = vpop.f32.mrb[0].mxu0
      %695 = vmatprep.mubr.f32.mxu0 0.0
      %696 = vmatmul.mubr.f32.gmra.mrb[0].mxu0 %v441
      %v697 = vpop.f32.mrb[0].mxu0
      %v698 = vadd.f32 %v593, %v697
      %v699 = vpop.f32.mrb[0].mxu0
      %700 = vdwg.mxu0
      %s701 = scalar_lea.vmem [#allocation2], 2
      %v702 = vld [vmem:[%s701] ss:$2 sm:$0xff]
      %s703 = scalar_lea.vmem [#allocation2], 50
      %v704 = vld [vmem:[%s703] ss:$2 sm:$0xff]
      %s705 = scalar_lea.vmem [#allocation2], 98
      %v706 = vld [vmem:[%s705] ss:$2 sm:$0xff]
      %s707 = scalar_lea.vmem [#allocation2], 146
      %v708 = vld [vmem:[%s707] ss:$2 sm:$0xff]
      %s709 = scalar_lea.vmem [#allocation2], 194
      %v710 = vld [vmem:[%s709] ss:$2 sm:$0xff]
      %s711 = scalar_lea.vmem [#allocation2], 242
      %v712 = vld [vmem:[%s711] ss:$2 sm:$0xff]
      %s713 = scalar_lea.vmem [#allocation2], 290
      %v714 = vld [vmem:[%s713] ss:$2 sm:$0xff]
      %s715 = scalar_lea.vmem [#allocation2], 338
      %v716 = vld [vmem:[%s715] ss:$2 sm:$0xff]
      %s717 = scalar_lea.vmem %s3, 256
      %v718 = vld [vmem:[%s717] sm:$0xff]
      %v719 = vld [vmem:[%s717 + $0x8] sm:$0xff]
      %v720 = vld [vmem:[%s717 + $0x10] sm:$0xff]
      %v721 = vld [vmem:[%s717 + $0x18] sm:$0xff]
      %v722 = vld [vmem:[%s717 + $0x20] sm:$0xff]
      %v723 = vld [vmem:[%s717 + $0x28] sm:$0xff]
      %v724 = vld [vmem:[%s717 + $0x30] sm:$0xff]
      %v725 = vld [vmem:[%s717 + $0x38] sm:$0xff]
      %v726 = vld [vmem:[%s717 + $0x40] sm:$0xff]
      %v727 = vld [vmem:[%s717 + $0x48] sm:$0xff]
      %v728 = vld [vmem:[%s717 + $0x50] sm:$0xff]
      %v729 = vld [vmem:[%s717 + $0x58] sm:$0xff]
      %v730 = vld [vmem:[%s717 + $0x60] sm:$0xff]
      %v731 = vld [vmem:[%s717 + $0x68] sm:$0xff]
      %v732 = vld [vmem:[%s717 + $0x70] sm:$0xff]
      %v733 = vld [vmem:[%s717 + $0x78] sm:$0xff]
      %734 = vmatprep.subr.mxu0 0.0
      %735 = vmatpush1.msra.mxu0 %v718
      %736 = vmatprep.subr.mxu0 0.0
      %737 = vmatpush1.msra.mxu0 %v719
      %738 = vmatprep.subr.mxu0 0.0
      %739 = vmatpush1.msra.mxu0 %v720
      %740 = vmatprep.subr.mxu0 0.0
      %741 = vmatpush1.msra.mxu0 %v721
      %742 = vmatprep.subr.mxu0 0.0
      %743 = vmatpush1.msra.mxu0 %v722
      %744 = vmatprep.subr.mxu0 0.0
      %745 = vmatpush1.msra.mxu0 %v723
      %746 = vmatprep.subr.mxu0 0.0
      %747 = vmatpush1.msra.mxu0 %v724
      %748 = vmatprep.subr.mxu0 0.0
      %749 = vmatpush1.msra.mxu0 %v725
      %750 = vmatprep.subr.mxu0 0.0
      %751 = vmatpush1.msra.mxu0 %v726
      %752 = vmatprep.subr.mxu0 0.0
      %753 = vmatpush1.msra.mxu0 %v727
      %754 = vmatprep.subr.mxu0 0.0
      %755 = vmatpush1.msra.mxu0 %v728
      %756 = vmatprep.subr.mxu0 0.0
      %757 = vmatpush1.msra.mxu0 %v729
      %758 = vmatprep.subr.mxu0 0.0
      %759 = vmatpush1.msra.mxu0 %v730
      %760 = vmatprep.subr.mxu0 0.0
      %761 = vmatpush1.msra.mxu0 %v731
      %762 = vmatprep.subr.mxu0 0.0
      %763 = vmatpush1.msra.mxu0 %v732
      %764 = vmatprep.subr.mxu0 0.0
      %765 = vmatpush1.msra.mxu0 %v733
      %766 = vmatprep.subr.mxu0 0.0
      %767 = vmatpush1.msra.mxu0 0.0
      %768 = vmatprep.subr.mxu0 0.0
      %769 = vmatpush1.msra.mxu0 0.0
      %770 = vmatprep.subr.mxu0 0.0
      %771 = vmatpush1.msra.mxu0 0.0
      %772 = vmatprep.subr.mxu0 0.0
      %773 = vmatpush1.msra.mxu0 0.0
      %774 = vmatprep.subr.mxu0 0.0
      %775 = vmatpush1.msra.mxu0 0.0
      %776 = vmatprep.subr.mxu0 0.0
      %777 = vmatpush1.msra.mxu0 0.0
      %778 = vmatprep.subr.mxu0 0.0
      %779 = vmatpush1.msra.mxu0 0.0
      %780 = vmatprep.subr.mxu0 0.0
      %781 = vmatpush1.msra.mxu0 0.0
      %782 = vmatprep.subr.mxu0 0.0
      %783 = vmatpush1.msra.mxu0 0.0
      %784 = vmatprep.subr.mxu0 0.0
      %785 = vmatpush1.msra.mxu0 0.0
      %786 = vmatprep.subr.mxu0 0.0
      %787 = vmatpush1.msra.mxu0 0.0
      %788 = vmatprep.subr.mxu0 0.0
      %789 = vmatpush1.msra.mxu0 0.0
      %790 = vmatprep.subr.mxu0 0.0
      %791 = vmatpush1.msra.mxu0 0.0
      %792 = vmatprep.subr.mxu0 0.0
      %793 = vmatpush1.msra.mxu0 0.0
      %794 = vmatprep.subr.mxu0 0.0
      %795 = vmatpush1.msra.mxu0 0.0
      %796 = vmatprep.subr.mxu0 0.0
      %797 = vmatpush1.msra.mxu0 0.0
      %798 = vmatprep.mubr.f32.mxu0 0.0
      %799 = vmatmul.mubr.f32.gmra.mrb[0].mxu0 %v702
      %v800 = vpop.f32.mrb[0].mxu0
      %v801 = vadd.f32 0.0, %v800
      %v802 = vpop.f32.mrb[0].mxu0
      %803 = vmatprep.mubr.f32.mxu0 0.0
      %804 = vmatmul.mubr.f32.gmra.mrb[0].mxu0 %v704
      %v805 = vpop.f32.mrb[0].mxu0
      %v806 = vadd.f32 0.0, %v805
      %v807 = vpop.f32.mrb[0].mxu0
      %808 = vmatprep.mubr.f32.mxu0 0.0
      %809 = vmatmul.mubr.f32.gmra.mrb[0].mxu0 %v706
      %v810 = vpop.f32.mrb[0].mxu0
      %v811 = vadd.f32 0.0, %v810
      %v812 = vpop.f32.mrb[0].mxu0
      %813 = vmatprep.mubr.f32.mxu0 0.0
      %814 = vmatmul.mubr.f32.gmra.mrb[0].mxu0 %v708
      %v815 = vpop.f32.mrb[0].mxu0
      %v816 = vadd.f32 0.0, %v815
      %v817 = vpop.f32.mrb[0].mxu0
      %818 = vmatprep.mubr.f32.mxu0 0.0
      %819 = vmatmul.mubr.f32.gmra.mrb[0].mxu0 %v710
      %v820 = vpop.f32.mrb[0].mxu0
      %v821 = vadd.f32 0.0, %v820
      %v822 = vpop.f32.mrb[0].mxu0
      %823 = vmatprep.mubr.f32.mxu0 0.0
      %824 = vmatmul.mubr.f32.gmra.mrb[0].mxu0 %v712
      %v825 = vpop.f32.mrb[0].mxu0
      %v826 = vadd.f32 0.0, %v825
      %v827 = vpop.f32.mrb[0].mxu0
      %828 = vmatprep.mubr.f32.mxu0 0.0
      %829 = vmatmul.mubr.f32.gmra.mrb[0].mxu0 %v714
      %v830 = vpop.f32.mrb[0].mxu0
      %v831 = vadd.f32 0.0, %v830
      %v832 = vpop.f32.mrb[0].mxu0
      %833 = vmatprep.mubr.f32.mxu0 0.0
      %834 = vmatmul.mubr.f32.gmra.mrb[0].mxu0 %v716
      %v835 = vpop.f32.mrb[0].mxu0
      %v836 = vadd.f32 0.0, %v835
      %v837 = vpop.f32.mrb[0].mxu0
      %838 = vdwg.mxu0
      %v839 = vadd.f32 %v663, %v801
      %v840 = vadd.f32 %v668, %v806
      %v841 = vadd.f32 %v673, %v811
      %v842 = vadd.f32 %v678, %v816
      %v843 = vadd.f32 %v683, %v821
      %v844 = vadd.f32 %v688, %v826
      %v845 = vadd.f32 %v693, %v831
      %v846 = vadd.f32 %v698, %v836
      %v847 = vld [vmem:[%s394] ss:$2 sm:$0xff]
      %s848 = scalar_lea.vmem %s394, 48 [#allocation2]
      %v849 = vld [vmem:[%s848] ss:$2 sm:$0xff]
      %s850 = scalar_lea.vmem %s394, 96 [#allocation2]
      %v851 = vld [vmem:[%s850] ss:$2 sm:$0xff]
      %s852 = scalar_lea.vmem %s394, 144 [#allocation2]
      %v853 = vld [vmem:[%s852] ss:$2 sm:$0xff]
      %s854 = scalar_lea.vmem %s394, 192 [#allocation2]
      %v855 = vld [vmem:[%s854] ss:$2 sm:$0xff]
      %s856 = scalar_lea.vmem %s394, 240 [#allocation2]
      %v857 = vld [vmem:[%s856] ss:$2 sm:$0xff]
      %s858 = scalar_lea.vmem %s394, 288 [#allocation2]
      %v859 = vld [vmem:[%s858] ss:$2 sm:$0xff]
      %s860 = scalar_lea.vmem %s394, 336 [#allocation2]
      %v861 = vld [vmem:[%s860] ss:$2 sm:$0xff]
      %s862 = scalar_lea.vmem %s3, 384
      %v863 = vld [vmem:[%s862] sm:$0xff]
      %v864 = vld [vmem:[%s862 + $0x8] sm:$0xff]
      %v865 = vld [vmem:[%s862 + $0x10] sm:$0xff]
      %v866 = vld [vmem:[%s862 + $0x18] sm:$0xff]
      %v867 = vld [vmem:[%s862 + $0x20] sm:$0xff]
      %v868 = vld [vmem:[%s862 + $0x28] sm:$0xff]
      %v869 = vld [vmem:[%s862 + $0x30] sm:$0xff]
      %v870 = vld [vmem:[%s862 + $0x38] sm:$0xff]
      %v871 = vld [vmem:[%s862 + $0x40] sm:$0xff]
      %v872 = vld [vmem:[%s862 + $0x48] sm:$0xff]
      %v873 = vld [vmem:[%s862 + $0x50] sm:$0xff]
      %v874 = vld [vmem:[%s862 + $0x58] sm:$0xff]
      %v875 = vld [vmem:[%s862 + $0x60] sm:$0xff]
      %v876 = vld [vmem:[%s862 + $0x68] sm:$0xff]
      %v877 = vld [vmem:[%s862 + $0x70] sm:$0xff]
      %v878 = vld [vmem:[%s862 + $0x78] sm:$0xff]
      %879 = vmatprep.subr.mxu0 0.0
      %880 = vmatpush1.msra.mxu0 %v863
      %881 = vmatprep.subr.mxu0 0.0
      %882 = vmatpush1.msra.mxu0 %v864
      %883 = vmatprep.subr.mxu0 0.0
      %884 = vmatpush1.msra.mxu0 %v865
      %885 = vmatprep.subr.mxu0 0.0
      %886 = vmatpush1.msra.mxu0 %v866
      %887 = vmatprep.subr.mxu0 0.0
      %888 = vmatpush1.msra.mxu0 %v867
      %889 = vmatprep.subr.mxu0 0.0
      %890 = vmatpush1.msra.mxu0 %v868
      %891 = vmatprep.subr.mxu0 0.0
      %892 = vmatpush1.msra.mxu0 %v869
      %893 = vmatprep.subr.mxu0 0.0
      %894 = vmatpush1.msra.mxu0 %v870
      %895 = vmatprep.subr.mxu0 0.0
      %896 = vmatpush1.msra.mxu0 %v871
      %897 = vmatprep.subr.mxu0 0.0
      %898 = vmatpush1.msra.mxu0 %v872
      %899 = vmatprep.subr.mxu0 0.0
      %900 = vmatpush1.msra.mxu0 %v873
      %901 = vmatprep.subr.mxu0 0.0
      %902 = vmatpush1.msra.mxu0 %v874
      %903 = vmatprep.subr.mxu0 0.0
      %904 = vmatpush1.msra.mxu0 %v875
      %905 = vmatprep.subr.mxu0 0.0
      %906 = vmatpush1.msra.mxu0 %v876
      %907 = vmatprep.subr.mxu0 0.0
      %908 = vmatpush1.msra.mxu0 %v877
      %909 = vmatprep.subr.mxu0 0.0
      %910 = vmatpush1.msra.mxu0 %v878
      %911 = vmatprep.subr.mxu0 0.0
      %912 = vmatpush1.msra.mxu0 0.0
      %913 = vmatprep.subr.mxu0 0.0
      %914 = vmatpush1.msra.mxu0 0.0
      %915 = vmatprep.subr.mxu0 0.0
      %916 = vmatpush1.msra.mxu0 0.0
      %917 = vmatprep.subr.mxu0 0.0
      %918 = vmatpush1.msra.mxu0 0.0
      %919 = vmatprep.subr.mxu0 0.0
      %920 = vmatpush1.msra.mxu0 0.0
      %921 = vmatprep.subr.mxu0 0.0
      %922 = vmatpush1.msra.mxu0 0.0
      %923 = vmatprep.subr.mxu0 0.0
      %924 = vmatpush1.msra.mxu0 0.0
      %925 = vmatprep.subr.mxu0 0.0
      %926 = vmatpush1.msra.mxu0 0.0
      %927 = vmatprep.subr.mxu0 0.0
      %928 = vmatpush1.msra.mxu0 0.0
      %929 = vmatprep.subr.mxu0 0.0
      %930 = vmatpush1.msra.mxu0 0.0
      %931 = vmatprep.subr.mxu0 0.0
      %932 = vmatpush1.msra.mxu0 0.0
      %933 = vmatprep.subr.mxu0 0.0
      %934 = vmatpush1.msra.mxu0 0.0
      %935 = vmatprep.subr.mxu0 0.0
      %936 = vmatpush1.msra.mxu0 0.0
      %937 = vmatprep.subr.mxu0 0.0
      %938 = vmatpush1.msra.mxu0 0.0
      %939 = vmatprep.subr.mxu0 0.0
      %940 = vmatpush1.msra.mxu0 0.0
      %941 = vmatprep.subr.mxu0 0.0
      %942 = vmatpush1.msra.mxu0 0.0
      %943 = vmatprep.mubr.f32.mxu0 0.0
      %944 = vmatmul.mubr.f32.gmra.mrb[0].mxu0 %v847
      %v945 = vpop.f32.mrb[0].mxu0
      %v946 = vadd.f32 0.0, %v945
      %v947 = vpop.f32.mrb[0].mxu0
      %948 = vmatprep.mubr.f32.mxu0 0.0
      %949 = vmatmul.mubr.f32.gmra.mrb[0].mxu0 %v849
      %v950 = vpop.f32.mrb[0].mxu0
      %v951 = vadd.f32 0.0, %v950
      %v952 = vpop.f32.mrb[0].mxu0
      %953 = vmatprep.mubr.f32.mxu0 0.0
      %954 = vmatmul.mubr.f32.gmra.mrb[0].mxu0 %v851
      %v955 = vpop.f32.mrb[0].mxu0
      %v956 = vadd.f32 0.0, %v955
      %v957 = vpop.f32.mrb[0].mxu0
      %958 = vmatprep.mubr.f32.mxu0 0.0
      %959 = vmatmul.mubr.f32.gmra.mrb[0].mxu0 %v853
      %v960 = vpop.f32.mrb[0].mxu0
      %v961 = vadd.f32 0.0, %v960
      %v962 = vpop.f32.mrb[0].mxu0
      %963 = vmatprep.mubr.f32.mxu0 0.0
      %964 = vmatmul.mubr.f32.gmra.mrb[0].mxu0 %v855
      %v965 = vpop.f32.mrb[0].mxu0
      %v966 = vadd.f32 0.0, %v965
      %v967 = vpop.f32.mrb[0].mxu0
      %968 = vmatprep.mubr.f32.mxu0 0.0
      %969 = vmatmul.mubr.f32.gmra.mrb[0].mxu0 %v857
      %v970 = vpop.f32.mrb[0].mxu0
      %v971 = vadd.f32 0.0, %v970
      %v972 = vpop.f32.mrb[0].mxu0
      %973 = vmatprep.mubr.f32.mxu0 0.0
      %974 = vmatmul.mubr.f32.gmra.mrb[0].mxu0 %v859
      %v975 = vpop.f32.mrb[0].mxu0
      %v976 = vadd.f32 0.0, %v975
      %v977 = vpop.f32.mrb[0].mxu0
      %978 = vmatprep.mubr.f32.mxu0 0.0
      %979 = vmatmul.mubr.f32.gmra.mrb[0].mxu0 %v861
      %v980 = vpop.f32.mrb[0].mxu0
      %v981 = vadd.f32 0.0, %v980
      %v982 = vpop.f32.mrb[0].mxu0
      %983 = vdwg.mxu0
      %v984 = vadd.f32 %v839, %v946
      %v985 = vadd.f32 %v840, %v951
      %v986 = vadd.f32 %v841, %v956
      %v987 = vadd.f32 %v842, %v961
      %v988 = vadd.f32 %v843, %v966
      %v989 = vadd.f32 %v844, %v971
      %v990 = vadd.f32 %v845, %v976
      %v991 = vadd.f32 %v846, %v981
      %s992 = scalar_lea.vmem %s394, 1 [#allocation2]
      %v993 = vld [vmem:[%s992] ss:$2 sm:$0xff]
      %s994 = scalar_lea.vmem %s394, 49 [#allocation2]
      %v995 = vld [vmem:[%s994] ss:$2 sm:$0xff]
      %s996 = scalar_lea.vmem %s394, 97 [#allocation2]
      %v997 = vld [vmem:[%s996] ss:$2 sm:$0xff]
      %s998 = scalar_lea.vmem %s394, 145 [#allocation2]
      %v999 = vld [vmem:[%s998] ss:$2 sm:$0xff]
      %s1000 = scalar_lea.vmem %s394, 193 [#allocation2]
      %v1001 = vld [vmem:[%s1000] ss:$2 sm:$0xff]
      %s1002 = scalar_lea.vmem %s394, 241 [#allocation2]
      %v1003 = vld [vmem:[%s1002] ss:$2 sm:$0xff]
      %s1004 = scalar_lea.vmem %s394, 289 [#allocation2]
      %v1005 = vld [vmem:[%s1004] ss:$2 sm:$0xff]
      %s1006 = scalar_lea.vmem %s394, 337 [#allocation2]
      %v1007 = vld [vmem:[%s1006] ss:$2 sm:$0xff]
      %s1008 = scalar_lea.vmem %s3, 512
      %v1009 = vld [vmem:[%s1008] sm:$0xff]
      %v1010 = vld [vmem:[%s1008 + $0x8] sm:$0xff]
      %v1011 = vld [vmem:[%s1008 + $0x10] sm:$0xff]
      %v1012 = vld [vmem:[%s1008 + $0x18] sm:$0xff]
      %v1013 = vld [vmem:[%s1008 + $0x20] sm:$0xff]
      %v1014 = vld [vmem:[%s1008 + $0x28] sm:$0xff]
      %v1015 = vld [vmem:[%s1008 + $0x30] sm:$0xff]
      %v1016 = vld [vmem:[%s1008 + $0x38] sm:$0xff]
      %v1017 = vld [vmem:[%s1008 + $0x40] sm:$0xff]
      %v1018 = vld [vmem:[%s1008 + $0x48] sm:$0xff]
      %v1019 = vld [vmem:[%s1008 + $0x50] sm:$0xff]
      %v1020 = vld [vmem:[%s1008 + $0x58] sm:$0xff]
      %v1021 = vld [vmem:[%s1008 + $0x60] sm:$0xff]
      %v1022 = vld [vmem:[%s1008 + $0x68] sm:$0xff]
      %v1023 = vld [vmem:[%s1008 + $0x70] sm:$0xff]
      %v1024 = vld [vmem:[%s1008 + $0x78] sm:$0xff]
      %1025 = vmatprep.subr.mxu0 0.0
      %1026 = vmatpush1.msra.mxu0 %v1009
      %1027 = vmatprep.subr.mxu0 0.0
      %1028 = vmatpush1.msra.mxu0 %v1010
      %1029 = vmatprep.subr.mxu0 0.0
      %1030 = vmatpush1.msra.mxu0 %v1011
      %1031 = vmatprep.subr.mxu0 0.0
      %1032 = vmatpush1.msra.mxu0 %v1012
      %1033 = vmatprep.subr.mxu0 0.0
      %1034 = vmatpush1.msra.mxu0 %v1013
      %1035 = vmatprep.subr.mxu0 0.0
      %1036 = vmatpush1.msra.mxu0 %v1014
      %1037 = vmatprep.subr.mxu0 0.0
      %1038 = vmatpush1.msra.mxu0 %v1015
      %1039 = vmatprep.subr.mxu0 0.0
      %1040 = vmatpush1.msra.mxu0 %v1016
      %1041 = vmatprep.subr.mxu0 0.0
      %1042 = vmatpush1.msra.mxu0 %v1017
      %1043 = vmatprep.subr.mxu0 0.0
      %1044 = vmatpush1.msra.mxu0 %v1018
      %1045 = vmatprep.subr.mxu0 0.0
      %1046 = vmatpush1.msra.mxu0 %v1019
      %1047 = vmatprep.subr.mxu0 0.0
      %1048 = vmatpush1.msra.mxu0 %v1020
      %1049 = vmatprep.subr.mxu0 0.0
      %1050 = vmatpush1.msra.mxu0 %v1021
      %1051 = vmatprep.subr.mxu0 0.0
      %1052 = vmatpush1.msra.mxu0 %v1022
      %1053 = vmatprep.subr.mxu0 0.0
      %1054 = vmatpush1.msra.mxu0 %v1023
      %1055 = vmatprep.subr.mxu0 0.0
      %1056 = vmatpush1.msra.mxu0 %v1024
      %1057 = vmatprep.subr.mxu0 0.0
      %1058 = vmatpush1.msra.mxu0 0.0
      %1059 = vmatprep.subr.mxu0 0.0
      %1060 = vmatpush1.msra.mxu0 0.0
      %1061 = vmatprep.subr.mxu0 0.0
      %1062 = vmatpush1.msra.mxu0 0.0
      %1063 = vmatprep.subr.mxu0 0.0
      %1064 = vmatpush1.msra.mxu0 0.0
      %1065 = vmatprep.subr.mxu0 0.0
      %1066 = vmatpush1.msra.mxu0 0.0
      %1067 = vmatprep.subr.mxu0 0.0
      %1068 = vmatpush1.msra.mxu0 0.0
      %1069 = vmatprep.subr.mxu0 0.0
      %1070 = vmatpush1.msra.mxu0 0.0
      %1071 = vmatprep.subr.mxu0 0.0
      %1072 = vmatpush1.msra.mxu0 0.0
      %1073 = vmatprep.subr.mxu0 0.0
      %1074 = vmatpush1.msra.mxu0 0.0
      %1075 = vmatprep.subr.mxu0 0.0
      %1076 = vmatpush1.msra.mxu0 0.0
      %1077 = vmatprep.subr.mxu0 0.0
      %1078 = vmatpush1.msra.mxu0 0.0
      %1079 = vmatprep.subr.mxu0 0.0
      %1080 = vmatpush1.msra.mxu0 0.0
      %1081 = vmatprep.subr.mxu0 0.0
      %1082 = vmatpush1.msra.mxu0 0.0
      %1083 = vmatprep.subr.mxu0 0.0
      %1084 = vmatpush1.msra.mxu0 0.0
      %1085 = vmatprep.subr.mxu0 0.0
      %1086 = vmatpush1.msra.mxu0 0.0
      %1087 = vmatprep.subr.mxu0 0.0
      %1088 = vmatpush1.msra.mxu0 0.0
      %1089 = vmatprep.mubr.f32.mxu0 0.0
      %1090 = vmatmul.mubr.f32.gmra.mrb[0].mxu0 %v993
      %v1091 = vpop.f32.mrb[0].mxu0
      %v1092 = vadd.f32 0.0, %v1091
      %v1093 = vpop.f32.mrb[0].mxu0
      %1094 = vmatprep.mubr.f32.mxu0 0.0
      %1095 = vmatmul.mubr.f32.gmra.mrb[0].mxu0 %v995
      %v1096 = vpop.f32.mrb[0].mxu0
      %v1097 = vadd.f32 0.0, %v1096
      %v1098 = vpop.f32.mrb[0].mxu0
      %1099 = vmatprep.mubr.f32.mxu0 0.0
      %1100 = vmatmul.mubr.f32.gmra.mrb[0].mxu0 %v997
      %v1101 = vpop.f32.mrb[0].mxu0
      %v1102 = vadd.f32 0.0, %v1101
      %v1103 = vpop.f32.mrb[0].mxu0
      %1104 = vmatprep.mubr.f32.mxu0 0.0
      %1105 = vmatmul.mubr.f32.gmra.mrb[0].mxu0 %v999
      %v1106 = vpop.f32.mrb[0].mxu0
      %v1107 = vadd.f32 0.0, %v1106
      %v1108 = vpop.f32.mrb[0].mxu0
      %1109 = vmatprep.mubr.f32.mxu0 0.0
      %1110 = vmatmul.mubr.f32.gmra.mrb[0].mxu0 %v1001
      %v1111 = vpop.f32.mrb[0].mxu0
      %v1112 = vadd.f32 0.0, %v1111
      %v1113 = vpop.f32.mrb[0].mxu0
      %1114 = vmatprep.mubr.f32.mxu0 0.0
      %1115 = vmatmul.mubr.f32.gmra.mrb[0].mxu0 %v1003
      %v1116 = vpop.f32.mrb[0].mxu0
      %v1117 = vadd.f32 0.0, %v1116
      %v1118 = vpop.f32.mrb[0].mxu0
      %1119 = vmatprep.mubr.f32.mxu0 0.0
      %1120 = vmatmul.mubr.f32.gmra.mrb[0].mxu0 %v1005
      %v1121 = vpop.f32.mrb[0].mxu0
      %v1122 = vadd.f32 0.0, %v1121
      %v1123 = vpop.f32.mrb[0].mxu0
      %1124 = vmatprep.mubr.f32.mxu0 0.0
      %1125 = vmatmul.mubr.f32.gmra.mrb[0].mxu0 %v1007
      %v1126 = vpop.f32.mrb[0].mxu0
      %v1127 = vadd.f32 0.0, %v1126
      %v1128 = vpop.f32.mrb[0].mxu0
      %1129 = vdwg.mxu0
      %v1130 = vadd.f32 %v984, %v1092
      %v1131 = vadd.f32 %v985, %v1097
      %v1132 = vadd.f32 %v986, %v1102
      %v1133 = vadd.f32 %v987, %v1107
      %v1134 = vadd.f32 %v988, %v1112
      %v1135 = vadd.f32 %v989, %v1117
      %v1136 = vadd.f32 %v990, %v1122
      %v1137 = vadd.f32 %v991, %v1127
      %s1138 = scalar_lea.vmem %s394, 2 [#allocation2]
      %v1139 = vld [vmem:[%s1138] ss:$2 sm:$0xff]
      %s1140 = scalar_lea.vmem %s394, 50 [#allocation2]
      %v1141 = vld [vmem:[%s1140] ss:$2 sm:$0xff]
      %s1142 = scalar_lea.vmem %s394, 98 [#allocation2]
      %v1143 = vld [vmem:[%s1142] ss:$2 sm:$0xff]
      %s1144 = scalar_lea.vmem %s394, 146 [#allocation2]
      %v1145 = vld [vmem:[%s1144] ss:$2 sm:$0xff]
      %s1146 = scalar_lea.vmem %s394, 194 [#allocation2]
      %v1147 = vld [vmem:[%s1146] ss:$2 sm:$0xff]
      %s1148 = scalar_lea.vmem %s394, 242 [#allocation2]
      %v1149 = vld [vmem:[%s1148] ss:$2 sm:$0xff]
      %s1150 = scalar_lea.vmem %s394, 290 [#allocation2]
      %v1151 = vld [vmem:[%s1150] ss:$2 sm:$0xff]
      %s1152 = scalar_lea.vmem %s394, 338 [#allocation2]
      %v1153 = vld [vmem:[%s1152] ss:$2 sm:$0xff]
      %s1154 = scalar_lea.vmem %s3, 640
      %v1155 = vld [vmem:[%s1154] sm:$0xff]
      %v1156 = vld [vmem:[%s1154 + $0x8] sm:$0xff]
      %v1157 = vld [vmem:[%s1154 + $0x10] sm:$0xff]
      %v1158 = vld [vmem:[%s1154 + $0x18] sm:$0xff]
      %v1159 = vld [vmem:[%s1154 + $0x20] sm:$0xff]
      %v1160 = vld [vmem:[%s1154 + $0x28] sm:$0xff]
      %v1161 = vld [vmem:[%s1154 + $0x30] sm:$0xff]
      %v1162 = vld [vmem:[%s1154 + $0x38] sm:$0xff]
      %v1163 = vld [vmem:[%s1154 + $0x40] sm:$0xff]
      %v1164 = vld [vmem:[%s1154 + $0x48] sm:$0xff]
      %v1165 = vld [vmem:[%s1154 + $0x50] sm:$0xff]
      %v1166 = vld [vmem:[%s1154 + $0x58] sm:$0xff]
      %v1167 = vld [vmem:[%s1154 + $0x60] sm:$0xff]
      %v1168 = vld [vmem:[%s1154 + $0x68] sm:$0xff]
      %v1169 = vld [vmem:[%s1154 + $0x70] sm:$0xff]
      %v1170 = vld [vmem:[%s1154 + $0x78] sm:$0xff]
      %1171 = vmatprep.subr.mxu0 0.0
      %1172 = vmatpush1.msra.mxu0 %v1155
      %1173 = vmatprep.subr.mxu0 0.0
      %1174 = vmatpush1.msra.mxu0 %v1156
      %1175 = vmatprep.subr.mxu0 0.0
      %1176 = vmatpush1.msra.mxu0 %v1157
      %1177 = vmatprep.subr.mxu0 0.0
      %1178 = vmatpush1.msra.mxu0 %v1158
      %1179 = vmatprep.subr.mxu0 0.0
      %1180 = vmatpush1.msra.mxu0 %v1159
      %1181 = vmatprep.subr.mxu0 0.0
      %1182 = vmatpush1.msra.mxu0 %v1160
      %1183 = vmatprep.subr.mxu0 0.0
      %1184 = vmatpush1.msra.mxu0 %v1161
      %1185 = vmatprep.subr.mxu0 0.0
      %1186 = vmatpush1.msra.mxu0 %v1162
      %1187 = vmatprep.subr.mxu0 0.0
      %1188 = vmatpush1.msra.mxu0 %v1163
      %1189 = vmatprep.subr.mxu0 0.0
      %1190 = vmatpush1.msra.mxu0 %v1164
      %1191 = vmatprep.subr.mxu0 0.0
      %1192 = vmatpush1.msra.mxu0 %v1165
      %1193 = vmatprep.subr.mxu0 0.0
      %1194 = vmatpush1.msra.mxu0 %v1166
      %1195 = vmatprep.subr.mxu0 0.0
      %1196 = vmatpush1.msra.mxu0 %v1167
      %1197 = vmatprep.subr.mxu0 0.0
      %1198 = vmatpush1.msra.mxu0 %v1168
      %1199 = vmatprep.subr.mxu0 0.0
      %1200 = vmatpush1.msra.mxu0 %v1169
      %1201 = vmatprep.subr.mxu0 0.0
      %1202 = vmatpush1.msra.mxu0 %v1170
      %1203 = vmatprep.subr.mxu0 0.0
      %1204 = vmatpush1.msra.mxu0 0.0
      %1205 = vmatprep.subr.mxu0 0.0
      %1206 = vmatpush1.msra.mxu0 0.0
      %1207 = vmatprep.subr.mxu0 0.0
      %1208 = vmatpush1.msra.mxu0 0.0
      %1209 = vmatprep.subr.mxu0 0.0
      %1210 = vmatpush1.msra.mxu0 0.0
      %1211 = vmatprep.subr.mxu0 0.0
      %1212 = vmatpush1.msra.mxu0 0.0
      %1213 = vmatprep.subr.mxu0 0.0
      %1214 = vmatpush1.msra.mxu0 0.0
      %1215 = vmatprep.subr.mxu0 0.0
      %1216 = vmatpush1.msra.mxu0 0.0
      %1217 = vmatprep.subr.mxu0 0.0
      %1218 = vmatpush1.msra.mxu0 0.0
      %1219 = vmatprep.subr.mxu0 0.0
      %1220 = vmatpush1.msra.mxu0 0.0
      %1221 = vmatprep.subr.mxu0 0.0
      %1222 = vmatpush1.msra.mxu0 0.0
      %1223 = vmatprep.subr.mxu0 0.0
      %1224 = vmatpush1.msra.mxu0 0.0
      %1225 = vmatprep.subr.mxu0 0.0
      %1226 = vmatpush1.msra.mxu0 0.0
      %1227 = vmatprep.subr.mxu0 0.0
      %1228 = vmatpush1.msra.mxu0 0.0
      %1229 = vmatprep.subr.mxu0 0.0
      %1230 = vmatpush1.msra.mxu0 0.0
      %1231 = vmatprep.subr.mxu0 0.0
      %1232 = vmatpush1.msra.mxu0 0.0
      %1233 = vmatprep.subr.mxu0 0.0
      %1234 = vmatpush1.msra.mxu0 0.0
      %1235 = vmatprep.mubr.f32.mxu0 0.0
      %1236 = vmatmul.mubr.f32.gmra.mrb[0].mxu0 %v1139
      %v1237 = vpop.f32.mrb[0].mxu0
      %v1238 = vadd.f32 0.0, %v1237
      %v1239 = vpop.f32.mrb[0].mxu0
      %1240 = vmatprep.mubr.f32.mxu0 0.0
      %1241 = vmatmul.mubr.f32.gmra.mrb[0].mxu0 %v1141
      %v1242 = vpop.f32.mrb[0].mxu0
      %v1243 = vadd.f32 0.0, %v1242
      %v1244 = vpop.f32.mrb[0].mxu0
      %1245 = vmatprep.mubr.f32.mxu0 0.0
      %1246 = vmatmul.mubr.f32.gmra.mrb[0].mxu0 %v1143
      %v1247 = vpop.f32.mrb[0].mxu0
      %v1248 = vadd.f32 0.0, %v1247
      %v1249 = vpop.f32.mrb[0].mxu0
      %1250 = vmatprep.mubr.f32.mxu0 0.0
      %1251 = vmatmul.mubr.f32.gmra.mrb[0].mxu0 %v1145
      %v1252 = vpop.f32.mrb[0].mxu0
      %v1253 = vadd.f32 0.0, %v1252
      %v1254 = vpop.f32.mrb[0].mxu0
      %1255 = vmatprep.mubr.f32.mxu0 0.0
      %1256 = vmatmul.mubr.f32.gmra.mrb[0].mxu0 %v1147
      %v1257 = vpop.f32.mrb[0].mxu0
      %v1258 = vadd.f32 0.0, %v1257
      %v1259 = vpop.f32.mrb[0].mxu0
      %1260 = vmatprep.mubr.f32.mxu0 0.0
      %1261 = vmatmul.mubr.f32.gmra.mrb[0].mxu0 %v1149
      %v1262 = vpop.f32.mrb[0].mxu0
      %v1263 = vadd.f32 0.0, %v1262
      %v1264 = vpop.f32.mrb[0].mxu0
      %1265 = vmatprep.mubr.f32.mxu0 0.0
      %1266 = vmatmul.mubr.f32.gmra.mrb[0].mxu0 %v1151
      %v1267 = vpop.f32.mrb[0].mxu0
      %v1268 = vadd.f32 0.0, %v1267
      %v1269 = vpop.f32.mrb[0].mxu0
      %1270 = vmatprep.mubr.f32.mxu0 0.0
      %1271 = vmatmul.mubr.f32.gmra.mrb[0].mxu0 %v1153
      %v1272 = vpop.f32.mrb[0].mxu0
      %v1273 = vadd.f32 0.0, %v1272
      %v1274 = vpop.f32.mrb[0].mxu0
      %1275 = vdwg.mxu0
      %v1276 = vadd.f32 %v1130, %v1238
      %v1277 = vadd.f32 %v1131, %v1243
      %v1278 = vadd.f32 %v1132, %v1248
      %v1279 = vadd.f32 %v1133, %v1253
      %v1280 = vadd.f32 %v1134, %v1258
      %v1281 = vadd.f32 %v1135, %v1263
      %v1282 = vadd.f32 %v1136, %v1268
      %v1283 = vadd.f32 %v1137, %v1273
      %s1284 = scalar_lea.vmem [#allocation2], 48
      %v1285 = vld [vmem:[%s1284] ss:$2 sm:$0xff]
      %s1286 = scalar_lea.vmem %s1284, 48 [#allocation2]
      %v1287 = vld [vmem:[%s1286] ss:$2 sm:$0xff]
      %s1288 = scalar_lea.vmem %s1284, 96 [#allocation2]
      %v1289 = vld [vmem:[%s1288] ss:$2 sm:$0xff]
      %s1290 = scalar_lea.vmem %s1284, 144 [#allocation2]
      %v1291 = vld [vmem:[%s1290] ss:$2 sm:$0xff]
      %s1292 = scalar_lea.vmem %s1284, 192 [#allocation2]
      %v1293 = vld [vmem:[%s1292] ss:$2 sm:$0xff]
      %s1294 = scalar_lea.vmem %s1284, 240 [#allocation2]
      %v1295 = vld [vmem:[%s1294] ss:$2 sm:$0xff]
      %s1296 = scalar_lea.vmem %s1284, 288 [#allocation2]
      %v1297 = vld [vmem:[%s1296] ss:$2 sm:$0xff]
      %s1298 = scalar_lea.vmem %s1284, 336 [#allocation2]
      %v1299 = vld [vmem:[%s1298] ss:$2 sm:$0xff]
      %s1300 = scalar_lea.vmem %s3, 768
      %v1301 = vld [vmem:[%s1300] sm:$0xff]
      %v1302 = vld [vmem:[%s1300 + $0x8] sm:$0xff]
      %v1303 = vld [vmem:[%s1300 + $0x10] sm:$0xff]
      %v1304 = vld [vmem:[%s1300 + $0x18] sm:$0xff]
      %v1305 = vld [vmem:[%s1300 + $0x20] sm:$0xff]
      %v1306 = vld [vmem:[%s1300 + $0x28] sm:$0xff]
      %v1307 = vld [vmem:[%s1300 + $0x30] sm:$0xff]
      %v1308 = vld [vmem:[%s1300 + $0x38] sm:$0xff]
      %v1309 = vld [vmem:[%s1300 + $0x40] sm:$0xff]
      %v1310 = vld [vmem:[%s1300 + $0x48] sm:$0xff]
      %v1311 = vld [vmem:[%s1300 + $0x50] sm:$0xff]
      %v1312 = vld [vmem:[%s1300 + $0x58] sm:$0xff]
      %v1313 = vld [vmem:[%s1300 + $0x60] sm:$0xff]
      %v1314 = vld [vmem:[%s1300 + $0x68] sm:$0xff]
      %v1315 = vld [vmem:[%s1300 + $0x70] sm:$0xff]
      %v1316 = vld [vmem:[%s1300 + $0x78] sm:$0xff]
      %1317 = vmatprep.subr.mxu0 0.0
      %1318 = vmatpush1.msra.mxu0 %v1301
      %1319 = vmatprep.subr.mxu0 0.0
      %1320 = vmatpush1.msra.mxu0 %v1302
      %1321 = vmatprep.subr.mxu0 0.0
      %1322 = vmatpush1.msra.mxu0 %v1303
      %1323 = vmatprep.subr.mxu0 0.0
      %1324 = vmatpush1.msra.mxu0 %v1304
      %1325 = vmatprep.subr.mxu0 0.0
      %1326 = vmatpush1.msra.mxu0 %v1305
      %1327 = vmatprep.subr.mxu0 0.0
      %1328 = vmatpush1.msra.mxu0 %v1306
      %1329 = vmatprep.subr.mxu0 0.0
      %1330 = vmatpush1.msra.mxu0 %v1307
      %1331 = vmatprep.subr.mxu0 0.0
      %1332 = vmatpush1.msra.mxu0 %v1308
      %1333 = vmatprep.subr.mxu0 0.0
      %1334 = vmatpush1.msra.mxu0 %v1309
      %1335 = vmatprep.subr.mxu0 0.0
      %1336 = vmatpush1.msra.mxu0 %v1310
      %1337 = vmatprep.subr.mxu0 0.0
      %1338 = vmatpush1.msra.mxu0 %v1311
      %1339 = vmatprep.subr.mxu0 0.0
      %1340 = vmatpush1.msra.mxu0 %v1312
      %1341 = vmatprep.subr.mxu0 0.0
      %1342 = vmatpush1.msra.mxu0 %v1313
      %1343 = vmatprep.subr.mxu0 0.0
      %1344 = vmatpush1.msra.mxu0 %v1314
      %1345 = vmatprep.subr.mxu0 0.0
      %1346 = vmatpush1.msra.mxu0 %v1315
      %1347 = vmatprep.subr.mxu0 0.0
      %1348 = vmatpush1.msra.mxu0 %v1316
      %1349 = vmatprep.subr.mxu0 0.0
      %1350 = vmatpush1.msra.mxu0 0.0
      %1351 = vmatprep.subr.mxu0 0.0
      %1352 = vmatpush1.msra.mxu0 0.0
      %1353 = vmatprep.subr.mxu0 0.0
      %1354 = vmatpush1.msra.mxu0 0.0
      %1355 = vmatprep.subr.mxu0 0.0
      %1356 = vmatpush1.msra.mxu0 0.0
      %1357 = vmatprep.subr.mxu0 0.0
      %1358 = vmatpush1.msra.mxu0 0.0
      %1359 = vmatprep.subr.mxu0 0.0
      %1360 = vmatpush1.msra.mxu0 0.0
      %1361 = vmatprep.subr.mxu0 0.0
      %1362 = vmatpush1.msra.mxu0 0.0
      %1363 = vmatprep.subr.mxu0 0.0
      %1364 = vmatpush1.msra.mxu0 0.0
      %1365 = vmatprep.subr.mxu0 0.0
      %1366 = vmatpush1.msra.mxu0 0.0
      %1367 = vmatprep.subr.mxu0 0.0
      %1368 = vmatpush1.msra.mxu0 0.0
      %1369 = vmatprep.subr.mxu0 0.0
      %1370 = vmatpush1.msra.mxu0 0.0
      %1371 = vmatprep.subr.mxu0 0.0
      %1372 = vmatpush1.msra.mxu0 0.0
      %1373 = vmatprep.subr.mxu0 0.0
      %1374 = vmatpush1.msra.mxu0 0.0
      %1375 = vmatprep.subr.mxu0 0.0
      %1376 = vmatpush1.msra.mxu0 0.0
      %1377 = vmatprep.subr.mxu0 0.0
      %1378 = vmatpush1.msra.mxu0 0.0
      %1379 = vmatprep.subr.mxu0 0.0
      %1380 = vmatpush1.msra.mxu0 0.0
      %1381 = vmatprep.mubr.f32.mxu0 0.0
      %1382 = vmatmul.mubr.f32.gmra.mrb[0].mxu0 %v1285
      %v1383 = vpop.f32.mrb[0].mxu0
      %v1384 = vadd.f32 0.0, %v1383
      %v1385 = vpop.f32.mrb[0].mxu0
      %1386 = vmatprep.mubr.f32.mxu0 0.0
      %1387 = vmatmul.mubr.f32.gmra.mrb[0].mxu0 %v1287
      %v1388 = vpop.f32.mrb[0].mxu0
      %v1389 = vadd.f32 0.0, %v1388
      %v1390 = vpop.f32.mrb[0].mxu0
      %1391 = vmatprep.mubr.f32.mxu0 0.0
      %1392 = vmatmul.mubr.f32.gmra.mrb[0].mxu0 %v1289
      %v1393 = vpop.f32.mrb[0].mxu0
      %v1394 = vadd.f32 0.0, %v1393
      %v1395 = vpop.f32.mrb[0].mxu0
      %1396 = vmatprep.mubr.f32.mxu0 0.0
      %1397 = vmatmul.mubr.f32.gmra.mrb[0].mxu0 %v1291
      %v1398 = vpop.f32.mrb[0].mxu0
      %v1399 = vadd.f32 0.0, %v1398
      %v1400 = vpop.f32.mrb[0].mxu0
      %1401 = vmatprep.mubr.f32.mxu0 0.0
      %1402 = vmatmul.mubr.f32.gmra.mrb[0].mxu0 %v1293
      %v1403 = vpop.f32.mrb[0].mxu0
      %v1404 = vadd.f32 0.0, %v1403
      %v1405 = vpop.f32.mrb[0].mxu0
      %1406 = vmatprep.mubr.f32.mxu0 0.0
      %1407 = vmatmul.mubr.f32.gmra.mrb[0].mxu0 %v1295
      %v1408 = vpop.f32.mrb[0].mxu0
      %v1409 = vadd.f32 0.0, %v1408
      %v1410 = vpop.f32.mrb[0].mxu0
      %1411 = vmatprep.mubr.f32.mxu0 0.0
      %1412 = vmatmul.mubr.f32.gmra.mrb[0].mxu0 %v1297
      %v1413 = vpop.f32.mrb[0].mxu0
      %v1414 = vadd.f32 0.0, %v1413
      %v1415 = vpop.f32.mrb[0].mxu0
      %1416 = vmatprep.mubr.f32.mxu0 0.0
      %1417 = vmatmul.mubr.f32.gmra.mrb[0].mxu0 %v1299
      %v1418 = vpop.f32.mrb[0].mxu0
      %v1419 = vadd.f32 0.0, %v1418
      %v1420 = vpop.f32.mrb[0].mxu0
      %1421 = vdwg.mxu0
      %v1422 = vadd.f32 %v1276, %v1384
      %v1423 = vadd.f32 %v1277, %v1389
      %v1424 = vadd.f32 %v1278, %v1394
      %v1425 = vadd.f32 %v1279, %v1399
      %v1426 = vadd.f32 %v1280, %v1404
      %v1427 = vadd.f32 %v1281, %v1409
      %v1428 = vadd.f32 %v1282, %v1414
      %v1429 = vadd.f32 %v1283, %v1419
      %s1430 = scalar_lea.vmem %s1284, 1 [#allocation2]
      %v1431 = vld [vmem:[%s1430] ss:$2 sm:$0xff]
      %s1432 = scalar_lea.vmem %s1284, 49 [#allocation2]
      %v1433 = vld [vmem:[%s1432] ss:$2 sm:$0xff]
      %s1434 = scalar_lea.vmem %s1284, 97 [#allocation2]
      %v1435 = vld [vmem:[%s1434] ss:$2 sm:$0xff]
      %s1436 = scalar_lea.vmem %s1284, 145 [#allocation2]
      %v1437 = vld [vmem:[%s1436] ss:$2 sm:$0xff]
      %s1438 = scalar_lea.vmem %s1284, 193 [#allocation2]
      %v1439 = vld [vmem:[%s1438] ss:$2 sm:$0xff]
      %s1440 = scalar_lea.vmem %s1284, 241 [#allocation2]
      %v1441 = vld [vmem:[%s1440] ss:$2 sm:$0xff]
      %s1442 = scalar_lea.vmem %s1284, 289 [#allocation2]
      %v1443 = vld [vmem:[%s1442] ss:$2 sm:$0xff]
      %s1444 = scalar_lea.vmem %s1284, 337 [#allocation2]
      %v1445 = vld [vmem:[%s1444] ss:$2 sm:$0xff]
      %s1446 = scalar_lea.vmem %s3, 896
      %v1447 = vld [vmem:[%s1446] sm:$0xff]
      %v1448 = vld [vmem:[%s1446 + $0x8] sm:$0xff]
      %v1449 = vld [vmem:[%s1446 + $0x10] sm:$0xff]
      %v1450 = vld [vmem:[%s1446 + $0x18] sm:$0xff]
      %v1451 = vld [vmem:[%s1446 + $0x20] sm:$0xff]
      %v1452 = vld [vmem:[%s1446 + $0x28] sm:$0xff]
      %v1453 = vld [vmem:[%s1446 + $0x30] sm:$0xff]
      %v1454 = vld [vmem:[%s1446 + $0x38] sm:$0xff]
      %v1455 = vld [vmem:[%s1446 + $0x40] sm:$0xff]
      %v1456 = vld [vmem:[%s1446 + $0x48] sm:$0xff]
      %v1457 = vld [vmem:[%s1446 + $0x50] sm:$0xff]
      %v1458 = vld [vmem:[%s1446 + $0x58] sm:$0xff]
      %v1459 = vld [vmem:[%s1446 + $0x60] sm:$0xff]
      %v1460 = vld [vmem:[%s1446 + $0x68] sm:$0xff]
      %v1461 = vld [vmem:[%s1446 + $0x70] sm:$0xff]
      %v1462 = vld [vmem:[%s1446 + $0x78] sm:$0xff]
      %1463 = vmatprep.subr.mxu0 0.0
      %1464 = vmatpush1.msra.mxu0 %v1447
      %1465 = vmatprep.subr.mxu0 0.0
      %1466 = vmatpush1.msra.mxu0 %v1448
      %1467 = vmatprep.subr.mxu0 0.0
      %1468 = vmatpush1.msra.mxu0 %v1449
      %1469 = vmatprep.subr.mxu0 0.0
      %1470 = vmatpush1.msra.mxu0 %v1450
      %1471 = vmatprep.subr.mxu0 0.0
      %1472 = vmatpush1.msra.mxu0 %v1451
      %1473 = vmatprep.subr.mxu0 0.0
      %1474 = vmatpush1.msra.mxu0 %v1452
      %1475 = vmatprep.subr.mxu0 0.0
      %1476 = vmatpush1.msra.mxu0 %v1453
      %1477 = vmatprep.subr.mxu0 0.0
      %1478 = vmatpush1.msra.mxu0 %v1454
      %1479 = vmatprep.subr.mxu0 0.0
      %1480 = vmatpush1.msra.mxu0 %v1455
      %1481 = vmatprep.subr.mxu0 0.0
      %1482 = vmatpush1.msra.mxu0 %v1456
      %1483 = vmatprep.subr.mxu0 0.0
      %1484 = vmatpush1.msra.mxu0 %v1457
      %1485 = vmatprep.subr.mxu0 0.0
      %1486 = vmatpush1.msra.mxu0 %v1458
      %1487 = vmatprep.subr.mxu0 0.0
      %1488 = vmatpush1.msra.mxu0 %v1459
      %1489 = vmatprep.subr.mxu0 0.0
      %1490 = vmatpush1.msra.mxu0 %v1460
      %1491 = vmatprep.subr.mxu0 0.0
      %1492 = vmatpush1.msra.mxu0 %v1461
      %1493 = vmatprep.subr.mxu0 0.0
      %1494 = vmatpush1.msra.mxu0 %v1462
      %1495 = vmatprep.subr.mxu0 0.0
      %1496 = vmatpush1.msra.mxu0 0.0
      %1497 = vmatprep.subr.mxu0 0.0
      %1498 = vmatpush1.msra.mxu0 0.0
      %1499 = vmatprep.subr.mxu0 0.0
      %1500 = vmatpush1.msra.mxu0 0.0
      %1501 = vmatprep.subr.mxu0 0.0
      %1502 = vmatpush1.msra.mxu0 0.0
      %1503 = vmatprep.subr.mxu0 0.0
      %1504 = vmatpush1.msra.mxu0 0.0
      %1505 = vmatprep.subr.mxu0 0.0
      %1506 = vmatpush1.msra.mxu0 0.0
      %1507 = vmatprep.subr.mxu0 0.0
      %1508 = vmatpush1.msra.mxu0 0.0
      %1509 = vmatprep.subr.mxu0 0.0
      %1510 = vmatpush1.msra.mxu0 0.0
      %1511 = vmatprep.subr.mxu0 0.0
      %1512 = vmatpush1.msra.mxu0 0.0
      %1513 = vmatprep.subr.mxu0 0.0
      %1514 = vmatpush1.msra.mxu0 0.0
      %1515 = vmatprep.subr.mxu0 0.0
      %1516 = vmatpush1.msra.mxu0 0.0
      %1517 = vmatprep.subr.mxu0 0.0
      %1518 = vmatpush1.msra.mxu0 0.0
      %1519 = vmatprep.subr.mxu0 0.0
      %1520 = vmatpush1.msra.mxu0 0.0
      %1521 = vmatprep.subr.mxu0 0.0
      %1522 = vmatpush1.msra.mxu0 0.0
      %1523 = vmatprep.subr.mxu0 0.0
      %1524 = vmatpush1.msra.mxu0 0.0
      %1525 = vmatprep.subr.mxu0 0.0
      %1526 = vmatpush1.msra.mxu0 0.0
      %1527 = vmatprep.mubr.f32.mxu0 0.0
      %1528 = vmatmul.mubr.f32.gmra.mrb[0].mxu0 %v1431
      %v1529 = vpop.f32.mrb[0].mxu0
      %v1530 = vadd.f32 0.0, %v1529
      %v1531 = vpop.f32.mrb[0].mxu0
      %1532 = vmatprep.mubr.f32.mxu0 0.0
      %1533 = vmatmul.mubr.f32.gmra.mrb[0].mxu0 %v1433
      %v1534 = vpop.f32.mrb[0].mxu0
      %v1535 = vadd.f32 0.0, %v1534
      %v1536 = vpop.f32.mrb[0].mxu0
      %1537 = vmatprep.mubr.f32.mxu0 0.0
      %1538 = vmatmul.mubr.f32.gmra.mrb[0].mxu0 %v1435
      %v1539 = vpop.f32.mrb[0].mxu0
      %v1540 = vadd.f32 0.0, %v1539
      %v1541 = vpop.f32.mrb[0].mxu0
      %1542 = vmatprep.mubr.f32.mxu0 0.0
      %1543 = vmatmul.mubr.f32.gmra.mrb[0].mxu0 %v1437
      %v1544 = vpop.f32.mrb[0].mxu0
      %v1545 = vadd.f32 0.0, %v1544
      %v1546 = vpop.f32.mrb[0].mxu0
      %1547 = vmatprep.mubr.f32.mxu0 0.0
      %1548 = vmatmul.mubr.f32.gmra.mrb[0].mxu0 %v1439
      %v1549 = vpop.f32.mrb[0].mxu0
      %v1550 = vadd.f32 0.0, %v1549
      %v1551 = vpop.f32.mrb[0].mxu0
      %1552 = vmatprep.mubr.f32.mxu0 0.0
      %1553 = vmatmul.mubr.f32.gmra.mrb[0].mxu0 %v1441
      %v1554 = vpop.f32.mrb[0].mxu0
      %v1555 = vadd.f32 0.0, %v1554
      %v1556 = vpop.f32.mrb[0].mxu0
      %1557 = vmatprep.mubr.f32.mxu0 0.0
      %1558 = vmatmul.mubr.f32.gmra.mrb[0].mxu0 %v1443
      %v1559 = vpop.f32.mrb[0].mxu0
      %v1560 = vadd.f32 0.0, %v1559
      %v1561 = vpop.f32.mrb[0].mxu0
      %1562 = vmatprep.mubr.f32.mxu0 0.0
      %1563 = vmatmul.mubr.f32.gmra.mrb[0].mxu0 %v1445
      %v1564 = vpop.f32.mrb[0].mxu0
      %v1565 = vadd.f32 0.0, %v1564
      %v1566 = vpop.f32.mrb[0].mxu0
      %1567 = vdwg.mxu0
      %v1568 = vadd.f32 %v1422, %v1530
      %v1569 = vadd.f32 %v1423, %v1535
      %v1570 = vadd.f32 %v1424, %v1540
      %v1571 = vadd.f32 %v1425, %v1545
      %v1572 = vadd.f32 %v1426, %v1550
      %v1573 = vadd.f32 %v1427, %v1555
      %v1574 = vadd.f32 %v1428, %v1560
      %v1575 = vadd.f32 %v1429, %v1565
      %s1576 = scalar_lea.vmem %s1284, 2 [#allocation2]
      %v1577 = vld [vmem:[%s1576] ss:$2 sm:$0xff]
      %s1578 = scalar_lea.vmem %s1284, 50 [#allocation2]
      %v1579 = vld [vmem:[%s1578] ss:$2 sm:$0xff]
      %s1580 = scalar_lea.vmem %s1284, 98 [#allocation2]
      %v1581 = vld [vmem:[%s1580] ss:$2 sm:$0xff]
      %s1582 = scalar_lea.vmem %s1284, 146 [#allocation2]
      %v1583 = vld [vmem:[%s1582] ss:$2 sm:$0xff]
      %s1584 = scalar_lea.vmem %s1284, 194 [#allocation2]
      %v1585 = vld [vmem:[%s1584] ss:$2 sm:$0xff]
      %s1586 = scalar_lea.vmem %s1284, 242 [#allocation2]
      %v1587 = vld [vmem:[%s1586] ss:$2 sm:$0xff]
      %s1588 = scalar_lea.vmem %s1284, 290 [#allocation2]
      %v1589 = vld [vmem:[%s1588] ss:$2 sm:$0xff]
      %s1590 = scalar_lea.vmem %s1284, 338 [#allocation2]
      %v1591 = vld [vmem:[%s1590] ss:$2 sm:$0xff]
      %s1592 = scalar_lea.vmem %s3, 1024
      %v1593 = vld [vmem:[%s1592] sm:$0xff]
      %v1594 = vld [vmem:[%s1592 + $0x8] sm:$0xff]
      %v1595 = vld [vmem:[%s1592 + $0x10] sm:$0xff]
      %v1596 = vld [vmem:[%s1592 + $0x18] sm:$0xff]
      %v1597 = vld [vmem:[%s1592 + $0x20] sm:$0xff]
      %v1598 = vld [vmem:[%s1592 + $0x28] sm:$0xff]
      %v1599 = vld [vmem:[%s1592 + $0x30] sm:$0xff]
      %v1600 = vld [vmem:[%s1592 + $0x38] sm:$0xff]
      %v1601 = vld [vmem:[%s1592 + $0x40] sm:$0xff]
      %v1602 = vld [vmem:[%s1592 + $0x48] sm:$0xff]
      %v1603 = vld [vmem:[%s1592 + $0x50] sm:$0xff]
      %v1604 = vld [vmem:[%s1592 + $0x58] sm:$0xff]
      %v1605 = vld [vmem:[%s1592 + $0x60] sm:$0xff]
      %v1606 = vld [vmem:[%s1592 + $0x68] sm:$0xff]
      %v1607 = vld [vmem:[%s1592 + $0x70] sm:$0xff]
      %v1608 = vld [vmem:[%s1592 + $0x78] sm:$0xff]
      %1609 = vmatprep.subr.mxu0 0.0
      %1610 = vmatpush1.msra.mxu0 %v1593
      %1611 = vmatprep.subr.mxu0 0.0
      %1612 = vmatpush1.msra.mxu0 %v1594
      %1613 = vmatprep.subr.mxu0 0.0
      %1614 = vmatpush1.msra.mxu0 %v1595
      %1615 = vmatprep.subr.mxu0 0.0
      %1616 = vmatpush1.msra.mxu0 %v1596
      %1617 = vmatprep.subr.mxu0 0.0
      %1618 = vmatpush1.msra.mxu0 %v1597
      %1619 = vmatprep.subr.mxu0 0.0
      %1620 = vmatpush1.msra.mxu0 %v1598
      %1621 = vmatprep.subr.mxu0 0.0
      %1622 = vmatpush1.msra.mxu0 %v1599
      %1623 = vmatprep.subr.mxu0 0.0
      %1624 = vmatpush1.msra.mxu0 %v1600
      %1625 = vmatprep.subr.mxu0 0.0
      %1626 = vmatpush1.msra.mxu0 %v1601
      %1627 = vmatprep.subr.mxu0 0.0
      %1628 = vmatpush1.msra.mxu0 %v1602
      %1629 = vmatprep.subr.mxu0 0.0
      %1630 = vmatpush1.msra.mxu0 %v1603
      %1631 = vmatprep.subr.mxu0 0.0
      %1632 = vmatpush1.msra.mxu0 %v1604
      %1633 = vmatprep.subr.mxu0 0.0
      %1634 = vmatpush1.msra.mxu0 %v1605
      %1635 = vmatprep.subr.mxu0 0.0
      %1636 = vmatpush1.msra.mxu0 %v1606
      %1637 = vmatprep.subr.mxu0 0.0
      %1638 = vmatpush1.msra.mxu0 %v1607
      %1639 = vmatprep.subr.mxu0 0.0
      %1640 = vmatpush1.msra.mxu0 %v1608
      %1641 = vmatprep.subr.mxu0 0.0
      %1642 = vmatpush1.msra.mxu0 0.0
      %1643 = vmatprep.subr.mxu0 0.0
      %1644 = vmatpush1.msra.mxu0 0.0
      %1645 = vmatprep.subr.mxu0 0.0
      %1646 = vmatpush1.msra.mxu0 0.0
      %1647 = vmatprep.subr.mxu0 0.0
      %1648 = vmatpush1.msra.mxu0 0.0
      %1649 = vmatprep.subr.mxu0 0.0
      %1650 = vmatpush1.msra.mxu0 0.0
      %1651 = vmatprep.subr.mxu0 0.0
      %1652 = vmatpush1.msra.mxu0 0.0
      %1653 = vmatprep.subr.mxu0 0.0
      %1654 = vmatpush1.msra.mxu0 0.0
      %1655 = vmatprep.subr.mxu0 0.0
      %1656 = vmatpush1.msra.mxu0 0.0
      %1657 = vmatprep.subr.mxu0 0.0
      %1658 = vmatpush1.msra.mxu0 0.0
      %1659 = vmatprep.subr.mxu0 0.0
      %1660 = vmatpush1.msra.mxu0 0.0
      %1661 = vmatprep.subr.mxu0 0.0
      %1662 = vmatpush1.msra.mxu0 0.0
      %1663 = vmatprep.subr.mxu0 0.0
      %1664 = vmatpush1.msra.mxu0 0.0
      %1665 = vmatprep.subr.mxu0 0.0
      %1666 = vmatpush1.msra.mxu0 0.0
      %1667 = vmatprep.subr.mxu0 0.0
      %1668 = vmatpush1.msra.mxu0 0.0
      %1669 = vmatprep.subr.mxu0 0.0
      %1670 = vmatpush1.msra.mxu0 0.0
      %1671 = vmatprep.subr.mxu0 0.0
      %1672 = vmatpush1.msra.mxu0 0.0
      %1673 = vmatprep.mubr.f32.mxu0 0.0
      %1674 = vmatmul.mubr.f32.gmra.mrb[0].mxu0 %v1577
      %v1675 = vpop.f32.mrb[0].mxu0
      %v1676 = vadd.f32 0.0, %v1675
      %v1677 = vpop.f32.mrb[0].mxu0
      %1678 = vmatprep.mubr.f32.mxu0 0.0
      %1679 = vmatmul.mubr.f32.gmra.mrb[0].mxu0 %v1579
      %v1680 = vpop.f32.mrb[0].mxu0
      %v1681 = vadd.f32 0.0, %v1680
      %v1682 = vpop.f32.mrb[0].mxu0
      %1683 = vmatprep.mubr.f32.mxu0 0.0
      %1684 = vmatmul.mubr.f32.gmra.mrb[0].mxu0 %v1581
      %v1685 = vpop.f32.mrb[0].mxu0
      %v1686 = vadd.f32 0.0, %v1685
      %v1687 = vpop.f32.mrb[0].mxu0
      %1688 = vmatprep.mubr.f32.mxu0 0.0
      %1689 = vmatmul.mubr.f32.gmra.mrb[0].mxu0 %v1583
      %v1690 = vpop.f32.mrb[0].mxu0
      %v1691 = vadd.f32 0.0, %v1690
      %v1692 = vpop.f32.mrb[0].mxu0
      %1693 = vmatprep.mubr.f32.mxu0 0.0
      %1694 = vmatmul.mubr.f32.gmra.mrb[0].mxu0 %v1585
      %v1695 = vpop.f32.mrb[0].mxu0
      %v1696 = vadd.f32 0.0, %v1695
      %v1697 = vpop.f32.mrb[0].mxu0
      %1698 = vmatprep.mubr.f32.mxu0 0.0
      %1699 = vmatmul.mubr.f32.gmra.mrb[0].mxu0 %v1587
      %v1700 = vpop.f32.mrb[0].mxu0
      %v1701 = vadd.f32 0.0, %v1700
      %v1702 = vpop.f32.mrb[0].mxu0
      %1703 = vmatprep.mubr.f32.mxu0 0.0
      %1704 = vmatmul.mubr.f32.gmra.mrb[0].mxu0 %v1589
      %v1705 = vpop.f32.mrb[0].mxu0
      %v1706 = vadd.f32 0.0, %v1705
      %v1707 = vpop.f32.mrb[0].mxu0
      %1708 = vmatprep.mubr.f32.mxu0 0.0
      %1709 = vmatmul.mubr.f32.gmra.mrb[0].mxu0 %v1591
      %v1710 = vpop.f32.mrb[0].mxu0
      %v1711 = vadd.f32 0.0, %v1710
      %v1712 = vpop.f32.mrb[0].mxu0
      %1713 = vdwg.mxu0
      %v1714 = vadd.f32 %v1568, %v1676
      %v1715 = vadd.f32 %v1569, %v1681
      %v1716 = vadd.f32 %v1570, %v1686
      %v1717 = vadd.f32 %v1571, %v1691
      %v1718 = vadd.f32 %v1572, %v1696
      %v1719 = vadd.f32 %v1573, %v1701
      %v1720 = vadd.f32 %v1574, %v1706
      %v1721 = vadd.f32 %v1575, %v1711
      %1722 = vst [vmem:[%s197] sm:$0xff] %v1714
      %1723 = vst [vmem:[%s197 + $0x8] sm:$0xff] %v1715
      %1724 = vst [vmem:[%s197 + $0x10] sm:$0xff] %v1716
      %1725 = vst [vmem:[%s197 + $0x18] sm:$0xff] %v1717
      %1726 = vst [vmem:[%s197 + $0x20] sm:$0xff] %v1718
      %1727 = vst [vmem:[%s197 + $0x28] sm:$0xff] %v1719
      %1728 = vst [vmem:[%s197 + $0x30] sm:$0xff] %v1720
      %1729 = vst [vmem:[%s197 + $0x38] sm:$0xff] %v1721
      %p1730 = scmp.lt.s32.totalorder %s15, 1
      %s1731 = scalar_select %p1730, %s15, 1
      %s1732 = smul.addr %s1731, 8
      %s1733 = smul.addr %s1732, 8
      %s1734 = scalar_lea.vmem %s4, %s1733
      // Predicated region
      $region37: #{basic_block_forward.2} parent=35 // pred_check
        %p1735 = pneg %p122
      $region38: #{basic_block_forward.2} parent=35 // pred_check_branch
        %1737 = sbr.rel (%p1735) target = $region40
      $region39: #{basic_block_forward.2} parent=35 // pred_region
        _
      $region40: #{basic_block_forward.2} parent=35 // pred_fallthru
        _
    $region36: #{basic_block_forward.2} parent=5 // pred_fallthru
      _
    %p1738 = scmp.le.s32.totalorder 2, %s10
    // Predicated region
    $region41: #{basic_block_forward.2} parent=5 // pred_check
      %p1739 = pneg %p1738
    $region42: #{basic_block_forward.2} parent=5 // pred_check_branch
      %1741 = sbr.rel (%p1739) target = $region44
    $region43: #{basic_block_forward.2} parent=5 // pred_region
      %s1742 = ssub.s32 %s10, 2
      // Predicated region
      $region45: #{basic_block_forward.2} parent=43 // pred_check
        %p1743 = pneg %p128
      $region46: #{basic_block_forward.2} parent=43 // pred_check_branch
        %1745 = sbr.rel (%p1743) target = $region48
      $region47: #{basic_block_forward.2} parent=43 // pred_region
        %p1746 = scmp.lt.s32.totalorder %s16, 1
        %s1747 = scalar_select %p1746, %s16, 1
        %s1748 = smul.addr %s1747, 8
        %s1749 = smul.addr %s1748, 8
        %s1750 = scalar_lea.vmem %s4, %s1749
      $region48: #{basic_block_forward.2} parent=43 // pred_fallthru
        _
    $region44: #{basic_block_forward.2} parent=5 // pred_fallthru
      _
  $region6: #{basic_block_forward.2} parent=0 // loop_footer
    %s14 = sadd.s32 1, %s10
  $region7: #{basic_block_forward.2} parent=0 // loop_footer_branch
    %9 = sbr.rel target = $region3
  $region8: #{basic_block_forward.2} parent=0 // loop_exit
    _

// kernel: basic_block_forward.3
$region0: #{basic_block_forward.3}
  #allocation0 [shape = 'u32[]', space=smem, size = 0x4, offset = 0x4, fixed_abs, tag = 'smem constant byte address 0x4 - core index']
  #allocation1 [shape = 'u32[144,128]{1,0:T(1,128)}', space=vmem, size = 0x12000, scoped, tag = 'internal scratch']
  #allocation2 [shape = 'f32[10,10,128]{2,1,0:T(8,128)}', space=vmem, size = 0x14000, scoped, tag = 'scratch operand']
  %s0 = inlined_call_operand.vmem [shape: f32[2,8,8,128], index: 0, kind: input, shape index: {}]
  %s1 = inlined_call_operand.vmem [shape: f32[1,128], index: 1, kind: input, shape index: {}]
  %s2 = inlined_call_operand.vmem [shape: f32[1,128], index: 2, kind: input, shape index: {}]
  %s3 = inlined_call_operand.vmem [shape: f32[9,128,128], index: 3, kind: input, shape index: {}]
  %s4 = inlined_call_operand.vmem [shape: f32[2,64,128], index: 4, kind: input, shape index: {}]
  %s5 = inlined_call_operand.vmem [shape: f32[1,128], index: 5, kind: input, shape index: {}]
  %s6 = inlined_call_operand.vmem [shape: f32[1,128], index: 6, kind: input, shape index: {}]
  %s7 = inlined_call_operand.vmem [shape: f32[128,128], index: 7, kind: input, shape index: {}]
  %s8 = inlined_call_operand.vmem [shape: f32[2,64,128], index: 8, kind: output, shape index: {}]
  %s9 = sld [smem:[#allocation0]]
  $region65: #{basic_block_forward.3} parent=0
    _
  %s11 = ssub.s32 1, %s9
  %s12 = scalar_select 0, %s11, %s9
  loop: start=0, step=1, limit=4
  $region2: #{basic_block_forward.3} parent=0 // loop_pre_header
    _
  $region3: #{basic_block_forward.3} parent=0 // loop_header
    %s14 = sphi 0, %s18
    %p15 = scmp.ge.s32.totalorder %s14, 4
    %s24 = sphi 0, %s26
    %s27 = sphi 0, %s24
    %s28 = sphi 0, %s27
    %s44 = sphi 0, %s28
    %s48 = sphi 0, %s48
    %s50 = sphi 0, %s48
    %s51 = sphi 0, %s50
    %s65 = sphi 0, %s51
    %s69 = sphi 0, %s69
    %s71 = sphi 0, %s69
    %s72 = sphi 0, %s71
    %s86 = sphi 0, %s72
    %s90 = sphi 0, %s90
    %s92 = sphi 0, %s90
    %s93 = sphi 0, %s92
    %s107 = sphi 0, %s93
    %s113 = sphi 0, %s115
    %s116 = sphi 0, %s113
    %s117 = sphi 0, %s116
    %s133 = sphi 0, %s117
    %s137 = sphi 0, %s137
    %s139 = sphi 0, %s137
    %s140 = sphi 0, %s139
    %s154 = sphi 0, %s140
    %s158 = sphi 0, %s158
    %s160 = sphi 0, %s158
    %s161 = sphi 0, %s160
    %s175 = sphi 0, %s161
    %s179 = sphi 0, %s179
    %s181 = sphi 0, %s179
    %s182 = sphi 0, %s181
    %s196 = sphi 0, %s182
    %s202 = sphi 0, %s204
    %s205 = sphi 0, %s202
    %s206 = sphi 0, %s205
    %s222 = sphi 0, %s206
  $region4: #{basic_block_forward.3} parent=0 // loop_header_branch
    %17 = sbr.rel (%p15) target = $region8
  $region5: #{basic_block_forward.3} parent=0 // loop_body
    %s19 = ssub.s32 %s14, 1
    %s20 = ssub.s32 %s14, 2
    %s21 = sadd.s32 %s14, 1
    %s22 = ssub.s32 %s14, %s21
    %p23 = scmp.eq.s32.totalorder %s22, 0
    %s25 = sadd.s32 %s24, 1
    %s26 = scalar_select %p23, %s24, %s25
    %p29 = pneg %p23
    %p30 = scmp.eq.s32.totalorder %s14, 1
    %p31 = por %p29, %p30
    %p32 = scmp.ne.s32.totalorder %s24, %s27
    %p33 = scmp.eq.s32.totalorder %s14, 0
    %p34 = por %p32, %p33
    %p35 = scmp.ne.s32.totalorder %s24, %s27
    %p36 = scmp.eq.s32.totalorder %s19, 1
    %p37 = por %p35, %p36
    %p38 = scmp.ne.s32.totalorder %s27, %s28
    %p39 = scmp.eq.s32.totalorder %s19, 0
    %p40 = por %p38, %p39
    %p41 = scmp.ne.s32.totalorder %s27, %s28
    %p42 = scmp.eq.s32.totalorder %s20, 1
    %p43 = por %p41, %p42
    %p45 = scmp.ne.s32.totalorder %s28, %s44
    %p46 = scmp.eq.s32.totalorder %s20, 0
    %p47 = por %p45, %p46
    %s49 = sadd.s32 %s48, 1
    %p52 = scmp.eq.s32.totalorder %s14, 1
    %p53 = scmp.ne.s32.totalorder %s48, %s50
    %p54 = scmp.eq.s32.totalorder %s14, 0
    %p55 = por %p53, %p54
    %p56 = scmp.ne.s32.totalorder %s48, %s50
    %p57 = scmp.eq.s32.totalorder %s19, 1
    %p58 = por %p56, %p57
    %p59 = scmp.ne.s32.totalorder %s50, %s51
    %p60 = scmp.eq.s32.totalorder %s19, 0
    %p61 = por %p59, %p60
    %p62 = scmp.ne.s32.totalorder %s50, %s51
    %p63 = scmp.eq.s32.totalorder %s20, 1
    %p64 = por %p62, %p63
    %p66 = scmp.ne.s32.totalorder %s51, %s65
    %p67 = scmp.eq.s32.totalorder %s20, 0
    %p68 = por %p66, %p67
    %s70 = sadd.s32 %s69, 1
    %p73 = scmp.eq.s32.totalorder %s14, 1
    %p74 = scmp.ne.s32.totalorder %s69, %s71
    %p75 = scmp.eq.s32.totalorder %s14, 0
    %p76 = por %p74, %p75
    %p77 = scmp.ne.s32.totalorder %s69, %s71
    %p78 = scmp.eq.s32.totalorder %s19, 1
    %p79 = por %p77, %p78
    %p80 = scmp.ne.s32.totalorder %s71, %s72
    %p81 = scmp.eq.s32.totalorder %s19, 0
    %p82 = por %p80, %p81
    %p83 = scmp.ne.s32.totalorder %s71, %s72
    %p84 = scmp.eq.s32.totalorder %s20, 1
    %p85 = por %p83, %p84
    %p87 = scmp.ne.s32.totalorder %s72, %s86
    %p88 = scmp.eq.s32.totalorder %s20, 0
    %p89 = por %p87, %p88
    %s91 = sadd.s32 %s90, 1
    %p94 = scmp.eq.s32.totalorder %s14, 1
    %p95 = scmp.ne.s32.totalorder %s90, %s92
    %p96 = scmp.eq.s32.totalorder %s14, 0
    %p97 = por %p95, %p96
    %p98 = scmp.ne.s32.totalorder %s90, %s92
    %p99 = scmp.eq.s32.totalorder %s19, 1
    %p100 = por %p98, %p99
    %p101 = scmp.ne.s32.totalorder %s92, %s93
    %p102 = scmp.eq.s32.totalorder %s19, 0
    %p103 = por %p101, %p102
    %p104 = scmp.ne.s32.totalorder %s92, %s93
    %p105 = scmp.eq.s32.totalorder %s20, 1
    %p106 = por %p104, %p105
    %p108 = scmp.ne.s32.totalorder %s93, %s107
    %p109 = scmp.eq.s32.totalorder %s20, 0
    %p110 = por %p108, %p109
    %s111 = ssub.s32 %s14, %s21
    %p112 = scmp.eq.s32.totalorder %s111, 0
    %s114 = sadd.s32 %s113, 1
    %s115 = scalar_select %p112, %s113, %s114
    %p118 = pneg %p112
    %p119 = scmp.eq.s32.totalorder %s14, 1
    %p120 = por %p118, %p119
    %p121 = scmp.ne.s32.totalorder %s113, %s116
    %p122 = scmp.eq.s32.totalorder %s14, 0
    %p123 = por %p121, %p122
    %p124 = scmp.ne.s32.totalorder %s113, %s116
    %p125 = scmp.eq.s32.totalorder %s19, 1
    %p126 = por %p124, %p125
    %p127 = scmp.ne.s32.totalorder %s116, %s117
    %p128 = scmp.eq.s32.totalorder %s19, 0
    %p129 = por %p127, %p128
    %p130 = scmp.ne.s32.totalorder %s116, %s117
    %p131 = scmp.eq.s32.totalorder %s20, 1
    %p132 = por %p130, %p131
    %p134 = scmp.ne.s32.totalorder %s117, %s133
    %p135 = scmp.eq.s32.totalorder %s20, 0
    %p136 = por %p134, %p135
    %s138 = sadd.s32 %s137, 1
    %p141 = scmp.eq.s32.totalorder %s14, 1
    %p142 = scmp.ne.s32.totalorder %s137, %s139
    %p143 = scmp.eq.s32.totalorder %s14, 0
    %p144 = por %p142, %p143
    %p145 = scmp.ne.s32.totalorder %s137, %s139
    %p146 = scmp.eq.s32.totalorder %s19, 1
    %p147 = por %p145, %p146
    %p148 = scmp.ne.s32.totalorder %s139, %s140
    %p149 = scmp.eq.s32.totalorder %s19, 0
    %p150 = por %p148, %p149
    %p151 = scmp.ne.s32.totalorder %s139, %s140
    %p152 = scmp.eq.s32.totalorder %s20, 1
    %p153 = por %p151, %p152
    %p155 = scmp.ne.s32.totalorder %s140, %s154
    %p156 = scmp.eq.s32.totalorder %s20, 0
    %p157 = por %p155, %p156
    %s159 = sadd.s32 %s158, 1
    %p162 = scmp.eq.s32.totalorder %s14, 1
    %p163 = scmp.ne.s32.totalorder %s158, %s160
    %p164 = scmp.eq.s32.totalorder %s14, 0
    %p165 = por %p163, %p164
    %p166 = scmp.ne.s32.totalorder %s158, %s160
    %p167 = scmp.eq.s32.totalorder %s19, 1
    %p168 = por %p166, %p167
    %p169 = scmp.ne.s32.totalorder %s160, %s161
    %p170 = scmp.eq.s32.totalorder %s19, 0
    %p171 = por %p169, %p170
    %p172 = scmp.ne.s32.totalorder %s160, %s161
    %p173 = scmp.eq.s32.totalorder %s20, 1
    %p174 = por %p172, %p173
    %p176 = scmp.ne.s32.totalorder %s161, %s175
    %p177 = scmp.eq.s32.totalorder %s20, 0
    %p178 = por %p176, %p177
    %s180 = sadd.s32 %s179, 1
    %p183 = scmp.eq.s32.totalorder %s14, 1
    %p184 = scmp.ne.s32.totalorder %s179, %s181
    %p185 = scmp.eq.s32.totalorder %s14, 0
    %p186 = por %p184, %p185
    %p187 = scmp.ne.s32.totalorder %s179, %s181
    %p188 = scmp.eq.s32.totalorder %s19, 1
    %p189 = por %p187, %p188
    %p190 = scmp.ne.s32.totalorder %s181, %s182
    %p191 = scmp.eq.s32.totalorder %s19, 0
    %p192 = por %p190, %p191
    %p193 = scmp.ne.s32.totalorder %s181, %s182
    %p194 = scmp.eq.s32.totalorder %s20, 1
    %p195 = por %p193, %p194
    %p197 = scmp.ne.s32.totalorder %s182, %s196
    %p198 = scmp.eq.s32.totalorder %s20, 0
    %p199 = por %p197, %p198
    %s200 = ssub.s32 %s14, %s21
    %p201 = scmp.eq.s32.totalorder %s200, 0
    %s203 = sadd.s32 %s202, 1
    %s204 = scalar_select %p201, %s202, %s203
    %p207 = pneg %p201
    %p208 = scmp.eq.s32.totalorder %s14, 1
    %p209 = por %p207, %p208
    %p210 = scmp.ne.s32.totalorder %s202, %s205
    %p211 = scmp.eq.s32.totalorder %s14, 0
    %p212 = por %p210, %p211
    %p213 = scmp.ne.s32.totalorder %s202, %s205
    %p214 = scmp.eq.s32.totalorder %s19, 1
    %p215 = por %p213, %p214
    %p216 = scmp.ne.s32.totalorder %s205, %s206
    %p217 = scmp.eq.s32.totalorder %s19, 0
    %p218 = por %p216, %p217
    %p219 = scmp.ne.s32.totalorder %s205, %s206
    %p220 = scmp.eq.s32.totalorder %s20, 1
    %p221 = por %p219, %p220
    %p223 = scmp.ne.s32.totalorder %s206, %s222
    %p224 = scmp.eq.s32.totalorder %s20, 0
    %p225 = por %p223, %p224
    %p226 = scmp.le.s32.totalorder 1, %s14
    %p227 = scmp.lt.s32.totalorder %s14, 3
    %p228 = pnand %p226, %p227
    %p229 = pneg %p228
    // Predicated region
    $region9: #{basic_block_forward.3} parent=5 // pred_check
      _
    $region10: #{basic_block_forward.3} parent=5 // pred_check_branch
      %231 = sbr.rel (%p228) target = $region12
    $region11: #{basic_block_forward.3} parent=5 // pred_region
      %s232 = ssub.s32 %s14, 1
      // Predicated region
      $region13: #{basic_block_forward.3} parent=11 // pred_check
        %p233 = pneg %p61
      $region14: #{basic_block_forward.3} parent=11 // pred_check_branch
        %235 = sbr.rel (%p233) target = $region16
      $region15: #{basic_block_forward.3} parent=11 // pred_region
        _
      $region16: #{basic_block_forward.3} parent=11 // pred_fallthru
        _
      // Predicated region
      $region17: #{basic_block_forward.3} parent=11 // pred_check
        %p236 = pneg %p82
      $region18: #{basic_block_forward.3} parent=11 // pred_check_branch
        %238 = sbr.rel (%p236) target = $region20
      $region19: #{basic_block_forward.3} parent=11 // pred_region
        _
      $region20: #{basic_block_forward.3} parent=11 // pred_fallthru
        _
      // Predicated region
      $region21: #{basic_block_forward.3} parent=11 // pred_check
        %p239 = pneg %p103
      $region22: #{basic_block_forward.3} parent=11 // pred_check_branch
        %241 = sbr.rel (%p239) target = $region24
      $region23: #{basic_block_forward.3} parent=11 // pred_region
        _
      $region24: #{basic_block_forward.3} parent=11 // pred_fallthru
        _
      // Predicated region
      $region25: #{basic_block_forward.3} parent=11 // pred_check
        %p242 = pneg %p150
      $region26: #{basic_block_forward.3} parent=11 // pred_check_branch
        %244 = sbr.rel (%p242) target = $region28
      $region27: #{basic_block_forward.3} parent=11 // pred_region
        _
      $region28: #{basic_block_forward.3} parent=11 // pred_fallthru
        _
      // Predicated region
      $region29: #{basic_block_forward.3} parent=11 // pred_check
        %p245 = pneg %p171
      $region30: #{basic_block_forward.3} parent=11 // pred_check_branch
        %247 = sbr.rel (%p245) target = $region32
      $region31: #{basic_block_forward.3} parent=11 // pred_region
        _
      $region32: #{basic_block_forward.3} parent=11 // pred_fallthru
        _
      // Predicated region
      $region33: #{basic_block_forward.3} parent=11 // pred_check
        %p248 = pneg %p192
      $region34: #{basic_block_forward.3} parent=11 // pred_check_branch
        %250 = sbr.rel (%p248) target = $region36
      $region35: #{basic_block_forward.3} parent=11 // pred_region
        _
      $region36: #{basic_block_forward.3} parent=11 // pred_fallthru
        _
    $region12: #{basic_block_forward.3} parent=5 // pred_fallthru
      _
    %p251 = scmp.lt.s32.totalorder %s14, 2
    // Predicated region
    $region37: #{basic_block_forward.3} parent=5 // pred_check
      %p252 = pneg %p251
    $region38: #{basic_block_forward.3} parent=5 // pred_check_branch
      %254 = sbr.rel (%p252) target = $region40
    $region39: #{basic_block_forward.3} parent=5 // pred_region
      // Predicated region
      $region41: #{basic_block_forward.3} parent=39 // pred_check
        %p255 = pneg %p34
      $region42: #{basic_block_forward.3} parent=39 // pred_check_branch
        %257 = sbr.rel (%p255) target = $region44
      $region43: #{basic_block_forward.3} parent=39 // pred_region
        %p258 = scmp.lt.s32.totalorder %s14, 1
        %s259 = scalar_select %p258, %s14, 1
        %s260 = smul.addr %s259, 8
        %s261 = smul.addr %s260, 8
        %s262 = scalar_lea.vmem %s0, %s261
      $region44: #{basic_block_forward.3} parent=39 // pred_fallthru
        _
      // Predicated region
      $region45: #{basic_block_forward.3} parent=39 // pred_check
        %p263 = pneg %p123
      $region46: #{basic_block_forward.3} parent=39 // pred_check_branch
        %265 = sbr.rel (%p263) target = $region48
      $region47: #{basic_block_forward.3} parent=39 // pred_region
        %p266 = scmp.lt.s32.totalorder %s14, 1
        %s267 = scalar_select %p266, %s14, 1
        %s268 = smul.addr %s267, 8
        %s269 = smul.addr %s268, 8
        %s270 = scalar_lea.vmem %s4, %s269
      $region48: #{basic_block_forward.3} parent=39 // pred_fallthru
        _
    $region40: #{basic_block_forward.3} parent=5 // pred_fallthru
      _
    %p271 = scmp.le.s32.totalorder 1, %s14
    %p272 = scmp.lt.s32.totalorder %s14, 3
    %p273 = pnand %p271, %p272
    %p274 = pneg %p273
    // Predicated region
    $region49: #{basic_block_forward.3} parent=5 // pred_check
      _
    $region50: #{basic_block_forward.3} parent=5 // pred_check_branch
      %276 = sbr.rel (%p273) target = $region52
    $region51: #{basic_block_forward.3} parent=5 // pred_region
      %s277 = ssub.s32 %s14, 1
      %p278 = scmp.lt.s32.totalorder %s19, 1
      %s279 = scalar_select %p278, %s19, 1
      %s280 = smul.addr %s279, 8
      %s281 = smul.addr %s280, 8
      %s282 = scalar_lea.vmem %s0, %s281
      %p283 = pneg %p40
      %p284 = pneg %p37
      %p285 = pneg %p61
      %p286 = pneg %p58
      %p287 = pneg %p82
      %p288 = pneg %p79
      %p289 = pneg %p103
      %p290 = pneg %p100
      %p291 = scmp.lt.s32.totalorder %s19, 1
      %s292 = scalar_select %p291, %s19, 1
      %s293 = smul.addr %s292, 8
      %s294 = smul.addr %s293, 8
      %s295 = scalar_lea.vmem %s4, %s294
      %p296 = pneg %p129
      %p297 = pneg %p126
      %p298 = pneg %p150
      %p299 = pneg %p147
      %p300 = pneg %p171
      %p301 = pneg %p168
      %p302 = pneg %p192
      %p303 = pneg %p189
      %p304 = pneg %p218
      %p305 = pneg %p215
      %p306 = scmp.lt.s32.totalorder %s19, 1
      %s307 = scalar_select %p306, %s19, 1
      %s308 = smul.addr %s307, 8
      %s309 = smul.addr %s308, 8
      %s310 = scalar_lea.vmem %s8, %s309
      %p311 = scmp.lt.s32.totalorder %s19, 1
      %s312 = scalar_select %p311, %s19, 1
      %s313 = smul.addr %s312, 8
      %s314 = smul.addr %s313, 8
      %s315 = scalar_lea.vmem %s0, %s314
      %p316 = scmp.lt.s32.totalorder %s19, 1
      %s317 = scalar_select %p316, %s19, 1
      %s318 = smul.addr %s317, 8
      %s319 = smul.addr %s318, 8
      %s320 = scalar_lea.vmem %s4, %s319
      %p321 = scmp.lt.s32.totalorder %s19, 1
      %s322 = scalar_select %p321, %s19, 1
      %s323 = smul.addr %s322, 8
      %s324 = smul.addr %s323, 8
      %s325 = scalar_lea.vmem %s8, %s324
      %326 = vst [vmem:[#allocation2] sm:$0xff] 0.0
      %327 = vst [vmem:[#allocation2 + $0x8] sm:$0x3] 0.0
      %328 = vst [vmem:[#allocation2 + $0x10] sm:$0xff] 0.0
      %329 = vst [vmem:[#allocation2 + $0x18] sm:$0x3] 0.0
      %330 = vst [vmem:[#allocation2 + $0x20] sm:$0xff] 0.0
      %331 = vst [vmem:[#allocation2 + $0x28] sm:$0x3] 0.0
      %332 = vst [vmem:[#allocation2 + $0x30] sm:$0xff] 0.0
      %333 = vst [vmem:[#allocation2 + $0x38] sm:$0x3] 0.0
      %334 = vst [vmem:[#allocation2 + $0x40] sm:$0xff] 0.0
      %335 = vst [vmem:[#allocation2 + $0x48] sm:$0x3] 0.0
      %336 = vst [vmem:[#allocation2 + $0x50] sm:$0xff] 0.0
      %337 = vst [vmem:[#allocation2 + $0x58] sm:$0x3] 0.0
      %338 = vst [vmem:[#allocation2 + $0x60] sm:$0xff] 0.0
      %339 = vst [vmem:[#allocation2 + $0x68] sm:$0x3] 0.0
      %340 = vst [vmem:[#allocation2 + $0x70] sm:$0xff] 0.0
      %341 = vst [vmem:[#allocation2 + $0x78] sm:$0x3] 0.0
      %342 = vst [vmem:[#allocation2 + $0x80] sm:$0xff] 0.0
      %343 = vst [vmem:[#allocation2 + $0x88] sm:$0x3] 0.0
      %344 = vst [vmem:[#allocation2 + $0x90] sm:$0xff] 0.0
      %345 = vst [vmem:[#allocation2 + $0x98] sm:$0x3] 0.0
      %v346 = vld [vmem:[%s315] sm:$0xff]
      %v347 = vld [vmem:[%s315 + $0x8] sm:$0xff]
      %v348 = vld [vmem:[%s315 + $0x10] sm:$0xff]
      %v349 = vld [vmem:[%s315 + $0x18] sm:$0xff]
      %v350 = vld [vmem:[%s315 + $0x20] sm:$0xff]
      %v351 = vld [vmem:[%s315 + $0x28] sm:$0xff]
      %v352 = vld [vmem:[%s315 + $0x30] sm:$0xff]
      %v353 = vld [vmem:[%s315 + $0x38] sm:$0xff]
      %v354 = vld [vmem:[%s1] sm:$0x1]
      %v356 = vlaneseq
      %v357 = vshrl.u32 %v356, 7
      %v358 = vsub.s32 0, %v357
      %v359 = vrot.slane %v354, %v358
      %v361 = vmul.f32 %v346, %v359
      %v362 = vmul.f32 %v347, %v359
      %v363 = vmul.f32 %v348, %v359
      %v364 = vmul.f32 %v349, %v359
      %v365 = vmul.f32 %v350, %v359
      %v366 = vmul.f32 %v351, %v359
      %v367 = vmul.f32 %v352, %v359
      %v368 = vmul.f32 %v353, %v359
      %v369 = vld [vmem:[%s2] sm:$0x1]
      %v371 = vlaneseq
      %v372 = vshrl.u32 %v371, 7
      %v373 = vsub.s32 0, %v372
      %v374 = vrot.slane %v369, %v373
      %v376 = vadd.f32 %v361, %v374
      %v377 = vadd.f32 %v362, %v374
      %v378 = vadd.f32 %v363, %v374
      %v379 = vadd.f32 %v364, %v374
      %v380 = vadd.f32 %v365, %v374
      %v381 = vadd.f32 %v366, %v374
      %v382 = vadd.f32 %v367, %v374
      %v383 = vadd.f32 %v368, %v374
      %v384 = vmax.f32 %v376, 0.0
      %v385 = vmax.f32 %v377, 0.0
      %v386 = vmax.f32 %v378, 0.0
      %v387 = vmax.f32 %v379, 0.0
      %v388 = vmax.f32 %v380, 0.0
      %v389 = vmax.f32 %v381, 0.0
      %v390 = vmax.f32 %v382, 0.0
      %v391 = vmax.f32 %v383, 0.0
      %s392 = scalar_lea.vmem [#allocation2], 16
      %393 = vst [vmem:[%s392 + $0x1] sm:$0xff] %v384
      %394 = vst [vmem:[%s392 + $0x11] sm:$0xff] %v385
      %395 = vst [vmem:[%s392 + $0x21] sm:$0xff] %v386
      %396 = vst [vmem:[%s392 + $0x31] sm:$0xff] %v387
      %397 = vst [vmem:[%s392 + $0x41] sm:$0xff] %v388
      %398 = vst [vmem:[%s392 + $0x51] sm:$0xff] %v389
      %399 = vst [vmem:[%s392 + $0x61] sm:$0xff] %v390
      %400 = vst [vmem:[%s392 + $0x71] sm:$0xff] %v391
      %v401 = vld [vmem:[#allocation2] sm:$0xff]
      %v402 = vld [vmem:[#allocation2 + $0x10] sm:$0xff]
      %v403 = vld [vmem:[#allocation2 + $0x20] sm:$0xff]
      %v404 = vld [vmem:[#allocation2 + $0x30] sm:$0xff]
      %v405 = vld [vmem:[#allocation2 + $0x40] sm:$0xff]
      %v406 = vld [vmem:[#allocation2 + $0x50] sm:$0xff]
      %v407 = vld [vmem:[#allocation2 + $0x60] sm:$0xff]
      %v408 = vld [vmem:[#allocation2 + $0x70] sm:$0xff]
      %v409 = vld [vmem:[%s3] sm:$0xff]
      %v410 = vld [vmem:[%s3 + $0x8] sm:$0xff]
      %v411 = vld [vmem:[%s3 + $0x10] sm:$0xff]
      %v412 = vld [vmem:[%s3 + $0x18] sm:$0xff]
      %v413 = vld [vmem:[%s3 + $0x20] sm:$0xff]
      %v414 = vld [vmem:[%s3 + $0x28] sm:$0xff]
      %v415 = vld [vmem:[%s3 + $0x30] sm:$0xff]
      %v416 = vld [vmem:[%s3 + $0x38] sm:$0xff]
      %v417 = vld [vmem:[%s3 + $0x40] sm:$0xff]
      %v418 = vld [vmem:[%s3 + $0x48] sm:$0xff]
      %v419 = vld [vmem:[%s3 + $0x50] sm:$0xff]
      %v420 = vld [vmem:[%s3 + $0x58] sm:$0xff]
      %v421 = vld [vmem:[%s3 + $0x60] sm:$0xff]
      %v422 = vld [vmem:[%s3 + $0x68] sm:$0xff]
      %v423 = vld [vmem:[%s3 + $0x70] sm:$0xff]
      %v424 = vld [vmem:[%s3 + $0x78] sm:$0xff]
      %v425 = vld [vmem:[#allocation2 + $0x1] sm:$0xff]
      %v426 = vld [vmem:[#allocation2 + $0x11] sm:$0xff]
      %v427 = vld [vmem:[#allocation2 + $0x21] sm:$0xff]
      %v428 = vld [vmem:[#allocation2 + $0x31] sm:$0xff]
      %v429 = vld [vmem:[#allocation2 + $0x41] sm:$0xff]
      %v430 = vld [vmem:[#allocation2 + $0x51] sm:$0xff]
      %v431 = vld [vmem:[#allocation2 + $0x61] sm:$0xff]
      %v432 = vld [vmem:[#allocation2 + $0x71] sm:$0xff]
      %s433 = scalar_lea.vmem %s3, 128
      %v434 = vld [vmem:[%s433] sm:$0xff]
      %v435 = vld [vmem:[%s433 + $0x8] sm:$0xff]
      %v436 = vld [vmem:[%s433 + $0x10] sm:$0xff]
      %v437 = vld [vmem:[%s433 + $0x18] sm:$0xff]
      %v438 = vld [vmem:[%s433 + $0x20] sm:$0xff]
      %v439 = vld [vmem:[%s433 + $0x28] sm:$0xff]
      %v440 = vld [vmem:[%s433 + $0x30] sm:$0xff]
      %v441 = vld [vmem:[%s433 + $0x38] sm:$0xff]
      %v442 = vld [vmem:[%s433 + $0x40] sm:$0xff]
      %v443 = vld [vmem:[%s433 + $0x48] sm:$0xff]
      %v444 = vld [vmem:[%s433 + $0x50] sm:$0xff]
      %v445 = vld [vmem:[%s433 + $0x58] sm:$0xff]
      %v446 = vld [vmem:[%s433 + $0x60] sm:$0xff]
      %v447 = vld [vmem:[%s433 + $0x68] sm:$0xff]
      %v448 = vld [vmem:[%s433 + $0x70] sm:$0xff]
      %v449 = vld [vmem:[%s433 + $0x78] sm:$0xff]
      %450 = vmatprep.subr.mxu0 0.0
      %451 = vmatpush1.msra.mxu0 %v434
      %452 = vmatprep.subr.mxu0 0.0
      %453 = vmatpush1.msra.mxu0 %v435
      %454 = vmatprep.subr.mxu0 0.0
      %455 = vmatpush1.msra.mxu0 %v436
      %456 = vmatprep.subr.mxu0 0.0
      %457 = vmatpush1.msra.mxu0 %v437
      %458 = vmatprep.subr.mxu0 0.0
      %459 = vmatpush1.msra.mxu0 %v438
      %460 = vmatprep.subr.mxu0 0.0
      %461 = vmatpush1.msra.mxu0 %v439
      %462 = vmatprep.subr.mxu0 0.0
      %463 = vmatpush1.msra.mxu0 %v440
      %464 = vmatprep.subr.mxu0 0.0
      %465 = vmatpush1.msra.mxu0 %v441
      %466 = vmatprep.subr.mxu0 0.0
      %467 = vmatpush1.msra.mxu0 %v442
      %468 = vmatprep.subr.mxu0 0.0
      %469 = vmatpush1.msra.mxu0 %v443
      %470 = vmatprep.subr.mxu0 0.0
      %471 = vmatpush1.msra.mxu0 %v444
      %472 = vmatprep.subr.mxu0 0.0
      %473 = vmatpush1.msra.mxu0 %v445
      %474 = vmatprep.subr.mxu0 0.0
      %475 = vmatpush1.msra.mxu0 %v446
      %476 = vmatprep.subr.mxu0 0.0
      %477 = vmatpush1.msra.mxu0 %v447
      %478 = vmatprep.subr.mxu0 0.0
      %479 = vmatpush1.msra.mxu0 %v448
      %480 = vmatprep.subr.mxu0 0.0
      %481 = vmatpush1.msra.mxu0 %v449
      %482 = vmatprep.subr.mxu0 0.0
      %483 = vmatpush1.msra.mxu0 0.0
      %484 = vmatprep.subr.mxu0 0.0
      %485 = vmatpush1.msra.mxu0 0.0
      %486 = vmatprep.subr.mxu0 0.0
      %487 = vmatpush1.msra.mxu0 0.0
      %488 = vmatprep.subr.mxu0 0.0
      %489 = vmatpush1.msra.mxu0 0.0
      %490 = vmatprep.subr.mxu0 0.0
      %491 = vmatpush1.msra.mxu0 0.0
      %492 = vmatprep.subr.mxu0 0.0
      %493 = vmatpush1.msra.mxu0 0.0
      %494 = vmatprep.subr.mxu0 0.0
      %495 = vmatpush1.msra.mxu0 0.0
      %496 = vmatprep.subr.mxu0 0.0
      %497 = vmatpush1.msra.mxu0 0.0
      %498 = vmatprep.subr.mxu0 0.0
      %499 = vmatpush1.msra.mxu0 0.0
      %500 = vmatprep.subr.mxu0 0.0
      %501 = vmatpush1.msra.mxu0 0.0
      %502 = vmatprep.subr.mxu0 0.0
      %503 = vmatpush1.msra.mxu0 0.0
      %504 = vmatprep.subr.mxu0 0.0
      %505 = vmatpush1.msra.mxu0 0.0
      %506 = vmatprep.subr.mxu0 0.0
      %507 = vmatpush1.msra.mxu0 0.0
      %508 = vmatprep.subr.mxu0 0.0
      %509 = vmatpush1.msra.mxu0 0.0
      %510 = vmatprep.subr.mxu0 0.0
      %511 = vmatpush1.msra.mxu0 0.0
      %512 = vmatprep.subr.mxu0 0.0
      %513 = vmatpush1.msra.mxu0 0.0
      %514 = vmatprep.mubr.f32.mxu0 0.0
      %515 = vmatmul.mubr.f32.gmra.mrb[0].mxu0 %v425
      %v516 = vpop.f32.mrb[0].mxu0
      %v517 = vadd.f32 0.0, %v516
      %v518 = vpop.f32.mrb[0].mxu0
      %519 = vmatprep.mubr.f32.mxu0 0.0
      %520 = vmatmul.mubr.f32.gmra.mrb[0].mxu0 %v426
      %v521 = vpop.f32.mrb[0].mxu0
      %v522 = vadd.f32 0.0, %v521
      %v523 = vpop.f32.mrb[0].mxu0
      %524 = vmatprep.mubr.f32.mxu0 0.0
      %525 = vmatmul.mubr.f32.gmra.mrb[0].mxu0 %v427
      %v526 = vpop.f32.mrb[0].mxu0
      %v527 = vadd.f32 0.0, %v526
      %v528 = vpop.f32.mrb[0].mxu0
      %529 = vmatprep.mubr.f32.mxu0 0.0
      %530 = vmatmul.mubr.f32.gmra.mrb[0].mxu0 %v428
      %v531 = vpop.f32.mrb[0].mxu0
      %v532 = vadd.f32 0.0, %v531
      %v533 = vpop.f32.mrb[0].mxu0
      %534 = vmatprep.mubr.f32.mxu0 0.0
      %535 = vmatmul.mubr.f32.gmra.mrb[0].mxu0 %v429
      %v536 = vpop.f32.mrb[0].mxu0
      %v537 = vadd.f32 0.0, %v536
      %v538 = vpop.f32.mrb[0].mxu0
      %539 = vmatprep.mubr.f32.mxu0 0.0
      %540 = vmatmul.mubr.f32.gmra.mrb[0].mxu0 %v430
      %v541 = vpop.f32.mrb[0].mxu0
      %v542 = vadd.f32 0.0, %v541
      %v543 = vpop.f32.mrb[0].mxu0
      %544 = vmatprep.mubr.f32.mxu0 0.0
      %545 = vmatmul.mubr.f32.gmra.mrb[0].mxu0 %v431
      %v546 = vpop.f32.mrb[0].mxu0
      %v547 = vadd.f32 0.0, %v546
      %v548 = vpop.f32.mrb[0].mxu0
      %549 = vmatprep.mubr.f32.mxu0 0.0
      %550 = vmatmul.mubr.f32.gmra.mrb[0].mxu0 %v432
      %v551 = vpop.f32.mrb[0].mxu0
      %v552 = vadd.f32 0.0, %v551
      %v553 = vpop.f32.mrb[0].mxu0
      %554 = vdwg.mxu0
      %555 = vmatprep.subr.mxu0 0.0
      %556 = vmatpush1.msra.mxu0 %v409
      %557 = vmatprep.subr.mxu0 0.0
      %558 = vmatpush1.msra.mxu0 %v410
      %559 = vmatprep.subr.mxu0 0.0
      %560 = vmatpush1.msra.mxu0 %v411
      %561 = vmatprep.subr.mxu0 0.0
      %562 = vmatpush1.msra.mxu0 %v412
      %563 = vmatprep.subr.mxu0 0.0
      %564 = vmatpush1.msra.mxu0 %v413
      %565 = vmatprep.subr.mxu0 0.0
      %566 = vmatpush1.msra.mxu0 %v414
      %567 = vmatprep.subr.mxu0 0.0
      %568 = vmatpush1.msra.mxu0 %v415
      %569 = vmatprep.subr.mxu0 0.0
      %570 = vmatpush1.msra.mxu0 %v416
      %571 = vmatprep.subr.mxu0 0.0
      %572 = vmatpush1.msra.mxu0 %v417
      %573 = vmatprep.subr.mxu0 0.0
      %574 = vmatpush1.msra.mxu0 %v418
      %575 = vmatprep.subr.mxu0 0.0
      %576 = vmatpush1.msra.mxu0 %v419
      %577 = vmatprep.subr.mxu0 0.0
      %578 = vmatpush1.msra.mxu0 %v420
      %579 = vmatprep.subr.mxu0 0.0
      %580 = vmatpush1.msra.mxu0 %v421
      %581 = vmatprep.subr.mxu0 0.0
      %582 = vmatpush1.msra.mxu0 %v422
      %583 = vmatprep.subr.mxu0 0.0
      %584 = vmatpush1.msra.mxu0 %v423
      %585 = vmatprep.subr.mxu0 0.0
      %586 = vmatpush1.msra.mxu0 %v424
      %587 = vmatprep.subr.mxu0 0.0
      %588 = vmatpush1.msra.mxu0 0.0
      %589 = vmatprep.subr.mxu0 0.0
      %590 = vmatpush1.msra.mxu0 0.0
      %591 = vmatprep.subr.mxu0 0.0
      %592 = vmatpush1.msra.mxu0 0.0
      %593 = vmatprep.subr.mxu0 0.0
      %594 = vmatpush1.msra.mxu0 0.0
      %595 = vmatprep.subr.mxu0 0.0
      %596 = vmatpush1.msra.mxu0 0.0
      %597 = vmatprep.subr.mxu0 0.0
      %598 = vmatpush1.msra.mxu0 0.0
      %599 = vmatprep.subr.mxu0 0.0
      %600 = vmatpush1.msra.mxu0 0.0
      %601 = vmatprep.subr.mxu0 0.0
      %602 = vmatpush1.msra.mxu0 0.0
      %603 = vmatprep.subr.mxu0 0.0
      %604 = vmatpush1.msra.mxu0 0.0
      %605 = vmatprep.subr.mxu0 0.0
      %606 = vmatpush1.msra.mxu0 0.0
      %607 = vmatprep.subr.mxu0 0.0
      %608 = vmatpush1.msra.mxu0 0.0
      %609 = vmatprep.subr.mxu0 0.0
      %610 = vmatpush1.msra.mxu0 0.0
      %611 = vmatprep.subr.mxu0 0.0
      %612 = vmatpush1.msra.mxu0 0.0
      %613 = vmatprep.subr.mxu0 0.0
      %614 = vmatpush1.msra.mxu0 0.0
      %615 = vmatprep.subr.mxu0 0.0
      %616 = vmatpush1.msra.mxu0 0.0
      %617 = vmatprep.subr.mxu0 0.0
      %618 = vmatpush1.msra.mxu0 0.0
      %619 = vmatprep.mubr.f32.mxu0 0.0
      %620 = vmatmul.mubr.f32.gmra.mrb[0].mxu0 %v401
      %v621 = vpop.f32.mrb[0].mxu0
      %v622 = vadd.f32 %v517, %v621
      %v623 = vpop.f32.mrb[0].mxu0
      %624 = vmatprep.mubr.f32.mxu0 0.0
      %625 = vmatmul.mubr.f32.gmra.mrb[0].mxu0 %v402
      %v626 = vpop.f32.mrb[0].mxu0
      %v627 = vadd.f32 %v522, %v626
      %v628 = vpop.f32.mrb[0].mxu0
      %629 = vmatprep.mubr.f32.mxu0 0.0
      %630 = vmatmul.mubr.f32.gmra.mrb[0].mxu0 %v403
      %v631 = vpop.f32.mrb[0].mxu0
      %v632 = vadd.f32 %v527, %v631
      %v633 = vpop.f32.mrb[0].mxu0
      %634 = vmatprep.mubr.f32.mxu0 0.0
      %635 = vmatmul.mubr.f32.gmra.mrb[0].mxu0 %v404
      %v636 = vpop.f32.mrb[0].mxu0
      %v637 = vadd.f32 %v532, %v636
      %v638 = vpop.f32.mrb[0].mxu0
      %639 = vmatprep.mubr.f32.mxu0 0.0
      %640 = vmatmul.mubr.f32.gmra.mrb[0].mxu0 %v405
      %v641 = vpop.f32.mrb[0].mxu0
      %v642 = vadd.f32 %v537, %v641
      %v643 = vpop.f32.mrb[0].mxu0
      %644 = vmatprep.mubr.f32.mxu0 0.0
      %645 = vmatmul.mubr.f32.gmra.mrb[0].mxu0 %v406
      %v646 = vpop.f32.mrb[0].mxu0
      %v647 = vadd.f32 %v542, %v646
      %v648 = vpop.f32.mrb[0].mxu0
      %649 = vmatprep.mubr.f32.mxu0 0.0
      %650 = vmatmul.mubr.f32.gmra.mrb[0].mxu0 %v407
      %v651 = vpop.f32.mrb[0].mxu0
      %v652 = vadd.f32 %v547, %v651
      %v653 = vpop.f32.mrb[0].mxu0
      %654 = vmatprep.mubr.f32.mxu0 0.0
      %655 = vmatmul.mubr.f32.gmra.mrb[0].mxu0 %v408
      %v656 = vpop.f32.mrb[0].mxu0
      %v657 = vadd.f32 %v552, %v656
      %v658 = vpop.f32.mrb[0].mxu0
      %659 = vdwg.mxu0
      %v660 = vld [vmem:[#allocation2 + $0x2] sm:$0xff]
      %v661 = vld [vmem:[#allocation2 + $0x12] sm:$0xff]
      %v662 = vld [vmem:[#allocation2 + $0x22] sm:$0xff]
      %v663 = vld [vmem:[#allocation2 + $0x32] sm:$0xff]
      %v664 = vld [vmem:[#allocation2 + $0x42] sm:$0xff]
      %v665 = vld [vmem:[#allocation2 + $0x52] sm:$0xff]
      %v666 = vld [vmem:[#allocation2 + $0x62] sm:$0xff]
      %v667 = vld [vmem:[#allocation2 + $0x72] sm:$0xff]
      %s668 = scalar_lea.vmem %s3, 256
      %v669 = vld [vmem:[%s668] sm:$0xff]
      %v670 = vld [vmem:[%s668 + $0x8] sm:$0xff]
      %v671 = vld [vmem:[%s668 + $0x10] sm:$0xff]
      %v672 = vld [vmem:[%s668 + $0x18] sm:$0xff]
      %v673 = vld [vmem:[%s668 + $0x20] sm:$0xff]
      %v674 = vld [vmem:[%s668 + $0x28] sm:$0xff]
      %v675 = vld [vmem:[%s668 + $0x30] sm:$0xff]
      %v676 = vld [vmem:[%s668 + $0x38] sm:$0xff]
      %v677 = vld [vmem:[%s668 + $0x40] sm:$0xff]
      %v678 = vld [vmem:[%s668 + $0x48] sm:$0xff]
      %v679 = vld [vmem:[%s668 + $0x50] sm:$0xff]
      %v680 = vld [vmem:[%s668 + $0x58] sm:$0xff]
      %v681 = vld [vmem:[%s668 + $0x60] sm:$0xff]
      %v682 = vld [vmem:[%s668 + $0x68] sm:$0xff]
      %v683 = vld [vmem:[%s668 + $0x70] sm:$0xff]
      %v684 = vld [vmem:[%s668 + $0x78] sm:$0xff]
      %685 = vmatprep.subr.mxu0 0.0
      %686 = vmatpush1.msra.mxu0 %v669
      %687 = vmatprep.subr.mxu0 0.0
      %688 = vmatpush1.msra.mxu0 %v670
      %689 = vmatprep.subr.mxu0 0.0
      %690 = vmatpush1.msra.mxu0 %v671
      %691 = vmatprep.subr.mxu0 0.0
      %692 = vmatpush1.msra.mxu0 %v672
      %693 = vmatprep.subr.mxu0 0.0
      %694 = vmatpush1.msra.mxu0 %v673
      %695 = vmatprep.subr.mxu0 0.0
      %696 = vmatpush1.msra.mxu0 %v674
      %697 = vmatprep.subr.mxu0 0.0
      %698 = vmatpush1.msra.mxu0 %v675
      %699 = vmatprep.subr.mxu0 0.0
      %700 = vmatpush1.msra.mxu0 %v676
      %701 = vmatprep.subr.mxu0 0.0
      %702 = vmatpush1.msra.mxu0 %v677
      %703 = vmatprep.subr.mxu0 0.0
      %704 = vmatpush1.msra.mxu0 %v678
      %705 = vmatprep.subr.mxu0 0.0
      %706 = vmatpush1.msra.mxu0 %v679
      %707 = vmatprep.subr.mxu0 0.0
      %708 = vmatpush1.msra.mxu0 %v680
      %709 = vmatprep.subr.mxu0 0.0
      %710 = vmatpush1.msra.mxu0 %v681
      %711 = vmatprep.subr.mxu0 0.0
      %712 = vmatpush1.msra.mxu0 %v682
      %713 = vmatprep.subr.mxu0 0.0
      %714 = vmatpush1.msra.mxu0 %v683
      %715 = vmatprep.subr.mxu0 0.0
      %716 = vmatpush1.msra.mxu0 %v684
      %717 = vmatprep.subr.mxu0 0.0
      %718 = vmatpush1.msra.mxu0 0.0
      %719 = vmatprep.subr.mxu0 0.0
      %720 = vmatpush1.msra.mxu0 0.0
      %721 = vmatprep.subr.mxu0 0.0
      %722 = vmatpush1.msra.mxu0 0.0
      %723 = vmatprep.subr.mxu0 0.0
      %724 = vmatpush1.msra.mxu0 0.0
      %725 = vmatprep.subr.mxu0 0.0
      %726 = vmatpush1.msra.mxu0 0.0
      %727 = vmatprep.subr.mxu0 0.0
      %728 = vmatpush1.msra.mxu0 0.0
      %729 = vmatprep.subr.mxu0 0.0
      %730 = vmatpush1.msra.mxu0 0.0
      %731 = vmatprep.subr.mxu0 0.0
      %732 = vmatpush1.msra.mxu0 0.0
      %733 = vmatprep.subr.mxu0 0.0
      %734 = vmatpush1.msra.mxu0 0.0
      %735 = vmatprep.subr.mxu0 0.0
      %736 = vmatpush1.msra.mxu0 0.0
      %737 = vmatprep.subr.mxu0 0.0
      %738 = vmatpush1.msra.mxu0 0.0
      %739 = vmatprep.subr.mxu0 0.0
      %740 = vmatpush1.msra.mxu0 0.0
      %741 = vmatprep.subr.mxu0 0.0
      %742 = vmatpush1.msra.mxu0 0.0
      %743 = vmatprep.subr.mxu0 0.0
      %744 = vmatpush1.msra.mxu0 0.0
      %745 = vmatprep.subr.mxu0 0.0
      %746 = vmatpush1.msra.mxu0 0.0
      %747 = vmatprep.subr.mxu0 0.0
      %748 = vmatpush1.msra.mxu0 0.0
      %749 = vmatprep.mubr.f32.mxu0 0.0
      %750 = vmatmul.mubr.f32.gmra.mrb[0].mxu0 %v660
      %v751 = vpop.f32.mrb[0].mxu0
      %v752 = vadd.f32 0.0, %v751
      %v753 = vpop.f32.mrb[0].mxu0
      %754 = vmatprep.mubr.f32.mxu0 0.0
      %755 = vmatmul.mubr.f32.gmra.mrb[0].mxu0 %v661
      %v756 = vpop.f32.mrb[0].mxu0
      %v757 = vadd.f32 0.0, %v756
      %v758 = vpop.f32.mrb[0].mxu0
      %759 = vmatprep.mubr.f32.mxu0 0.0
      %760 = vmatmul.mubr.f32.gmra.mrb[0].mxu0 %v662
      %v761 = vpop.f32.mrb[0].mxu0
      %v762 = vadd.f32 0.0, %v761
      %v763 = vpop.f32.mrb[0].mxu0
      %764 = vmatprep.mubr.f32.mxu0 0.0
      %765 = vmatmul.mubr.f32.gmra.mrb[0].mxu0 %v663
      %v766 = vpop.f32.mrb[0].mxu0
      %v767 = vadd.f32 0.0, %v766
      %v768 = vpop.f32.mrb[0].mxu0
      %769 = vmatprep.mubr.f32.mxu0 0.0
      %770 = vmatmul.mubr.f32.gmra.mrb[0].mxu0 %v664
      %v771 = vpop.f32.mrb[0].mxu0
      %v772 = vadd.f32 0.0, %v771
      %v773 = vpop.f32.mrb[0].mxu0
      %774 = vmatprep.mubr.f32.mxu0 0.0
      %775 = vmatmul.mubr.f32.gmra.mrb[0].mxu0 %v665
      %v776 = vpop.f32.mrb[0].mxu0
      %v777 = vadd.f32 0.0, %v776
      %v778 = vpop.f32.mrb[0].mxu0
      %779 = vmatprep.mubr.f32.mxu0 0.0
      %780 = vmatmul.mubr.f32.gmra.mrb[0].mxu0 %v666
      %v781 = vpop.f32.mrb[0].mxu0
      %v782 = vadd.f32 0.0, %v781
      %v783 = vpop.f32.mrb[0].mxu0
      %784 = vmatprep.mubr.f32.mxu0 0.0
      %785 = vmatmul.mubr.f32.gmra.mrb[0].mxu0 %v667
      %v786 = vpop.f32.mrb[0].mxu0
      %v787 = vadd.f32 0.0, %v786
      %v788 = vpop.f32.mrb[0].mxu0
      %789 = vdwg.mxu0
      %v790 = vadd.f32 %v622, %v752
      %v791 = vadd.f32 %v627, %v757
      %v792 = vadd.f32 %v632, %v762
      %v793 = vadd.f32 %v637, %v767
      %v794 = vadd.f32 %v642, %v772
      %v795 = vadd.f32 %v647, %v777
      %v796 = vadd.f32 %v652, %v782
      %v797 = vadd.f32 %v657, %v787
      %v798 = vld [vmem:[%s392] sm:$0xff]
      %v799 = vld [vmem:[%s392 + $0x10] sm:$0xff]
      %v800 = vld [vmem:[%s392 + $0x20] sm:$0xff]
      %v801 = vld [vmem:[%s392 + $0x30] sm:$0xff]
      %v802 = vld [vmem:[%s392 + $0x40] sm:$0xff]
      %v803 = vld [vmem:[%s392 + $0x50] sm:$0xff]
      %v804 = vld [vmem:[%s392 + $0x60] sm:$0xff]
      %v805 = vld [vmem:[%s392 + $0x70] sm:$0xff]
      %s806 = scalar_lea.vmem %s3, 384
      %v807 = vld [vmem:[%s806] sm:$0xff]
      %v808 = vld [vmem:[%s806 + $0x8] sm:$0xff]
      %v809 = vld [vmem:[%s806 + $0x10] sm:$0xff]
      %v810 = vld [vmem:[%s806 + $0x18] sm:$0xff]
      %v811 = vld [vmem:[%s806 + $0x20] sm:$0xff]
      %v812 = vld [vmem:[%s806 + $0x28] sm:$0xff]
      %v813 = vld [vmem:[%s806 + $0x30] sm:$0xff]
      %v814 = vld [vmem:[%s806 + $0x38] sm:$0xff]
      %v815 = vld [vmem:[%s806 + $0x40] sm:$0xff]
      %v816 = vld [vmem:[%s806 + $0x48] sm:$0xff]
      %v817 = vld [vmem:[%s806 + $0x50] sm:$0xff]
      %v818 = vld [vmem:[%s806 + $0x58] sm:$0xff]
      %v819 = vld [vmem:[%s806 + $0x60] sm:$0xff]
      %v820 = vld [vmem:[%s806 + $0x68] sm:$0xff]
      %v821 = vld [vmem:[%s806 + $0x70] sm:$0xff]
      %v822 = vld [vmem:[%s806 + $0x78] sm:$0xff]
      %823 = vmatprep.subr.mxu0 0.0
      %824 = vmatpush1.msra.mxu0 %v807
      %825 = vmatprep.subr.mxu0 0.0
      %826 = vmatpush1.msra.mxu0 %v808
      %827 = vmatprep.subr.mxu0 0.0
      %828 = vmatpush1.msra.mxu0 %v809
      %829 = vmatprep.subr.mxu0 0.0
      %830 = vmatpush1.msra.mxu0 %v810
      %831 = vmatprep.subr.mxu0 0.0
      %832 = vmatpush1.msra.mxu0 %v811
      %833 = vmatprep.subr.mxu0 0.0
      %834 = vmatpush1.msra.mxu0 %v812
      %835 = vmatprep.subr.mxu0 0.0
      %836 = vmatpush1.msra.mxu0 %v813
      %837 = vmatprep.subr.mxu0 0.0
      %838 = vmatpush1.msra.mxu0 %v814
      %839 = vmatprep.subr.mxu0 0.0
      %840 = vmatpush1.msra.mxu0 %v815
      %841 = vmatprep.subr.mxu0 0.0
      %842 = vmatpush1.msra.mxu0 %v816
      %843 = vmatprep.subr.mxu0 0.0
      %844 = vmatpush1.msra.mxu0 %v817
      %845 = vmatprep.subr.mxu0 0.0
      %846 = vmatpush1.msra.mxu0 %v818
      %847 = vmatprep.subr.mxu0 0.0
      %848 = vmatpush1.msra.mxu0 %v819
      %849 = vmatprep.subr.mxu0 0.0
      %850 = vmatpush1.msra.mxu0 %v820
      %851 = vmatprep.subr.mxu0 0.0
      %852 = vmatpush1.msra.mxu0 %v821
      %853 = vmatprep.subr.mxu0 0.0
      %854 = vmatpush1.msra.mxu0 %v822
      %855 = vmatprep.subr.mxu0 0.0
      %856 = vmatpush1.msra.mxu0 0.0
      %857 = vmatprep.subr.mxu0 0.0
      %858 = vmatpush1.msra.mxu0 0.0
      %859 = vmatprep.subr.mxu0 0.0
      %860 = vmatpush1.msra.mxu0 0.0
      %861 = vmatprep.subr.mxu0 0.0
      %862 = vmatpush1.msra.mxu0 0.0
      %863 = vmatprep.subr.mxu0 0.0
      %864 = vmatpush1.msra.mxu0 0.0
      %865 = vmatprep.subr.mxu0 0.0
      %866 = vmatpush1.msra.mxu0 0.0
      %867 = vmatprep.subr.mxu0 0.0
      %868 = vmatpush1.msra.mxu0 0.0
      %869 = vmatprep.subr.mxu0 0.0
      %870 = vmatpush1.msra.mxu0 0.0
      %871 = vmatprep.subr.mxu0 0.0
      %872 = vmatpush1.msra.mxu0 0.0
      %873 = vmatprep.subr.mxu0 0.0
      %874 = vmatpush1.msra.mxu0 0.0
      %875 = vmatprep.subr.mxu0 0.0
      %876 = vmatpush1.msra.mxu0 0.0
      %877 = vmatprep.subr.mxu0 0.0
      %878 = vmatpush1.msra.mxu0 0.0
      %879 = vmatprep.subr.mxu0 0.0
      %880 = vmatpush1.msra.mxu0 0.0
      %881 = vmatprep.subr.mxu0 0.0
      %882 = vmatpush1.msra.mxu0 0.0
      %883 = vmatprep.subr.mxu0 0.0
      %884 = vmatpush1.msra.mxu0 0.0
      %885 = vmatprep.subr.mxu0 0.0
      %886 = vmatpush1.msra.mxu0 0.0
      %887 = vmatprep.mubr.f32.mxu0 0.0
      %888 = vmatmul.mubr.f32.gmra.mrb[0].mxu0 %v798
      %v889 = vpop.f32.mrb[0].mxu0
      %v890 = vadd.f32 0.0, %v889
      %v891 = vpop.f32.mrb[0].mxu0
      %892 = vmatprep.mubr.f32.mxu0 0.0
      %893 = vmatmul.mubr.f32.gmra.mrb[0].mxu0 %v799
      %v894 = vpop.f32.mrb[0].mxu0
      %v895 = vadd.f32 0.0, %v894
      %v896 = vpop.f32.mrb[0].mxu0
      %897 = vmatprep.mubr.f32.mxu0 0.0
      %898 = vmatmul.mubr.f32.gmra.mrb[0].mxu0 %v800
      %v899 = vpop.f32.mrb[0].mxu0
      %v900 = vadd.f32 0.0, %v899
      %v901 = vpop.f32.mrb[0].mxu0
      %902 = vmatprep.mubr.f32.mxu0 0.0
      %903 = vmatmul.mubr.f32.gmra.mrb[0].mxu0 %v801
      %v904 = vpop.f32.mrb[0].mxu0
      %v905 = vadd.f32 0.0, %v904
      %v906 = vpop.f32.mrb[0].mxu0
      %907 = vmatprep.mubr.f32.mxu0 0.0
      %908 = vmatmul.mubr.f32.gmra.mrb[0].mxu0 %v802
      %v909 = vpop.f32.mrb[0].mxu0
      %v910 = vadd.f32 0.0, %v909
      %v911 = vpop.f32.mrb[0].mxu0
      %912 = vmatprep.mubr.f32.mxu0 0.0
      %913 = vmatmul.mubr.f32.gmra.mrb[0].mxu0 %v803
      %v914 = vpop.f32.mrb[0].mxu0
      %v915 = vadd.f32 0.0, %v914
      %v916 = vpop.f32.mrb[0].mxu0
      %917 = vmatprep.mubr.f32.mxu0 0.0
      %918 = vmatmul.mubr.f32.gmra.mrb[0].mxu0 %v804
      %v919 = vpop.f32.mrb[0].mxu0
      %v920 = vadd.f32 0.0, %v919
      %v921 = vpop.f32.mrb[0].mxu0
      %922 = vmatprep.mubr.f32.mxu0 0.0
      %923 = vmatmul.mubr.f32.gmra.mrb[0].mxu0 %v805
      %v924 = vpop.f32.mrb[0].mxu0
      %v925 = vadd.f32 0.0, %v924
      %v926 = vpop.f32.mrb[0].mxu0
      %927 = vdwg.mxu0
      %v928 = vadd.f32 %v790, %v890
      %v929 = vadd.f32 %v791, %v895
      %v930 = vadd.f32 %v792, %v900
      %v931 = vadd.f32 %v793, %v905
      %v932 = vadd.f32 %v794, %v910
      %v933 = vadd.f32 %v795, %v915
      %v934 = vadd.f32 %v796, %v920
      %v935 = vadd.f32 %v797, %v925
      %v936 = vld [vmem:[%s392 + $0x1] sm:$0xff]
      %v937 = vld [vmem:[%s392 + $0x11] sm:$0xff]
      %v938 = vld [vmem:[%s392 + $0x21] sm:$0xff]
      %v939 = vld [vmem:[%s392 + $0x31] sm:$0xff]
      %v940 = vld [vmem:[%s392 + $0x41] sm:$0xff]
      %v941 = vld [vmem:[%s392 + $0x51] sm:$0xff]
      %v942 = vld [vmem:[%s392 + $0x61] sm:$0xff]
      %v943 = vld [vmem:[%s392 + $0x71] sm:$0xff]
      %s944 = scalar_lea.vmem %s3, 512
      %v945 = vld [vmem:[%s944] sm:$0xff]
      %v946 = vld [vmem:[%s944 + $0x8] sm:$0xff]
      %v947 = vld [vmem:[%s944 + $0x10] sm:$0xff]
      %v948 = vld [vmem:[%s944 + $0x18] sm:$0xff]
      %v949 = vld [vmem:[%s944 + $0x20] sm:$0xff]
      %v950 = vld [vmem:[%s944 + $0x28] sm:$0xff]
      %v951 = vld [vmem:[%s944 + $0x30] sm:$0xff]
      %v952 = vld [vmem:[%s944 + $0x38] sm:$0xff]
      %v953 = vld [vmem:[%s944 + $0x40] sm:$0xff]
      %v954 = vld [vmem:[%s944 + $0x48] sm:$0xff]
      %v955 = vld [vmem:[%s944 + $0x50] sm:$0xff]
      %v956 = vld [vmem:[%s944 + $0x58] sm:$0xff]
      %v957 = vld [vmem:[%s944 + $0x60] sm:$0xff]
      %v958 = vld [vmem:[%s944 + $0x68] sm:$0xff]
      %v959 = vld [vmem:[%s944 + $0x70] sm:$0xff]
      %v960 = vld [vmem:[%s944 + $0x78] sm:$0xff]
      %961 = vmatprep.subr.mxu0 0.0
      %962 = vmatpush1.msra.mxu0 %v945
      %963 = vmatprep.subr.mxu0 0.0
      %964 = vmatpush1.msra.mxu0 %v946
      %965 = vmatprep.subr.mxu0 0.0
      %966 = vmatpush1.msra.mxu0 %v947
      %967 = vmatprep.subr.mxu0 0.0
      %968 = vmatpush1.msra.mxu0 %v948
      %969 = vmatprep.subr.mxu0 0.0
      %970 = vmatpush1.msra.mxu0 %v949
      %971 = vmatprep.subr.mxu0 0.0
      %972 = vmatpush1.msra.mxu0 %v950
      %973 = vmatprep.subr.mxu0 0.0
      %974 = vmatpush1.msra.mxu0 %v951
      %975 = vmatprep.subr.mxu0 0.0
      %976 = vmatpush1.msra.mxu0 %v952
      %977 = vmatprep.subr.mxu0 0.0
      %978 = vmatpush1.msra.mxu0 %v953
      %979 = vmatprep.subr.mxu0 0.0
      %980 = vmatpush1.msra.mxu0 %v954
      %981 = vmatprep.subr.mxu0 0.0
      %982 = vmatpush1.msra.mxu0 %v955
      %983 = vmatprep.subr.mxu0 0.0
      %984 = vmatpush1.msra.mxu0 %v956
      %985 = vmatprep.subr.mxu0 0.0
      %986 = vmatpush1.msra.mxu0 %v957
      %987 = vmatprep.subr.mxu0 0.0
      %988 = vmatpush1.msra.mxu0 %v958
      %989 = vmatprep.subr.mxu0 0.0
      %990 = vmatpush1.msra.mxu0 %v959
      %991 = vmatprep.subr.mxu0 0.0
      %992 = vmatpush1.msra.mxu0 %v960
      %993 = vmatprep.subr.mxu0 0.0
      %994 = vmatpush1.msra.mxu0 0.0
      %995 = vmatprep.subr.mxu0 0.0
      %996 = vmatpush1.msra.mxu0 0.0
      %997 = vmatprep.subr.mxu0 0.0
      %998 = vmatpush1.msra.mxu0 0.0
      %999 = vmatprep.subr.mxu0 0.0
      %1000 = vmatpush1.msra.mxu0 0.0
      %1001 = vmatprep.subr.mxu0 0.0
      %1002 = vmatpush1.msra.mxu0 0.0
      %1003 = vmatprep.subr.mxu0 0.0
      %1004 = vmatpush1.msra.mxu0 0.0
      %1005 = vmatprep.subr.mxu0 0.0
      %1006 = vmatpush1.msra.mxu0 0.0
      %1007 = vmatprep.subr.mxu0 0.0
      %1008 = vmatpush1.msra.mxu0 0.0
      %1009 = vmatprep.subr.mxu0 0.0
      %1010 = vmatpush1.msra.mxu0 0.0
      %1011 = vmatprep.subr.mxu0 0.0
      %1012 = vmatpush1.msra.mxu0 0.0
      %1013 = vmatprep.subr.mxu0 0.0
      %1014 = vmatpush1.msra.mxu0 0.0
      %1015 = vmatprep.subr.mxu0 0.0
      %1016 = vmatpush1.msra.mxu0 0.0
      %1017 = vmatprep.subr.mxu0 0.0
      %1018 = vmatpush1.msra.mxu0 0.0
      %1019 = vmatprep.subr.mxu0 0.0
      %1020 = vmatpush1.msra.mxu0 0.0
      %1021 = vmatprep.subr.mxu0 0.0
      %1022 = vmatpush1.msra.mxu0 0.0
      %1023 = vmatprep.subr.mxu0 0.0
      %1024 = vmatpush1.msra.mxu0 0.0
      %1025 = vmatprep.mubr.f32.mxu0 0.0
      %1026 = vmatmul.mubr.f32.gmra.mrb[0].mxu0 %v936
      %v1027 = vpop.f32.mrb[0].mxu0
      %v1028 = vadd.f32 0.0, %v1027
      %v1029 = vpop.f32.mrb[0].mxu0
      %1030 = vmatprep.mubr.f32.mxu0 0.0
      %1031 = vmatmul.mubr.f32.gmra.mrb[0].mxu0 %v937
      %v1032 = vpop.f32.mrb[0].mxu0
      %v1033 = vadd.f32 0.0, %v1032
      %v1034 = vpop.f32.mrb[0].mxu0
      %1035 = vmatprep.mubr.f32.mxu0 0.0
      %1036 = vmatmul.mubr.f32.gmra.mrb[0].mxu0 %v938
      %v1037 = vpop.f32.mrb[0].mxu0
      %v1038 = vadd.f32 0.0, %v1037
      %v1039 = vpop.f32.mrb[0].mxu0
      %1040 = vmatprep.mubr.f32.mxu0 0.0
      %1041 = vmatmul.mubr.f32.gmra.mrb[0].mxu0 %v939
      %v1042 = vpop.f32.mrb[0].mxu0
      %v1043 = vadd.f32 0.0, %v1042
      %v1044 = vpop.f32.mrb[0].mxu0
      %1045 = vmatprep.mubr.f32.mxu0 0.0
      %1046 = vmatmul.mubr.f32.gmra.mrb[0].mxu0 %v940
      %v1047 = vpop.f32.mrb[0].mxu0
      %v1048 = vadd.f32 0.0, %v1047
      %v1049 = vpop.f32.mrb[0].mxu0
      %1050 = vmatprep.mubr.f32.mxu0 0.0
      %1051 = vmatmul.mubr.f32.gmra.mrb[0].mxu0 %v941
      %v1052 = vpop.f32.mrb[0].mxu0
      %v1053 = vadd.f32 0.0, %v1052
      %v1054 = vpop.f32.mrb[0].mxu0
      %1055 = vmatprep.mubr.f32.mxu0 0.0
      %1056 = vmatmul.mubr.f32.gmra.mrb[0].mxu0 %v942
      %v1057 = vpop.f32.mrb[0].mxu0
      %v1058 = vadd.f32 0.0, %v1057
      %v1059 = vpop.f32.mrb[0].mxu0
      %1060 = vmatprep.mubr.f32.mxu0 0.0
      %1061 = vmatmul.mubr.f32.gmra.mrb[0].mxu0 %v943
      %v1062 = vpop.f32.mrb[0].mxu0
      %v1063 = vadd.f32 0.0, %v1062
      %v1064 = vpop.f32.mrb[0].mxu0
      %1065 = vdwg.mxu0
      %v1066 = vadd.f32 %v928, %v1028
      %v1067 = vadd.f32 %v929, %v1033
      %v1068 = vadd.f32 %v930, %v1038
      %v1069 = vadd.f32 %v931, %v1043
      %v1070 = vadd.f32 %v932, %v1048
      %v1071 = vadd.f32 %v933, %v1053
      %v1072 = vadd.f32 %v934, %v1058
      %v1073 = vadd.f32 %v935, %v1063
      %v1074 = vld [vmem:[%s392 + $0x2] sm:$0xff]
      %v1075 = vld [vmem:[%s392 + $0x12] sm:$0xff]
      %v1076 = vld [vmem:[%s392 + $0x22] sm:$0xff]
      %v1077 = vld [vmem:[%s392 + $0x32] sm:$0xff]
      %v1078 = vld [vmem:[%s392 + $0x42] sm:$0xff]
      %v1079 = vld [vmem:[%s392 + $0x52] sm:$0xff]
      %v1080 = vld [vmem:[%s392 + $0x62] sm:$0xff]
      %v1081 = vld [vmem:[%s392 + $0x72] sm:$0xff]
      %s1082 = scalar_lea.vmem %s3, 640
      %v1083 = vld [vmem:[%s1082] sm:$0xff]
      %v1084 = vld [vmem:[%s1082 + $0x8] sm:$0xff]
      %v1085 = vld [vmem:[%s1082 + $0x10] sm:$0xff]
      %v1086 = vld [vmem:[%s1082 + $0x18] sm:$0xff]
      %v1087 = vld [vmem:[%s1082 + $0x20] sm:$0xff]
      %v1088 = vld [vmem:[%s1082 + $0x28] sm:$0xff]
      %v1089 = vld [vmem:[%s1082 + $0x30] sm:$0xff]
      %v1090 = vld [vmem:[%s1082 + $0x38] sm:$0xff]
      %v1091 = vld [vmem:[%s1082 + $0x40] sm:$0xff]
      %v1092 = vld [vmem:[%s1082 + $0x48] sm:$0xff]
      %v1093 = vld [vmem:[%s1082 + $0x50] sm:$0xff]
      %v1094 = vld [vmem:[%s1082 + $0x58] sm:$0xff]
      %v1095 = vld [vmem:[%s1082 + $0x60] sm:$0xff]
      %v1096 = vld [vmem:[%s1082 + $0x68] sm:$0xff]
      %v1097 = vld [vmem:[%s1082 + $0x70] sm:$0xff]
      %v1098 = vld [vmem:[%s1082 + $0x78] sm:$0xff]
      %1099 = vmatprep.subr.mxu0 0.0
      %1100 = vmatpush1.msra.mxu0 %v1083
      %1101 = vmatprep.subr.mxu0 0.0
      %1102 = vmatpush1.msra.mxu0 %v1084
      %1103 = vmatprep.subr.mxu0 0.0
      %1104 = vmatpush1.msra.mxu0 %v1085
      %1105 = vmatprep.subr.mxu0 0.0
      %1106 = vmatpush1.msra.mxu0 %v1086
      %1107 = vmatprep.subr.mxu0 0.0
      %1108 = vmatpush1.msra.mxu0 %v1087
      %1109 = vmatprep.subr.mxu0 0.0
      %1110 = vmatpush1.msra.mxu0 %v1088
      %1111 = vmatprep.subr.mxu0 0.0
      %1112 = vmatpush1.msra.mxu0 %v1089
      %1113 = vmatprep.subr.mxu0 0.0
      %1114 = vmatpush1.msra.mxu0 %v1090
      %1115 = vmatprep.subr.mxu0 0.0
      %1116 = vmatpush1.msra.mxu0 %v1091
      %1117 = vmatprep.subr.mxu0 0.0
      %1118 = vmatpush1.msra.mxu0 %v1092
      %1119 = vmatprep.subr.mxu0 0.0
      %1120 = vmatpush1.msra.mxu0 %v1093
      %1121 = vmatprep.subr.mxu0 0.0
      %1122 = vmatpush1.msra.mxu0 %v1094
      %1123 = vmatprep.subr.mxu0 0.0
      %1124 = vmatpush1.msra.mxu0 %v1095
      %1125 = vmatprep.subr.mxu0 0.0
      %1126 = vmatpush1.msra.mxu0 %v1096
      %1127 = vmatprep.subr.mxu0 0.0
      %1128 = vmatpush1.msra.mxu0 %v1097
      %1129 = vmatprep.subr.mxu0 0.0
      %1130 = vmatpush1.msra.mxu0 %v1098
      %1131 = vmatprep.subr.mxu0 0.0
      %1132 = vmatpush1.msra.mxu0 0.0
      %1133 = vmatprep.subr.mxu0 0.0
      %1134 = vmatpush1.msra.mxu0 0.0
      %1135 = vmatprep.subr.mxu0 0.0
      %1136 = vmatpush1.msra.mxu0 0.0
      %1137 = vmatprep.subr.mxu0 0.0
      %1138 = vmatpush1.msra.mxu0 0.0
      %1139 = vmatprep.subr.mxu0 0.0
      %1140 = vmatpush1.msra.mxu0 0.0
      %1141 = vmatprep.subr.mxu0 0.0
      %1142 = vmatpush1.msra.mxu0 0.0
      %1143 = vmatprep.subr.mxu0 0.0
      %1144 = vmatpush1.msra.mxu0 0.0
      %1145 = vmatprep.subr.mxu0 0.0
      %1146 = vmatpush1.msra.mxu0 0.0
      %1147 = vmatprep.subr.mxu0 0.0
      %1148 = vmatpush1.msra.mxu0 0.0
      %1149 = vmatprep.subr.mxu0 0.0
      %1150 = vmatpush1.msra.mxu0 0.0
      %1151 = vmatprep.subr.mxu0 0.0
      %1152 = vmatpush1.msra.mxu0 0.0
      %1153 = vmatprep.subr.mxu0 0.0
      %1154 = vmatpush1.msra.mxu0 0.0
      %1155 = vmatprep.subr.mxu0 0.0
      %1156 = vmatpush1.msra.mxu0 0.0
      %1157 = vmatprep.subr.mxu0 0.0
      %1158 = vmatpush1.msra.mxu0 0.0
      %1159 = vmatprep.subr.mxu0 0.0
      %1160 = vmatpush1.msra.mxu0 0.0
      %1161 = vmatprep.subr.mxu0 0.0
      %1162 = vmatpush1.msra.mxu0 0.0
      %1163 = vmatprep.mubr.f32.mxu0 0.0
      %1164 = vmatmul.mubr.f32.gmra.mrb[0].mxu0 %v1074
      %v1165 = vpop.f32.mrb[0].mxu0
      %v1166 = vadd.f32 0.0, %v1165
      %v1167 = vpop.f32.mrb[0].mxu0
      %1168 = vmatprep.mubr.f32.mxu0 0.0
      %1169 = vmatmul.mubr.f32.gmra.mrb[0].mxu0 %v1075
      %v1170 = vpop.f32.mrb[0].mxu0
      %v1171 = vadd.f32 0.0, %v1170
      %v1172 = vpop.f32.mrb[0].mxu0
      %1173 = vmatprep.mubr.f32.mxu0 0.0
      %1174 = vmatmul.mubr.f32.gmra.mrb[0].mxu0 %v1076
      %v1175 = vpop.f32.mrb[0].mxu0
      %v1176 = vadd.f32 0.0, %v1175
      %v1177 = vpop.f32.mrb[0].mxu0
      %1178 = vmatprep.mubr.f32.mxu0 0.0
      %1179 = vmatmul.mubr.f32.gmra.mrb[0].mxu0 %v1077
      %v1180 = vpop.f32.mrb[0].mxu0
      %v1181 = vadd.f32 0.0, %v1180
      %v1182 = vpop.f32.mrb[0].mxu0
      %1183 = vmatprep.mubr.f32.mxu0 0.0
      %1184 = vmatmul.mubr.f32.gmra.mrb[0].mxu0 %v1078
      %v1185 = vpop.f32.mrb[0].mxu0
      %v1186 = vadd.f32 0.0, %v1185
      %v1187 = vpop.f32.mrb[0].mxu0
      %1188 = vmatprep.mubr.f32.mxu0 0.0
      %1189 = vmatmul.mubr.f32.gmra.mrb[0].mxu0 %v1079
      %v1190 = vpop.f32.mrb[0].mxu0
      %v1191 = vadd.f32 0.0, %v1190
      %v1192 = vpop.f32.mrb[0].mxu0
      %1193 = vmatprep.mubr.f32.mxu0 0.0
      %1194 = vmatmul.mubr.f32.gmra.mrb[0].mxu0 %v1080
      %v1195 = vpop.f32.mrb[0].mxu0
      %v1196 = vadd.f32 0.0, %v1195
      %v1197 = vpop.f32.mrb[0].mxu0
      %1198 = vmatprep.mubr.f32.mxu0 0.0
      %1199 = vmatmul.mubr.f32.gmra.mrb[0].mxu0 %v1081
      %v1200 = vpop.f32.mrb[0].mxu0
      %v1201 = vadd.f32 0.0, %v1200
      %v1202 = vpop.f32.mrb[0].mxu0
      %1203 = vdwg.mxu0
      %v1204 = vadd.f32 %v1066, %v1166
      %v1205 = vadd.f32 %v1067, %v1171
      %v1206 = vadd.f32 %v1068, %v1176
      %v1207 = vadd.f32 %v1069, %v1181
      %v1208 = vadd.f32 %v1070, %v1186
      %v1209 = vadd.f32 %v1071, %v1191
      %v1210 = vadd.f32 %v1072, %v1196
      %v1211 = vadd.f32 %v1073, %v1201
      %s1212 = scalar_lea.vmem [#allocation2], 32
      %v1213 = vld [vmem:[%s1212] sm:$0xff]
      %v1214 = vld [vmem:[%s1212 + $0x10] sm:$0xff]
      %v1215 = vld [vmem:[%s1212 + $0x20] sm:$0xff]
      %v1216 = vld [vmem:[%s1212 + $0x30] sm:$0xff]
      %v1217 = vld [vmem:[%s1212 + $0x40] sm:$0xff]
      %v1218 = vld [vmem:[%s1212 + $0x50] sm:$0xff]
      %v1219 = vld [vmem:[%s1212 + $0x60] sm:$0xff]
      %v1220 = vld [vmem:[%s1212 + $0x70] sm:$0xff]
      %s1221 = scalar_lea.vmem %s3, 768
      %v1222 = vld [vmem:[%s1221] sm:$0xff]
      %v1223 = vld [vmem:[%s1221 + $0x8] sm:$0xff]
      %v1224 = vld [vmem:[%s1221 + $0x10] sm:$0xff]
      %v1225 = vld [vmem:[%s1221 + $0x18] sm:$0xff]
      %v1226 = vld [vmem:[%s1221 + $0x20] sm:$0xff]
      %v1227 = vld [vmem:[%s1221 + $0x28] sm:$0xff]
      %v1228 = vld [vmem:[%s1221 + $0x30] sm:$0xff]
      %v1229 = vld [vmem:[%s1221 + $0x38] sm:$0xff]
      %v1230 = vld [vmem:[%s1221 + $0x40] sm:$0xff]
      %v1231 = vld [vmem:[%s1221 + $0x48] sm:$0xff]
      %v1232 = vld [vmem:[%s1221 + $0x50] sm:$0xff]
      %v1233 = vld [vmem:[%s1221 + $0x58] sm:$0xff]
      %v1234 = vld [vmem:[%s1221 + $0x60] sm:$0xff]
      %v1235 = vld [vmem:[%s1221 + $0x68] sm:$0xff]
      %v1236 = vld [vmem:[%s1221 + $0x70] sm:$0xff]
      %v1237 = vld [vmem:[%s1221 + $0x78] sm:$0xff]
      %1238 = vmatprep.subr.mxu0 0.0
      %1239 = vmatpush1.msra.mxu0 %v1222
      %1240 = vmatprep.subr.mxu0 0.0
      %1241 = vmatpush1.msra.mxu0 %v1223
      %1242 = vmatprep.subr.mxu0 0.0
      %1243 = vmatpush1.msra.mxu0 %v1224
      %1244 = vmatprep.subr.mxu0 0.0
      %1245 = vmatpush1.msra.mxu0 %v1225
      %1246 = vmatprep.subr.mxu0 0.0
      %1247 = vmatpush1.msra.mxu0 %v1226
      %1248 = vmatprep.subr.mxu0 0.0
      %1249 = vmatpush1.msra.mxu0 %v1227
      %1250 = vmatprep.subr.mxu0 0.0
      %1251 = vmatpush1.msra.mxu0 %v1228
      %1252 = vmatprep.subr.mxu0 0.0
      %1253 = vmatpush1.msra.mxu0 %v1229
      %1254 = vmatprep.subr.mxu0 0.0
      %1255 = vmatpush1.msra.mxu0 %v1230
      %1256 = vmatprep.subr.mxu0 0.0
      %1257 = vmatpush1.msra.mxu0 %v1231
      %1258 = vmatprep.subr.mxu0 0.0
      %1259 = vmatpush1.msra.mxu0 %v1232
      %1260 = vmatprep.subr.mxu0 0.0
      %1261 = vmatpush1.msra.mxu0 %v1233
      %1262 = vmatprep.subr.mxu0 0.0
      %1263 = vmatpush1.msra.mxu0 %v1234
      %1264 = vmatprep.subr.mxu0 0.0
      %1265 = vmatpush1.msra.mxu0 %v1235
      %1266 = vmatprep.subr.mxu0 0.0
      %1267 = vmatpush1.msra.mxu0 %v1236
      %1268 = vmatprep.subr.mxu0 0.0
      %1269 = vmatpush1.msra.mxu0 %v1237
      %1270 = vmatprep.subr.mxu0 0.0
      %1271 = vmatpush1.msra.mxu0 0.0
      %1272 = vmatprep.subr.mxu0 0.0
      %1273 = vmatpush1.msra.mxu0 0.0
      %1274 = vmatprep.subr.mxu0 0.0
      %1275 = vmatpush1.msra.mxu0 0.0
      %1276 = vmatprep.subr.mxu0 0.0
      %1277 = vmatpush1.msra.mxu0 0.0
      %1278 = vmatprep.subr.mxu0 0.0
      %1279 = vmatpush1.msra.mxu0 0.0
      %1280 = vmatprep.subr.mxu0 0.0
      %1281 = vmatpush1.msra.mxu0 0.0
      %1282 = vmatprep.subr.mxu0 0.0
      %1283 = vmatpush1.msra.mxu0 0.0
      %1284 = vmatprep.subr.mxu0 0.0
      %1285 = vmatpush1.msra.mxu0 0.0
      %1286 = vmatprep.subr.mxu0 0.0
      %1287 = vmatpush1.msra.mxu0 0.0
      %1288 = vmatprep.subr.mxu0 0.0
      %1289 = vmatpush1.msra.mxu0 0.0
      %1290 = vmatprep.subr.mxu0 0.0
      %1291 = vmatpush1.msra.mxu0 0.0
      %1292 = vmatprep.subr.mxu0 0.0
      %1293 = vmatpush1.msra.mxu0 0.0
      %1294 = vmatprep.subr.mxu0 0.0
      %1295 = vmatpush1.msra.mxu0 0.0
      %1296 = vmatprep.subr.mxu0 0.0
      %1297 = vmatpush1.msra.mxu0 0.0
      %1298 = vmatprep.subr.mxu0 0.0
      %1299 = vmatpush1.msra.mxu0 0.0
      %1300 = vmatprep.subr.mxu0 0.0
      %1301 = vmatpush1.msra.mxu0 0.0
      %1302 = vmatprep.mubr.f32.mxu0 0.0
      %1303 = vmatmul.mubr.f32.gmra.mrb[0].mxu0 %v1213
      %v1304 = vpop.f32.mrb[0].mxu0
      %v1305 = vadd.f32 0.0, %v1304
      %v1306 = vpop.f32.mrb[0].mxu0
      %1307 = vmatprep.mubr.f32.mxu0 0.0
      %1308 = vmatmul.mubr.f32.gmra.mrb[0].mxu0 %v1214
      %v1309 = vpop.f32.mrb[0].mxu0
      %v1310 = vadd.f32 0.0, %v1309
      %v1311 = vpop.f32.mrb[0].mxu0
      %1312 = vmatprep.mubr.f32.mxu0 0.0
      %1313 = vmatmul.mubr.f32.gmra.mrb[0].mxu0 %v1215
      %v1314 = vpop.f32.mrb[0].mxu0
      %v1315 = vadd.f32 0.0, %v1314
      %v1316 = vpop.f32.mrb[0].mxu0
      %1317 = vmatprep.mubr.f32.mxu0 0.0
      %1318 = vmatmul.mubr.f32.gmra.mrb[0].mxu0 %v1216
      %v1319 = vpop.f32.mrb[0].mxu0
      %v1320 = vadd.f32 0.0, %v1319
      %v1321 = vpop.f32.mrb[0].mxu0
      %1322 = vmatprep.mubr.f32.mxu0 0.0
      %1323 = vmatmul.mubr.f32.gmra.mrb[0].mxu0 %v1217
      %v1324 = vpop.f32.mrb[0].mxu0
      %v1325 = vadd.f32 0.0, %v1324
      %v1326 = vpop.f32.mrb[0].mxu0
      %1327 = vmatprep.mubr.f32.mxu0 0.0
      %1328 = vmatmul.mubr.f32.gmra.mrb[0].mxu0 %v1218
      %v1329 = vpop.f32.mrb[0].mxu0
      %v1330 = vadd.f32 0.0, %v1329
      %v1331 = vpop.f32.mrb[0].mxu0
      %1332 = vmatprep.mubr.f32.mxu0 0.0
      %1333 = vmatmul.mubr.f32.gmra.mrb[0].mxu0 %v1219
      %v1334 = vpop.f32.mrb[0].mxu0
      %v1335 = vadd.f32 0.0, %v1334
      %v1336 = vpop.f32.mrb[0].mxu0
      %1337 = vmatprep.mubr.f32.mxu0 0.0
      %1338 = vmatmul.mubr.f32.gmra.mrb[0].mxu0 %v1220
      %v1339 = vpop.f32.mrb[0].mxu0
      %v1340 = vadd.f32 0.0, %v1339
      %v1341 = vpop.f32.mrb[0].mxu0
      %1342 = vdwg.mxu0
      %v1343 = vadd.f32 %v1204, %v1305
      %v1344 = vadd.f32 %v1205, %v1310
      %v1345 = vadd.f32 %v1206, %v1315
      %v1346 = vadd.f32 %v1207, %v1320
      %v1347 = vadd.f32 %v1208, %v1325
      %v1348 = vadd.f32 %v1209, %v1330
      %v1349 = vadd.f32 %v1210, %v1335
      %v1350 = vadd.f32 %v1211, %v1340
      %v1351 = vld [vmem:[%s1212 + $0x1] sm:$0xff]
      %v1352 = vld [vmem:[%s1212 + $0x11] sm:$0xff]
      %v1353 = vld [vmem:[%s1212 + $0x21] sm:$0xff]
      %v1354 = vld [vmem:[%s1212 + $0x31] sm:$0xff]
      %v1355 = vld [vmem:[%s1212 + $0x41] sm:$0xff]
      %v1356 = vld [vmem:[%s1212 + $0x51] sm:$0xff]
      %v1357 = vld [vmem:[%s1212 + $0x61] sm:$0xff]
      %v1358 = vld [vmem:[%s1212 + $0x71] sm:$0xff]
      %s1359 = scalar_lea.vmem %s3, 896
      %v1360 = vld [vmem:[%s1359] sm:$0xff]
      %v1361 = vld [vmem:[%s1359 + $0x8] sm:$0xff]
      %v1362 = vld [vmem:[%s1359 + $0x10] sm:$0xff]
      %v1363 = vld [vmem:[%s1359 + $0x18] sm:$0xff]
      %v1364 = vld [vmem:[%s1359 + $0x20] sm:$0xff]
      %v1365 = vld [vmem:[%s1359 + $0x28] sm:$0xff]
      %v1366 = vld [vmem:[%s1359 + $0x30] sm:$0xff]
      %v1367 = vld [vmem:[%s1359 + $0x38] sm:$0xff]
      %v1368 = vld [vmem:[%s1359 + $0x40] sm:$0xff]
      %v1369 = vld [vmem:[%s1359 + $0x48] sm:$0xff]
      %v1370 = vld [vmem:[%s1359 + $0x50] sm:$0xff]
      %v1371 = vld [vmem:[%s1359 + $0x58] sm:$0xff]
      %v1372 = vld [vmem:[%s1359 + $0x60] sm:$0xff]
      %v1373 = vld [vmem:[%s1359 + $0x68] sm:$0xff]
      %v1374 = vld [vmem:[%s1359 + $0x70] sm:$0xff]
      %v1375 = vld [vmem:[%s1359 + $0x78] sm:$0xff]
      %1376 = vmatprep.subr.mxu0 0.0
      %1377 = vmatpush1.msra.mxu0 %v1360
      %1378 = vmatprep.subr.mxu0 0.0
      %1379 = vmatpush1.msra.mxu0 %v1361
      %1380 = vmatprep.subr.mxu0 0.0
      %1381 = vmatpush1.msra.mxu0 %v1362
      %1382 = vmatprep.subr.mxu0 0.0
      %1383 = vmatpush1.msra.mxu0 %v1363
      %1384 = vmatprep.subr.mxu0 0.0
      %1385 = vmatpush1.msra.mxu0 %v1364
      %1386 = vmatprep.subr.mxu0 0.0
      %1387 = vmatpush1.msra.mxu0 %v1365
      %1388 = vmatprep.subr.mxu0 0.0
      %1389 = vmatpush1.msra.mxu0 %v1366
      %1390 = vmatprep.subr.mxu0 0.0
      %1391 = vmatpush1.msra.mxu0 %v1367
      %1392 = vmatprep.subr.mxu0 0.0
      %1393 = vmatpush1.msra.mxu0 %v1368
      %1394 = vmatprep.subr.mxu0 0.0
      %1395 = vmatpush1.msra.mxu0 %v1369
      %1396 = vmatprep.subr.mxu0 0.0
      %1397 = vmatpush1.msra.mxu0 %v1370
      %1398 = vmatprep.subr.mxu0 0.0
      %1399 = vmatpush1.msra.mxu0 %v1371
      %1400 = vmatprep.subr.mxu0 0.0
      %1401 = vmatpush1.msra.mxu0 %v1372
      %1402 = vmatprep.subr.mxu0 0.0
      %1403 = vmatpush1.msra.mxu0 %v1373
      %1404 = vmatprep.subr.mxu0 0.0
      %1405 = vmatpush1.msra.mxu0 %v1374
      %1406 = vmatprep.subr.mxu0 0.0
      %1407 = vmatpush1.msra.mxu0 %v1375
      %1408 = vmatprep.subr.mxu0 0.0
      %1409 = vmatpush1.msra.mxu0 0.0
      %1410 = vmatprep.subr.mxu0 0.0
      %1411 = vmatpush1.msra.mxu0 0.0
      %1412 = vmatprep.subr.mxu0 0.0
      %1413 = vmatpush1.msra.mxu0 0.0
      %1414 = vmatprep.subr.mxu0 0.0
      %1415 = vmatpush1.msra.mxu0 0.0
      %1416 = vmatprep.subr.mxu0 0.0
      %1417 = vmatpush1.msra.mxu0 0.0
      %1418 = vmatprep.subr.mxu0 0.0
      %1419 = vmatpush1.msra.mxu0 0.0
      %1420 = vmatprep.subr.mxu0 0.0
      %1421 = vmatpush1.msra.mxu0 0.0
      %1422 = vmatprep.subr.mxu0 0.0
      %1423 = vmatpush1.msra.mxu0 0.0
      %1424 = vmatprep.subr.mxu0 0.0
      %1425 = vmatpush1.msra.mxu0 0.0
      %1426 = vmatprep.subr.mxu0 0.0
      %1427 = vmatpush1.msra.mxu0 0.0
      %1428 = vmatprep.subr.mxu0 0.0
      %1429 = vmatpush1.msra.mxu0 0.0
      %1430 = vmatprep.subr.mxu0 0.0
      %1431 = vmatpush1.msra.mxu0 0.0
      %1432 = vmatprep.subr.mxu0 0.0
      %1433 = vmatpush1.msra.mxu0 0.0
      %1434 = vmatprep.subr.mxu0 0.0
      %1435 = vmatpush1.msra.mxu0 0.0
      %1436 = vmatprep.subr.mxu0 0.0
      %1437 = vmatpush1.msra.mxu0 0.0
      %1438 = vmatprep.subr.mxu0 0.0
      %1439 = vmatpush1.msra.mxu0 0.0
      %1440 = vmatprep.mubr.f32.mxu0 0.0
      %1441 = vmatmul.mubr.f32.gmra.mrb[0].mxu0 %v1351
      %v1442 = vpop.f32.mrb[0].mxu0
      %v1443 = vadd.f32 0.0, %v1442
      %v1444 = vpop.f32.mrb[0].mxu0
      %1445 = vmatprep.mubr.f32.mxu0 0.0
      %1446 = vmatmul.mubr.f32.gmra.mrb[0].mxu0 %v1352
      %v1447 = vpop.f32.mrb[0].mxu0
      %v1448 = vadd.f32 0.0, %v1447
      %v1449 = vpop.f32.mrb[0].mxu0
      %1450 = vmatprep.mubr.f32.mxu0 0.0
      %1451 = vmatmul.mubr.f32.gmra.mrb[0].mxu0 %v1353
      %v1452 = vpop.f32.mrb[0].mxu0
      %v1453 = vadd.f32 0.0, %v1452
      %v1454 = vpop.f32.mrb[0].mxu0
      %1455 = vmatprep.mubr.f32.mxu0 0.0
      %1456 = vmatmul.mubr.f32.gmra.mrb[0].mxu0 %v1354
      %v1457 = vpop.f32.mrb[0].mxu0
      %v1458 = vadd.f32 0.0, %v1457
      %v1459 = vpop.f32.mrb[0].mxu0
      %1460 = vmatprep.mubr.f32.mxu0 0.0
      %1461 = vmatmul.mubr.f32.gmra.mrb[0].mxu0 %v1355
      %v1462 = vpop.f32.mrb[0].mxu0
      %v1463 = vadd.f32 0.0, %v1462
      %v1464 = vpop.f32.mrb[0].mxu0
      %1465 = vmatprep.mubr.f32.mxu0 0.0
      %1466 = vmatmul.mubr.f32.gmra.mrb[0].mxu0 %v1356
      %v1467 = vpop.f32.mrb[0].mxu0
      %v1468 = vadd.f32 0.0, %v1467
      %v1469 = vpop.f32.mrb[0].mxu0
      %1470 = vmatprep.mubr.f32.mxu0 0.0
      %1471 = vmatmul.mubr.f32.gmra.mrb[0].mxu0 %v1357
      %v1472 = vpop.f32.mrb[0].mxu0
      %v1473 = vadd.f32 0.0, %v1472
      %v1474 = vpop.f32.mrb[0].mxu0
      %1475 = vmatprep.mubr.f32.mxu0 0.0
      %1476 = vmatmul.mubr.f32.gmra.mrb[0].mxu0 %v1358
      %v1477 = vpop.f32.mrb[0].mxu0
      %v1478 = vadd.f32 0.0, %v1477
      %v1479 = vpop.f32.mrb[0].mxu0
      %1480 = vdwg.mxu0
      %v1481 = vadd.f32 %v1343, %v1443
      %v1482 = vadd.f32 %v1344, %v1448
      %v1483 = vadd.f32 %v1345, %v1453
      %v1484 = vadd.f32 %v1346, %v1458
      %v1485 = vadd.f32 %v1347, %v1463
      %v1486 = vadd.f32 %v1348, %v1468
      %v1487 = vadd.f32 %v1349, %v1473
      %v1488 = vadd.f32 %v1350, %v1478
      %v1489 = vld [vmem:[%s1212 + $0x2] sm:$0xff]
      %v1490 = vld [vmem:[%s1212 + $0x12] sm:$0xff]
      %v1491 = vld [vmem:[%s1212 + $0x22] sm:$0xff]
      %v1492 = vld [vmem:[%s1212 + $0x32] sm:$0xff]
      %v1493 = vld [vmem:[%s1212 + $0x42] sm:$0xff]
      %v1494 = vld [vmem:[%s1212 + $0x52] sm:$0xff]
      %v1495 = vld [vmem:[%s1212 + $0x62] sm:$0xff]
      %v1496 = vld [vmem:[%s1212 + $0x72] sm:$0xff]
      %s1497 = scalar_lea.vmem %s3, 1024
      %v1498 = vld [vmem:[%s1497] sm:$0xff]
      %v1499 = vld [vmem:[%s1497 + $0x8] sm:$0xff]
      %v1500 = vld [vmem:[%s1497 + $0x10] sm:$0xff]
      %v1501 = vld [vmem:[%s1497 + $0x18] sm:$0xff]
      %v1502 = vld [vmem:[%s1497 + $0x20] sm:$0xff]
      %v1503 = vld [vmem:[%s1497 + $0x28] sm:$0xff]
      %v1504 = vld [vmem:[%s1497 + $0x30] sm:$0xff]
      %v1505 = vld [vmem:[%s1497 + $0x38] sm:$0xff]
      %v1506 = vld [vmem:[%s1497 + $0x40] sm:$0xff]
      %v1507 = vld [vmem:[%s1497 + $0x48] sm:$0xff]
      %v1508 = vld [vmem:[%s1497 + $0x50] sm:$0xff]
      %v1509 = vld [vmem:[%s1497 + $0x58] sm:$0xff]
      %v1510 = vld [vmem:[%s1497 + $0x60] sm:$0xff]
      %v1511 = vld [vmem:[%s1497 + $0x68] sm:$0xff]
      %v1512 = vld [vmem:[%s1497 + $0x70] sm:$0xff]
      %v1513 = vld [vmem:[%s1497 + $0x78] sm:$0xff]
      %1514 = vmatprep.subr.mxu0 0.0
      %1515 = vmatpush1.msra.mxu0 %v1498
      %1516 = vmatprep.subr.mxu0 0.0
      %1517 = vmatpush1.msra.mxu0 %v1499
      %1518 = vmatprep.subr.mxu0 0.0
      %1519 = vmatpush1.msra.mxu0 %v1500
      %1520 = vmatprep.subr.mxu0 0.0
      %1521 = vmatpush1.msra.mxu0 %v1501
      %1522 = vmatprep.subr.mxu0 0.0
      %1523 = vmatpush1.msra.mxu0 %v1502
      %1524 = vmatprep.subr.mxu0 0.0
      %1525 = vmatpush1.msra.mxu0 %v1503
      %1526 = vmatprep.subr.mxu0 0.0
      %1527 = vmatpush1.msra.mxu0 %v1504
      %1528 = vmatprep.subr.mxu0 0.0
      %1529 = vmatpush1.msra.mxu0 %v1505
      %1530 = vmatprep.subr.mxu0 0.0
      %1531 = vmatpush1.msra.mxu0 %v1506
      %1532 = vmatprep.subr.mxu0 0.0
      %1533 = vmatpush1.msra.mxu0 %v1507
      %1534 = vmatprep.subr.mxu0 0.0
      %1535 = vmatpush1.msra.mxu0 %v1508
      %1536 = vmatprep.subr.mxu0 0.0
      %1537 = vmatpush1.msra.mxu0 %v1509
      %1538 = vmatprep.subr.mxu0 0.0
      %1539 = vmatpush1.msra.mxu0 %v1510
      %1540 = vmatprep.subr.mxu0 0.0
      %1541 = vmatpush1.msra.mxu0 %v1511
      %1542 = vmatprep.subr.mxu0 0.0
      %1543 = vmatpush1.msra.mxu0 %v1512
      %1544 = vmatprep.subr.mxu0 0.0
      %1545 = vmatpush1.msra.mxu0 %v1513
      %1546 = vmatprep.subr.mxu0 0.0
      %1547 = vmatpush1.msra.mxu0 0.0
      %1548 = vmatprep.subr.mxu0 0.0
      %1549 = vmatpush1.msra.mxu0 0.0
      %1550 = vmatprep.subr.mxu0 0.0
      %1551 = vmatpush1.msra.mxu0 0.0
      %1552 = vmatprep.subr.mxu0 0.0
      %1553 = vmatpush1.msra.mxu0 0.0
      %1554 = vmatprep.subr.mxu0 0.0
      %1555 = vmatpush1.msra.mxu0 0.0
      %1556 = vmatprep.subr.mxu0 0.0
      %1557 = vmatpush1.msra.mxu0 0.0
      %1558 = vmatprep.subr.mxu0 0.0
      %1559 = vmatpush1.msra.mxu0 0.0
      %1560 = vmatprep.subr.mxu0 0.0
      %1561 = vmatpush1.msra.mxu0 0.0
      %1562 = vmatprep.subr.mxu0 0.0
      %1563 = vmatpush1.msra.mxu0 0.0
      %1564 = vmatprep.subr.mxu0 0.0
      %1565 = vmatpush1.msra.mxu0 0.0
      %1566 = vmatprep.subr.mxu0 0.0
      %1567 = vmatpush1.msra.mxu0 0.0
      %1568 = vmatprep.subr.mxu0 0.0
      %1569 = vmatpush1.msra.mxu0 0.0
      %1570 = vmatprep.subr.mxu0 0.0
      %1571 = vmatpush1.msra.mxu0 0.0
      %1572 = vmatprep.subr.mxu0 0.0
      %1573 = vmatpush1.msra.mxu0 0.0
      %1574 = vmatprep.subr.mxu0 0.0
      %1575 = vmatpush1.msra.mxu0 0.0
      %1576 = vmatprep.subr.mxu0 0.0
      %1577 = vmatpush1.msra.mxu0 0.0
      %1578 = vmatprep.mubr.f32.mxu0 0.0
      %1579 = vmatmul.mubr.f32.gmra.mrb[0].mxu0 %v1489
      %v1580 = vpop.f32.mrb[0].mxu0
      %v1581 = vadd.f32 0.0, %v1580
      %v1582 = vpop.f32.mrb[0].mxu0
      %1583 = vmatprep.mubr.f32.mxu0 0.0
      %1584 = vmatmul.mubr.f32.gmra.mrb[0].mxu0 %v1490
      %v1585 = vpop.f32.mrb[0].mxu0
      %v1586 = vadd.f32 0.0, %v1585
      %v1587 = vpop.f32.mrb[0].mxu0
      %1588 = vmatprep.mubr.f32.mxu0 0.0
      %1589 = vmatmul.mubr.f32.gmra.mrb[0].mxu0 %v1491
      %v1590 = vpop.f32.mrb[0].mxu0
      %v1591 = vadd.f32 0.0, %v1590
      %v1592 = vpop.f32.mrb[0].mxu0
      %1593 = vmatprep.mubr.f32.mxu0 0.0
      %1594 = vmatmul.mubr.f32.gmra.mrb[0].mxu0 %v1492
      %v1595 = vpop.f32.mrb[0].mxu0
      %v1596 = vadd.f32 0.0, %v1595
      %v1597 = vpop.f32.mrb[0].mxu0
      %1598 = vmatprep.mubr.f32.mxu0 0.0
      %1599 = vmatmul.mubr.f32.gmra.mrb[0].mxu0 %v1493
      %v1600 = vpop.f32.mrb[0].mxu0
      %v1601 = vadd.f32 0.0, %v1600
      %v1602 = vpop.f32.mrb[0].mxu0
      %1603 = vmatprep.mubr.f32.mxu0 0.0
      %1604 = vmatmul.mubr.f32.gmra.mrb[0].mxu0 %v1494
      %v1605 = vpop.f32.mrb[0].mxu0
      %v1606 = vadd.f32 0.0, %v1605
      %v1607 = vpop.f32.mrb[0].mxu0
      %1608 = vmatprep.mubr.f32.mxu0 0.0
      %1609 = vmatmul.mubr.f32.gmra.mrb[0].mxu0 %v1495
      %v1610 = vpop.f32.mrb[0].mxu0
      %v1611 = vadd.f32 0.0, %v1610
      %v1612 = vpop.f32.mrb[0].mxu0
      %1613 = vmatprep.mubr.f32.mxu0 0.0
      %1614 = vmatmul.mubr.f32.gmra.mrb[0].mxu0 %v1496
      %v1615 = vpop.f32.mrb[0].mxu0
      %v1616 = vadd.f32 0.0, %v1615
      %v1617 = vpop.f32.mrb[0].mxu0
      %1618 = vdwg.mxu0
      %v1619 = vadd.f32 %v1481, %v1581
      %v1620 = vadd.f32 %v1482, %v1586
      %v1621 = vadd.f32 %v1483, %v1591
      %v1622 = vadd.f32 %v1484, %v1596
      %v1623 = vadd.f32 %v1485, %v1601
      %v1624 = vadd.f32 %v1486, %v1606
      %v1625 = vadd.f32 %v1487, %v1611
      %v1626 = vadd.f32 %v1488, %v1616
      %v1627 = vld [vmem:[%s320] sm:$0xff]
      %v1628 = vld [vmem:[%s320 + $0x8] sm:$0xff]
      %v1629 = vld [vmem:[%s320 + $0x10] sm:$0xff]
      %v1630 = vld [vmem:[%s320 + $0x18] sm:$0xff]
      %v1631 = vld [vmem:[%s320 + $0x20] sm:$0xff]
      %v1632 = vld [vmem:[%s320 + $0x28] sm:$0xff]
      %v1633 = vld [vmem:[%s320 + $0x30] sm:$0xff]
      %v1634 = vld [vmem:[%s320 + $0x38] sm:$0xff]
      %v1635 = vld [vmem:[%s5] sm:$0x1]
      %v1637 = vlaneseq
      %v1638 = vshrl.u32 %v1637, 7
      %v1639 = vsub.s32 0, %v1638
      %v1640 = vrot.slane %v1635, %v1639
      %v1642 = vmul.f32 %v1627, %v1640
      %v1643 = vmul.f32 %v1628, %v1640
      %v1644 = vmul.f32 %v1629, %v1640
      %v1645 = vmul.f32 %v1630, %v1640
      %v1646 = vmul.f32 %v1631, %v1640
      %v1647 = vmul.f32 %v1632, %v1640
      %v1648 = vmul.f32 %v1633, %v1640
      %v1649 = vmul.f32 %v1634, %v1640
      %v1650 = vld [vmem:[%s6] sm:$0x1]
      %v1652 = vlaneseq
      %v1653 = vshrl.u32 %v1652, 7
      %v1654 = vsub.s32 0, %v1653
      %v1655 = vrot.slane %v1650, %v1654
      %v1657 = vadd.f32 %v1642, %v1655
      %v1658 = vadd.f32 %v1643, %v1655
      %v1659 = vadd.f32 %v1644, %v1655
      %v1660 = vadd.f32 %v1645, %v1655
      %v1661 = vadd.f32 %v1646, %v1655
      %v1662 = vadd.f32 %v1647, %v1655
      %v1663 = vadd.f32 %v1648, %v1655
      %v1664 = vadd.f32 %v1649, %v1655
      %v1665 = vmax.f32 %v1657, 0.0
      %v1666 = vmax.f32 %v1658, 0.0
      %v1667 = vmax.f32 %v1659, 0.0
      %v1668 = vmax.f32 %v1660, 0.0
      %v1669 = vmax.f32 %v1661, 0.0
      %v1670 = vmax.f32 %v1662, 0.0
      %v1671 = vmax.f32 %v1663, 0.0
      %v1672 = vmax.f32 %v1664, 0.0
      %v1673 = vld [vmem:[%s7] sm:$0xff]
      %v1674 = vld [vmem:[%s7 + $0x8] sm:$0xff]
      %v1675 = vld [vmem:[%s7 + $0x10] sm:$0xff]
      %v1676 = vld [vmem:[%s7 + $0x18] sm:$0xff]
      %v1677 = vld [vmem:[%s7 + $0x20] sm:$0xff]
      %v1678 = vld [vmem:[%s7 + $0x28] sm:$0xff]
      %v1679 = vld [vmem:[%s7 + $0x30] sm:$0xff]
      %v1680 = vld [vmem:[%s7 + $0x38] sm:$0xff]
      %v1681 = vld [vmem:[%s7 + $0x40] sm:$0xff]
      %v1682 = vld [vmem:[%s7 + $0x48] sm:$0xff]
      %v1683 = vld [vmem:[%s7 + $0x50] sm:$0xff]
      %v1684 = vld [vmem:[%s7 + $0x58] sm:$0xff]
      %v1685 = vld [vmem:[%s7 + $0x60] sm:$0xff]
      %v1686 = vld [vmem:[%s7 + $0x68] sm:$0xff]
      %v1687 = vld [vmem:[%s7 + $0x70] sm:$0xff]
      %v1688 = vld [vmem:[%s7 + $0x78] sm:$0xff]
      %1689 = vmatprep.subr.mxu0 0.0
      %1690 = vmatpush1.msra.mxu0 %v1673
      %1691 = vmatprep.subr.mxu0 0.0
      %1692 = vmatpush1.msra.mxu0 %v1674
      %1693 = vmatprep.subr.mxu0 0.0
      %1694 = vmatpush1.msra.mxu0 %v1675
      %1695 = vmatprep.subr.mxu0 0.0
      %1696 = vmatpush1.msra.mxu0 %v1676
      %1697 = vmatprep.subr.mxu0 0.0
      %1698 = vmatpush1.msra.mxu0 %v1677
      %1699 = vmatprep.subr.mxu0 0.0
      %1700 = vmatpush1.msra.mxu0 %v1678
      %1701 = vmatprep.subr.mxu0 0.0
      %1702 = vmatpush1.msra.mxu0 %v1679
      %1703 = vmatprep.subr.mxu0 0.0
      %1704 = vmatpush1.msra.mxu0 %v1680
      %1705 = vmatprep.subr.mxu0 0.0
      %1706 = vmatpush1.msra.mxu0 %v1681
      %1707 = vmatprep.subr.mxu0 0.0
      %1708 = vmatpush1.msra.mxu0 %v1682
      %1709 = vmatprep.subr.mxu0 0.0
      %1710 = vmatpush1.msra.mxu0 %v1683
      %1711 = vmatprep.subr.mxu0 0.0
      %1712 = vmatpush1.msra.mxu0 %v1684
      %1713 = vmatprep.subr.mxu0 0.0
      %1714 = vmatpush1.msra.mxu0 %v1685
      %1715 = vmatprep.subr.mxu0 0.0
      %1716 = vmatpush1.msra.mxu0 %v1686
      %1717 = vmatprep.subr.mxu0 0.0
      %1718 = vmatpush1.msra.mxu0 %v1687
      %1719 = vmatprep.subr.mxu0 0.0
      %1720 = vmatpush1.msra.mxu0 %v1688
      %1721 = vmatprep.subr.mxu0 0.0
      %1722 = vmatpush1.msra.mxu0 0.0
      %1723 = vmatprep.subr.mxu0 0.0
      %1724 = vmatpush1.msra.mxu0 0.0
      %1725 = vmatprep.subr.mxu0 0.0
      %1726 = vmatpush1.msra.mxu0 0.0
      %1727 = vmatprep.subr.mxu0 0.0
      %1728 = vmatpush1.msra.mxu0 0.0
      %1729 = vmatprep.subr.mxu0 0.0
      %1730 = vmatpush1.msra.mxu0 0.0
      %1731 = vmatprep.subr.mxu0 0.0
      %1732 = vmatpush1.msra.mxu0 0.0
      %1733 = vmatprep.subr.mxu0 0.0
      %1734 = vmatpush1.msra.mxu0 0.0
      %1735 = vmatprep.subr.mxu0 0.0
      %1736 = vmatpush1.msra.mxu0 0.0
      %1737 = vmatprep.subr.mxu0 0.0
      %1738 = vmatpush1.msra.mxu0 0.0
      %1739 = vmatprep.subr.mxu0 0.0
      %1740 = vmatpush1.msra.mxu0 0.0
      %1741 = vmatprep.subr.mxu0 0.0
      %1742 = vmatpush1.msra.mxu0 0.0
      %1743 = vmatprep.subr.mxu0 0.0
      %1744 = vmatpush1.msra.mxu0 0.0
      %1745 = vmatprep.subr.mxu0 0.0
      %1746 = vmatpush1.msra.mxu0 0.0
      %1747 = vmatprep.subr.mxu0 0.0
      %1748 = vmatpush1.msra.mxu0 0.0
      %1749 = vmatprep.subr.mxu0 0.0
      %1750 = vmatpush1.msra.mxu0 0.0
      %1751 = vmatprep.subr.mxu0 0.0
      %1752 = vmatpush1.msra.mxu0 0.0
      %1753 = vmatprep.mubr.f32.mxu0 0.0
      %1754 = vmatmul.mubr.f32.gmra.mrb[0].mxu0 %v1665
      %v1755 = vpop.f32.mrb[0].mxu0
      %v1756 = vadd.f32 0.0, %v1755
      %v1757 = vpop.f32.mrb[0].mxu0
      %1758 = vmatprep.mubr.f32.mxu0 0.0
      %1759 = vmatmul.mubr.f32.gmra.mrb[0].mxu0 %v1666
      %v1760 = vpop.f32.mrb[0].mxu0
      %v1761 = vadd.f32 0.0, %v1760
      %v1762 = vpop.f32.mrb[0].mxu0
      %1763 = vmatprep.mubr.f32.mxu0 0.0
      %1764 = vmatmul.mubr.f32.gmra.mrb[0].mxu0 %v1667
      %v1765 = vpop.f32.mrb[0].mxu0
      %v1766 = vadd.f32 0.0, %v1765
      %v1767 = vpop.f32.mrb[0].mxu0
      %1768 = vmatprep.mubr.f32.mxu0 0.0
      %1769 = vmatmul.mubr.f32.gmra.mrb[0].mxu0 %v1668
      %v1770 = vpop.f32.mrb[0].mxu0
      %v1771 = vadd.f32 0.0, %v1770
      %v1772 = vpop.f32.mrb[0].mxu0
      %1773 = vmatprep.mubr.f32.mxu0 0.0
      %1774 = vmatmul.mubr.f32.gmra.mrb[0].mxu0 %v1669
      %v1775 = vpop.f32.mrb[0].mxu0
      %v1776 = vadd.f32 0.0, %v1775
      %v1777 = vpop.f32.mrb[0].mxu0
      %1778 = vmatprep.mubr.f32.mxu0 0.0
      %1779 = vmatmul.mubr.f32.gmra.mrb[0].mxu0 %v1670
      %v1780 = vpop.f32.mrb[0].mxu0
      %v1781 = vadd.f32 0.0, %v1780
      %v1782 = vpop.f32.mrb[0].mxu0
      %1783 = vmatprep.mubr.f32.mxu0 0.0
      %1784 = vmatmul.mubr.f32.gmra.mrb[0].mxu0 %v1671
      %v1785 = vpop.f32.mrb[0].mxu0
      %v1786 = vadd.f32 0.0, %v1785
      %v1787 = vpop.f32.mrb[0].mxu0
      %1788 = vmatprep.mubr.f32.mxu0 0.0
      %1789 = vmatmul.mubr.f32.gmra.mrb[0].mxu0 %v1672
      %v1790 = vpop.f32.mrb[0].mxu0
      %v1791 = vadd.f32 0.0, %v1790
      %v1792 = vpop.f32.mrb[0].mxu0
      %1793 = vdwg.mxu0
      %v1794 = vadd.f32 %v1619, %v1756
      %v1795 = vadd.f32 %v1620, %v1761
      %v1796 = vadd.f32 %v1621, %v1766
      %v1797 = vadd.f32 %v1622, %v1771
      %v1798 = vadd.f32 %v1623, %v1776
      %v1799 = vadd.f32 %v1624, %v1781
      %v1800 = vadd.f32 %v1625, %v1786
      %v1801 = vadd.f32 %v1626, %v1791
      %1802 = vst [vmem:[%s325] sm:$0xff] %v1794
      %1803 = vst [vmem:[%s325 + $0x8] sm:$0xff] %v1795
      %1804 = vst [vmem:[%s325 + $0x10] sm:$0xff] %v1796
      %1805 = vst [vmem:[%s325 + $0x18] sm:$0xff] %v1797
      %1806 = vst [vmem:[%s325 + $0x20] sm:$0xff] %v1798
      %1807 = vst [vmem:[%s325 + $0x28] sm:$0xff] %v1799
      %1808 = vst [vmem:[%s325 + $0x30] sm:$0xff] %v1800
      %1809 = vst [vmem:[%s325 + $0x38] sm:$0xff] %v1801
      %p1810 = scmp.lt.s32.totalorder %s19, 1
      %s1811 = scalar_select %p1810, %s19, 1
      %s1812 = smul.addr %s1811, 8
      %s1813 = smul.addr %s1812, 8
      %s1814 = scalar_lea.vmem %s8, %s1813
      // Predicated region
      $region53: #{basic_block_forward.3} parent=51 // pred_check
        %p1815 = pneg %p215
      $region54: #{basic_block_forward.3} parent=51 // pred_check_branch
        %1817 = sbr.rel (%p1815) target = $region56
      $region55: #{basic_block_forward.3} parent=51 // pred_region
        _
      $region56: #{basic_block_forward.3} parent=51 // pred_fallthru
        _
    $region52: #{basic_block_forward.3} parent=5 // pred_fallthru
      _
    %p1818 = scmp.le.s32.totalorder 2, %s14
    // Predicated region
    $region57: #{basic_block_forward.3} parent=5 // pred_check
      %p1819 = pneg %p1818
    $region58: #{basic_block_forward.3} parent=5 // pred_check_branch
      %1821 = sbr.rel (%p1819) target = $region60
    $region59: #{basic_block_forward.3} parent=5 // pred_region
      %s1822 = ssub.s32 %s14, 2
      // Predicated region
      $region61: #{basic_block_forward.3} parent=59 // pred_check
        %p1823 = pneg %p221
      $region62: #{basic_block_forward.3} parent=59 // pred_check_branch
        %1825 = sbr.rel (%p1823) target = $region64
      $region63: #{basic_block_forward.3} parent=59 // pred_region
        %p1826 = scmp.lt.s32.totalorder %s20, 1
        %s1827 = scalar_select %p1826, %s20, 1
        %s1828 = smul.addr %s1827, 8
        %s1829 = smul.addr %s1828, 8
        %s1830 = scalar_lea.vmem %s8, %s1829
      $region64: #{basic_block_forward.3} parent=59 // pred_fallthru
        _
    $region60: #{basic_block_forward.3} parent=5 // pred_fallthru
      _
  $region6: #{basic_block_forward.3} parent=0 // loop_footer
    %s18 = sadd.s32 1, %s14
  $region7: #{basic_block_forward.3} parent=0 // loop_footer_branch
    %13 = sbr.rel target = $region3
  $region8: #{basic_block_forward.3} parent=0 // loop_exit
    _

</llo_original>
